<compile_context>
chip_gen: v5e
topology: v5e:2x2
jax: 0.10.0
libtpu: 0.0.40
codegen_flags: <defaults>
</compile_context>

<pallas_src>
import jax
import jax.numpy as jnp
from jax import lax
from jax.experimental import pallas as pl
from jax.experimental.pallas import tpu as pltpu

_BN_EPS = 1e-5


def _round_up(x, m):
    return ((x + m - 1) // m) * m


def _vmem_capacity_bytes():
    try:
        return int(pltpu.get_tpu_info().vmem_capacity_bytes)
    except Exception:
        return 64 << 20  # conservative (v7x-sized) fallback


def _vmem_limit_bytes(M, C, Cmid, R):
    """Scoped VMEM limit sized from the fused res-unit block footprint."""
    io = 2 * 2 * (M * C * 4)                                    # x + out, double-buffered
    wts = 2 * (C * Cmid * 2 + 9 * Cmid * C * 2 + Cmid * 4 + C * 4)
    scr = R * Cmid * 4                                          # padded mid scratch (f32)
    tmp = M * (3 * Cmid * (4 + 2 + 2) + C * 4 + Cmid * 4 + C * 2)  # live in-kernel values
    need = io + wts + scr + tmp + (4 << 20)
    cap = int(0.9 * _vmem_capacity_bytes())
    return int(min(max(need, 32 << 20), cap))


# ------------------------------ fused kernel ---------------------------------
def _make_res_unit_kernel(W, M, C, Cmid, P):
    """One res-unit: leaky(BN(1x1 conv)) -> leaky(BN(3x3 conv)) + skip.

    Refs:
      x_ref  : (M, C)   f32  flattened NHWC image (M = H*W), also the residual
      w1_ref : (C, Cmid) bf16  1x1 weights with BN scale folded in
      b1_ref : (1, Cmid) f32   folded conv+BN bias
      w3_ref : (3, 3*Cmid, C) bf16  3x3 weights packed as [kw, kh*Cmid+cin, cout]
      b3_ref : (1, C)   f32
      o_ref  : (M, C)   f32
      mid_scr: (R, Cmid) f32  zero-padded, row-flattened mid activation
    """

    def kernel(x_ref, w1_ref, b1_ref, w3_ref, b3_ref, o_ref, mid_scr):
        # ---- 1x1 Conv + BN + LeakyReLU (cast the tile in VMEM, f32 MXU acc) ----
        a = x_ref[...].astype(jnp.bfloat16)
        mid = jnp.dot(a, w1_ref[...], preferred_element_type=jnp.float32)
        mid = mid + b1_ref[...]
        mid = jnp.maximum(mid, 0.1 * mid)                 # LeakyReLU(0.1)

        # ---- zero-padded, row-flattened mid held in VMEM (never hits HBM) ----
        mid_scr[...] = jnp.zeros(mid_scr.shape, mid_scr.dtype)
        mid_scr[P:P + M, :] = mid

        # ---- 3x3 conv as 3 matmuls over the width taps of "row triples" ----
        # rows3_kw[m, kh*Cmid + ci] = mid[h + kh - 1, w + kw - 1, ci]
        w_idx = lax.broadcasted_iota(jnp.int32, (M, 3 * Cmid), 0) % W
        acc = jnp.zeros((M, C), jnp.float32)
        for kw in range(3):
            base = P + (kw - 1) - W                       # offset for kh = 0
            r3 = jnp.concatenate(
                [mid_scr[base + kh * W: base + kh * W + M, :] for kh in range(3)],
                axis=1).astype(jnp.bfloat16)
            if kw == 0:                                   # left neighbor out of row
                r3 = jnp.where(w_idx >= 1, r3, jnp.zeros_like(r3))
            elif kw == 2:                                 # right neighbor out of row
                r3 = jnp.where(w_idx <= W - 2, r3, jnp.zeros_like(r3))
            acc = acc + jnp.dot(r3, w3_ref[kw],
                                preferred_element_type=jnp.float32)

        # ---- bias + LeakyReLU + fused residual add ----
        y = acc + b3_ref[...]
        y = jnp.maximum(y, 0.1 * y)
        o_ref[...] = y + x_ref[...]

    return kernel


def _fused_res_unit(xf, p, H, W):
    """xf: (N, H*W, C) f32 -> (N, H*W, C) f32 (one full res-unit)."""
    N, M, C = xf.shape
    Cmid = p["w1"].shape[1]
    P = _round_up(W + 1, 8)                    # top zero-pad rows (sublane aligned)
    R = _round_up(P + M + W + 1, 8)            # total scratch rows

    return pl.pallas_call(
        _make_res_unit_kernel(W, M, C, Cmid, P),
        out_shape=jax.ShapeDtypeStruct((N, M, C), jnp.float32),
        grid_spec=pltpu.PrefetchScalarGridSpec(
            num_scalar_prefetch=0,
            grid=(N,),                                      # one image per grid step
            in_specs=[
                pl.BlockSpec((None, M, C), lambda n: (n, 0, 0)),        # x / residual
                pl.BlockSpec((C, Cmid), lambda n: (0, 0)),              # w1 (resident)
                pl.BlockSpec((1, Cmid), lambda n: (0, 0)),              # b1
                pl.BlockSpec((3, 3 * Cmid, C), lambda n: (0, 0, 0)),    # w3 (resident)
                pl.BlockSpec((1, C), lambda n: (0, 0)),                 # b3
            ],
            out_specs=pl.BlockSpec((None, M, C), lambda n: (n, 0, 0)),
            scratch_shapes=[pltpu.VMEM((R, Cmid), jnp.float32)],
        ),
        compiler_params=pltpu.CompilerParams(
            dimension_semantics=("parallel",),              # batch split across TCs
            vmem_limit_bytes=_vmem_limit_bytes(M, C, Cmid, R),
        ),
    )(xf, p["w1"], p["b1"], p["w3"], p["b3"])


def resblock_forward(folded_blocks, x_nchw):
    """Matches resblock.forward: x = convs(x) + x, nblocks times (NCHW in/out)."""
    n, c, h, w = x_nchw.shape
    x = jnp.transpose(x_nchw, (0, 2, 3, 1)).astype(jnp.float32)   # NCHW -> NHWC
    xf = x.reshape(n, h * w, c)
    for blk in folded_blocks:
        xf = _fused_res_unit(xf, blk, h, w)
    return jnp.transpose(xf.reshape(n, h, w, c), (0, 3, 1, 2))    # NHWC -> NCHW


# --------------------------- parameters (BN folded) ---------------------------
def _conv_bn_raw_params(key, cin, cout, ksize):
    ks = jax.random.split(key, 6)
    fan = float(cin * ksize * ksize)
    return {
        "w": jax.random.normal(ks[0], (cout, cin, ksize, ksize), jnp.float32)
             / jnp.sqrt(fan),
        "b": 0.01 * jax.random.normal(ks[1], (cout,), jnp.float32),
        "gamma": 1.0 + 0.1 * jax.random.normal(ks[2], (cout,), jnp.float32),
        "beta": 0.1 * jax.random.normal(ks[3], (cout,), jnp.float32),
        "mean": 0.1 * jax.random.normal(ks[4], (cout,), jnp.float32),
        "var": 1.0 + 0.1 * jnp.abs(jax.random.normal(ks[5], (cout,), jnp.float32)),
    }


def _fold_bias(p):
    scale = p["gamma"] / jnp.sqrt(p["var"] + _BN_EPS)
    bias = (p["beta"] + (p["b"] - p["mean"]) * scale)[None, :]
    return scale, bias


def _fold_conv1(p):
    scale, bias = _fold_bias(p)
    w = p["w"][:, :, 0, 0]                                        # (cout, cin)
    w1 = (jnp.transpose(w, (1, 0)) * scale[None, :]).astype(jnp.bfloat16)
    return w1, bias                                               # (cin, cout), (1, cout)


def _fold_conv3(p):
    scale, bias = _fold_bias(p)
    cout, cin = p["w"].shape[0], p["w"].shape[1]
    wt = jnp.transpose(p["w"], (3, 2, 1, 0)) * scale[None, None, None, :]  # (kw,kh,ci,co)
    w3 = wt.reshape(3, 3 * cin, cout).astype(jnp.bfloat16)
    return w3, bias


def init_resblock_params(key, ch, nblocks):
    folded, raw = [], []
    for _ in range(nblocks):
        key, k1, k2 = jax.random.split(key, 3)
        p1 = _conv_bn_raw_params(k1, ch, ch // 2, 1)
        p3 = _conv_bn_raw_params(k2, ch // 2, ch, 3)
        raw.append({"conv1": p1, "conv3": p3})
        w1, b1 = _fold_conv1(p1)
        w3, b3 = _fold_conv3(p3)
        folded.append({"w1": w1, "b1": b1, "w3": w3, "b3": b3})
    return folded, raw


# ------------------------------ f32 reference ---------------------------------
def _conv_bn_leaky_ref(x, p, padding):
    y = lax.conv_general_dilated(
        x, p["w"], window_strides=(1, 1),
        padding=((padding, padding), (padding, padding)),
        dimension_numbers=("NCHW", "OIHW", "NCHW"))
    y = y + p["b"][None, :, None, None]
    inv = (p["gamma"] / jnp.sqrt(p["var"] + _BN_EPS))[None, :, None, None]
    y = (y - p["mean"][None, :, None, None]) * inv + p["beta"][None, :, None, None]
    return jnp.where(y >= 0.0, y, 0.1 * y)


def reference_forward(raw_blocks, x_nchw):
    x = x_nchw.astype(jnp.float32)
    for blk in raw_blocks:
        y = _conv_bn_leaky_ref(x, blk["conv1"], padding=0)
        y = _conv_bn_leaky_ref(y, blk["conv3"], padding=1)
        x = y + x
    return x


if __name__ == "__main__":
    key = jax.random.PRNGKey(0)
    pkey, xkey = jax.random.split(key)
    CH, NBLOCKS = 64, 2                                   # resblock(ch=64, nblocks=2)
    folded, raw = init_resblock_params(pkey, CH, NBLOCKS)
    x = jax.random.normal(xkey, (2, CH, 16, 16), jnp.float32)     # NCHW input

    out = jax.block_until_ready(jax.jit(resblock_forward)(folded, x))
    assert out.shape == x.shape and out.dtype == jnp.float32

    ref = jax.block_until_ready(jax.jit(reference_forward)(raw, x))
    max_err = float(jnp.max(jnp.abs(out - ref)))
    assert jnp.allclose(out, ref, atol=1e-1, rtol=1e-1), max_err  # bf16-operand tolerance
    print("KERNEL_OK")
</pallas_src>

<mosaic_0001>
module attributes {stable_mosaic.version = 11 : i64} {
  func.func @kernel(%arg0: i32, %arg1: memref<1x256x64xf32, #tpu.memory_space<vmem>>, %arg2: memref<64x32xbf16, #tpu.memory_space<vmem>>, %arg3: memref<1x32xf32, #tpu.memory_space<vmem>>, %arg4: memref<3x96x64xbf16, #tpu.memory_space<vmem>>, %arg5: memref<1x64xf32, #tpu.memory_space<vmem>>, %arg6: memref<1x256x64xf32, #tpu.memory_space<vmem>>, %arg7: memref<304x32xf32, #tpu.memory_space<vmem>>) attributes {dimension_semantics = [#tpu.dimension_semantics<parallel>], iteration_bounds = array<i64: 2>, scalar_prefetch = 0 : i64, scratch_operands = 1 : i64, tpu.core_type = #tpu.core_type<tc>, window_params = [{transform_indices = @transform_0, window_bounds = array<i64: 1, 256, 64>}, {pipeline_mode = #tpu.pipeline_mode<synchronous>, transform_indices = @transform_1, window_bounds = array<i64: 64, 32>}, {pipeline_mode = #tpu.pipeline_mode<synchronous>, transform_indices = @transform_2, window_bounds = array<i64: 1, 32>}, {pipeline_mode = #tpu.pipeline_mode<synchronous>, transform_indices = @transform_3, window_bounds = array<i64: 3, 96, 64>}, {pipeline_mode = #tpu.pipeline_mode<synchronous>, transform_indices = @transform_4, window_bounds = array<i64: 1, 64>}, {transform_indices = @transform_5, window_bounds = array<i64: 1, 256, 64>}]} {
    %c0 = arith.constant 0 : index
    %c0_0 = arith.constant 0 : index
    %c0_1 = arith.constant 0 : index
    %0 = vector.load %arg1[%c0, %c0_0, %c0_1] : memref<1x256x64xf32, #tpu.memory_space<vmem>>, vector<1x256x64xf32>
    %1 = vector.shape_cast %0 : vector<1x256x64xf32> to vector<256x64xf32>
    %2 = arith.truncf %1 : vector<256x64xf32> to vector<256x64xbf16>
    %c0_2 = arith.constant 0 : index
    %c0_3 = arith.constant 0 : index
    %3 = vector.load %arg2[%c0_2, %c0_3] : memref<64x32xbf16, #tpu.memory_space<vmem>>, vector<64x32xbf16>
    %cst = arith.constant dense<0.000000e+00> : vector<256x32xf32>
    %4 = tpu.matmul %2, %3, %cst {dimension_numbers = #tpu.dot_dimension_numbers<[1], [0], [0], [1], [0, 0, 1, 1], [], []>} : vector<256x64xbf16>, vector<64x32xbf16>, vector<256x32xf32> -> vector<256x32xf32>
    %c0_4 = arith.constant 0 : index
    %c0_5 = arith.constant 0 : index
    %5 = vector.load %arg3[%c0_4, %c0_5] : memref<1x32xf32, #tpu.memory_space<vmem>>, vector<1x32xf32>
    %6 = vector.broadcast %5 : vector<1x32xf32> to vector<256x32xf32>
    %7 = arith.addf %4, %6 : vector<256x32xf32>
    %cst_6 = arith.constant 1.000000e-01 : f32
    %8 = vector.broadcast %cst_6 : f32 to vector<256x32xf32>
    %9 = arith.mulf %8, %7 : vector<256x32xf32>
    %10 = arith.maximumf %7, %9 : vector<256x32xf32>
    %cst_7 = arith.constant 0.000000e+00 : f32
    %11 = vector.broadcast %cst_7 : f32 to vector<304x32xf32>
    %c0_8 = arith.constant 0 : index
    %c0_9 = arith.constant 0 : index
    %12 = vector.load %arg7[%c0_8, %c0_9] : memref<304x32xf32, #tpu.memory_space<vmem>>, vector<304x32xf32>
    tpu.vector_store %arg7[%c0_8, %c0_9], %11 {strides = array<i32>} : memref<304x32xf32, #tpu.memory_space<vmem>>, vector<304x32xf32>,
    %c24 = arith.constant 24 : index
    %c0_10 = arith.constant 0 : index
    %13 = vector.load %arg7[%c24, %c0_10] : memref<304x32xf32, #tpu.memory_space<vmem>>, vector<256x32xf32>
    tpu.vector_store %arg7[%c24, %c0_10], %10 {strides = array<i32>} : memref<304x32xf32, #tpu.memory_space<vmem>>, vector<256x32xf32>,
    %14 = tpu.iota {dimensions = array<i32: 0>} : vector<256x96xi32>
    %c16_i32 = arith.constant 16 : i32
    %c0_i32 = arith.constant 0 : i32
    %15 = arith.cmpi eq, %c16_i32, %c0_i32 : i32
    %c1_i32 = arith.constant 1 : i32
    %16 = arith.select %15, %c1_i32, %c16_i32 : i32
    %17 = vector.broadcast %16 : i32 to vector<256x96xi32>
    %18 = arith.remsi %14, %17 : vector<256x96xi32>
    %c0_i32_11 = arith.constant 0 : i32
    %19 = vector.broadcast %c0_i32_11 : i32 to vector<256x96xi32>
    %20 = arith.cmpi ne, %18, %19 : vector<256x96xi32>
    %c0_i32_12 = arith.constant 0 : i32
    %21 = vector.broadcast %c0_i32_12 : i32 to vector<256x96xi32>
    %22 = arith.cmpi slt, %18, %21 : vector<256x96xi32>
    %c0_i32_13 = arith.constant 0 : i32
    %23 = arith.cmpi slt, %16, %c0_i32_13 : i32
    %24 = vector.broadcast %23 : i1 to vector<256x96xi1>
    %25 = vector.broadcast %24 : vector<256x96xi1> to vector<256x96xi1>
    %26 = arith.xori %22, %25 : vector<256x96xi1>
    %27 = arith.andi %26, %20 : vector<256x96xi1>
    %28 = vector.broadcast %16 : i32 to vector<256x96xi32>
    %29 = arith.addi %18, %28 : vector<256x96xi32>
    %30 = arith.select %27, %29, %18 : vector<256x96xi1>, vector<256x96xi32>
    %cst_14 = arith.constant 0.000000e+00 : f32
    %31 = vector.broadcast %cst_14 : f32 to vector<256x64xf32>
    %c7 = arith.constant 7 : index
    %c0_15 = arith.constant 0 : index
    %32 = vector.load %arg7[%c7, %c0_15] : memref<304x32xf32, #tpu.memory_space<vmem>>, vector<256x32xf32>
    %c23 = arith.constant 23 : index
    %c0_16 = arith.constant 0 : index
    %33 = vector.load %arg7[%c23, %c0_16] : memref<304x32xf32, #tpu.memory_space<vmem>>, vector<256x32xf32>
    %c39 = arith.constant 39 : index
    %c0_17 = arith.constant 0 : index
    %34 = vector.load %arg7[%c39, %c0_17] : memref<304x32xf32, #tpu.memory_space<vmem>>, vector<256x32xf32>
    %35 = tpu.concatenate %32, %33, %34 in 1 : vector<256x32xf32>, vector<256x32xf32>, vector<256x32xf32> -> vector<256x96xf32>
    %36 = arith.truncf %35 : vector<256x96xf32> to vector<256x96xbf16>
    %c1_i32_18 = arith.constant 1 : i32
    %37 = vector.broadcast %c1_i32_18 : i32 to vector<256x96xi32>
    %38 = arith.cmpi sge, %30, %37 : vector<256x96xi32>
    %cst_19 = arith.constant 0.000000e+00 : bf16
    %39 = vector.broadcast %cst_19 : bf16 to vector<256x96xbf16>
    %40 = arith.select %38, %36, %39 : vector<256x96xi1>, vector<256x96xbf16>
    %c0_20 = arith.constant 0 : index
    %c0_21 = arith.constant 0 : index
    %c0_22 = arith.constant 0 : index
    %41 = vector.load %arg4[%c0_20, %c0_21, %c0_22] : memref<3x96x64xbf16, #tpu.memory_space<vmem>>, vector<1x96x64xbf16>
    %42 = vector.shape_cast %41 : vector<1x96x64xbf16> to vector<96x64xbf16>
    %cst_23 = arith.constant dense<0.000000e+00> : vector<256x64xf32>
    %43 = tpu.matmul %40, %42, %cst_23 {dimension_numbers = #tpu.dot_dimension_numbers<[1], [0], [0], [1], [0, 0, 1, 1], [], []>} : vector<256x96xbf16>, vector<96x64xbf16>, vector<256x64xf32> -> vector<256x64xf32>
    %44 = arith.addf %31, %43 : vector<256x64xf32>
    %c8 = arith.constant 8 : index
    %c0_24 = arith.constant 0 : index
    %45 = vector.load %arg7[%c8, %c0_24] : memref<304x32xf32, #tpu.memory_space<vmem>>, vector<256x32xf32>
    %c24_25 = arith.constant 24 : index
    %c0_26 = arith.constant 0 : index
    %46 = vector.load %arg7[%c24_25, %c0_26] : memref<304x32xf32, #tpu.memory_space<vmem>>, vector<256x32xf32>
    %c40 = arith.constant 40 : index
    %c0_27 = arith.constant 0 : index
    %47 = vector.load %arg7[%c40, %c0_27] : memref<304x32xf32, #tpu.memory_space<vmem>>, vector<256x32xf32>
    %48 = tpu.concatenate %45, %46, %47 in 1 : vector<256x32xf32>, vector<256x32xf32>, vector<256x32xf32> -> vector<256x96xf32>
    %49 = arith.truncf %48 : vector<256x96xf32> to vector<256x96xbf16>
    %c1 = arith.constant 1 : index
    %c0_28 = arith.constant 0 : index
    %c0_29 = arith.constant 0 : index
    %50 = vector.load %arg4[%c1, %c0_28, %c0_29] : memref<3x96x64xbf16, #tpu.memory_space<vmem>>, vector<1x96x64xbf16>
    %51 = vector.shape_cast %50 : vector<1x96x64xbf16> to vector<96x64xbf16>
    %cst_30 = arith.constant dense<0.000000e+00> : vector<256x64xf32>
    %52 = tpu.matmul %49, %51, %cst_30 {dimension_numbers = #tpu.dot_dimension_numbers<[1], [0], [0], [1], [0, 0, 1, 1], [], []>} : vector<256x96xbf16>, vector<96x64xbf16>, vector<256x64xf32> -> vector<256x64xf32>
    %53 = arith.addf %44, %52 : vector<256x64xf32>
    %c9 = arith.constant 9 : index
    %c0_31 = arith.constant 0 : index
    %54 = vector.load %arg7[%c9, %c0_31] : memref<304x32xf32, #tpu.memory_space<vmem>>, vector<256x32xf32>
    %c25 = arith.constant 25 : index
    %c0_32 = arith.constant 0 : index
    %55 = vector.load %arg7[%c25, %c0_32] : memref<304x32xf32, #tpu.memory_space<vmem>>, vector<256x32xf32>
    %c41 = arith.constant 41 : index
    %c0_33 = arith.constant 0 : index
    %56 = vector.load %arg7[%c41, %c0_33] : memref<304x32xf32, #tpu.memory_space<vmem>>, vector<256x32xf32>
    %57 = tpu.concatenate %54, %55, %56 in 1 : vector<256x32xf32>, vector<256x32xf32>, vector<256x32xf32> -> vector<256x96xf32>
    %58 = arith.truncf %57 : vector<256x96xf32> to vector<256x96xbf16>
    %c14_i32 = arith.constant 14 : i32
    %59 = vector.broadcast %c14_i32 : i32 to vector<256x96xi32>
    %60 = arith.cmpi sle, %30, %59 : vector<256x96xi32>
    %cst_34 = arith.constant 0.000000e+00 : bf16
    %61 = vector.broadcast %cst_34 : bf16 to vector<256x96xbf16>
    %62 = arith.select %60, %58, %61 : vector<256x96xi1>, vector<256x96xbf16>
    %c2 = arith.constant 2 : index
    %c0_35 = arith.constant 0 : index
    %c0_36 = arith.constant 0 : index
    %63 = vector.load %arg4[%c2, %c0_35, %c0_36] : memref<3x96x64xbf16, #tpu.memory_space<vmem>>, vector<1x96x64xbf16>
    %64 = vector.shape_cast %63 : vector<1x96x64xbf16> to vector<96x64xbf16>
    %cst_37 = arith.constant dense<0.000000e+00> : vector<256x64xf32>
    %65 = tpu.matmul %62, %64, %cst_37 {dimension_numbers = #tpu.dot_dimension_numbers<[1], [0], [0], [1], [0, 0, 1, 1], [], []>} : vector<256x96xbf16>, vector<96x64xbf16>, vector<256x64xf32> -> vector<256x64xf32>
    %66 = arith.addf %53, %65 : vector<256x64xf32>
    %c0_38 = arith.constant 0 : index
    %c0_39 = arith.constant 0 : index
    %67 = vector.load %arg5[%c0_38, %c0_39] : memref<1x64xf32, #tpu.memory_space<vmem>>, vector<1x64xf32>
    %68 = vector.broadcast %67 : vector<1x64xf32> to vector<256x64xf32>
    %69 = arith.addf %66, %68 : vector<256x64xf32>
    %cst_40 = arith.constant 1.000000e-01 : f32
    %70 = vector.broadcast %cst_40 : f32 to vector<256x64xf32>
    %71 = arith.mulf %70, %69 : vector<256x64xf32>
    %72 = arith.maximumf %69, %71 : vector<256x64xf32>
    %c0_41 = arith.constant 0 : index
    %c0_42 = arith.constant 0 : index
    %c0_43 = arith.constant 0 : index
    %73 = vector.load %arg1[%c0_41, %c0_42, %c0_43] : memref<1x256x64xf32, #tpu.memory_space<vmem>>, vector<1x256x64xf32>
    %74 = vector.shape_cast %73 : vector<1x256x64xf32> to vector<256x64xf32>
    %75 = arith.addf %72, %74 : vector<256x64xf32>
    %c0_44 = arith.constant 0 : index
    %c0_45 = arith.constant 0 : index
    %c0_46 = arith.constant 0 : index
    %76 = vector.load %arg6[%c0_44, %c0_45, %c0_46] : memref<1x256x64xf32, #tpu.memory_space<vmem>>, vector<1x256x64xf32>
    %77 = vector.shape_cast %76 : vector<1x256x64xf32> to vector<256x64xf32>
    %78 = vector.shape_cast %75 : vector<256x64xf32> to vector<1x256x64xf32>
    tpu.vector_store %arg6[%c0_44, %c0_45, %c0_46], %78 {strides = array<i32>} : memref<1x256x64xf32, #tpu.memory_space<vmem>>, vector<1x256x64xf32>,
    return
  }
  func.func @transform_0(%arg0: i32) -> (i32, i32, i32) {
    %c0_i32 = arith.constant 0 : i32
    %c0_i32_0 = arith.constant 0 : i32
    %c0_i32_1 = arith.constant 0 : i32
    return %arg0, %c0_i32, %c0_i32_0 : i32, i32, i32
  }
  func.func @transform_1(%arg0: i32) -> (i32, i32) {
    %c0_i32 = arith.constant 0 : i32
    %c0_i32_0 = arith.constant 0 : i32
    %c0_i32_1 = arith.constant 0 : i32
    return %c0_i32, %c0_i32_0 : i32, i32
  }
  func.func @transform_2(%arg0: i32) -> (i32, i32) {
    %c0_i32 = arith.constant 0 : i32
    %c0_i32_0 = arith.constant 0 : i32
    %c0_i32_1 = arith.constant 0 : i32
    return %c0_i32, %c0_i32_0 : i32, i32
  }
  func.func @transform_3(%arg0: i32) -> (i32, i32, i32) {
    %c0_i32 = arith.constant 0 : i32
    %c0_i32_0 = arith.constant 0 : i32
    %c0_i32_1 = arith.constant 0 : i32
    %c0_i32_2 = arith.constant 0 : i32
    return %c0_i32, %c0_i32_0, %c0_i32_1 : i32, i32, i32
  }
  func.func @transform_4(%arg0: i32) -> (i32, i32) {
    %c0_i32 = arith.constant 0 : i32
    %c0_i32_0 = arith.constant 0 : i32
    %c0_i32_1 = arith.constant 0 : i32
    return %c0_i32, %c0_i32_0 : i32, i32
  }
  func.func @transform_5(%arg0: i32) -> (i32, i32, i32) {
    %c0_i32 = arith.constant 0 : i32
    %c0_i32_0 = arith.constant 0 : i32
    %c0_i32_1 = arith.constant 0 : i32
    return %arg0, %c0_i32, %c0_i32_0 : i32, i32, i32
  }
}

module attributes {stable_mosaic.version = 11 : i64} {
  func.func @kernel(%arg0: i32, %arg1: memref<1x256x64xf32, #tpu.memory_space<vmem>>, %arg2: memref<64x32xbf16, #tpu.memory_space<vmem>>, %arg3: memref<1x32xf32, #tpu.memory_space<vmem>>, %arg4: memref<3x96x64xbf16, #tpu.memory_space<vmem>>, %arg5: memref<1x64xf32, #tpu.memory_space<vmem>>, %arg6: memref<1x256x64xf32, #tpu.memory_space<vmem>>, %arg7: memref<304x32xf32, #tpu.memory_space<vmem>>) attributes {dimension_semantics = [#tpu.dimension_semantics<parallel>], iteration_bounds = array<i64: 2>, scalar_prefetch = 0 : i64, scratch_operands = 1 : i64, tpu.core_type = #tpu.core_type<tc>, window_params = [{transform_indices = @transform_0, window_bounds = array<i64: 1, 256, 64>}, {pipeline_mode = #tpu.pipeline_mode<synchronous>, transform_indices = @transform_1, window_bounds = array<i64: 64, 32>}, {pipeline_mode = #tpu.pipeline_mode<synchronous>, transform_indices = @transform_2, window_bounds = array<i64: 1, 32>}, {pipeline_mode = #tpu.pipeline_mode<synchronous>, transform_indices = @transform_3, window_bounds = array<i64: 3, 96, 64>}, {pipeline_mode = #tpu.pipeline_mode<synchronous>, transform_indices = @transform_4, window_bounds = array<i64: 1, 64>}, {transform_indices = @transform_5, window_bounds = array<i64: 1, 256, 64>}]} {
    %c0 = arith.constant 0 : index
    %c0_0 = arith.constant 0 : index
    %c0_1 = arith.constant 0 : index
    %0 = vector.load %arg1[%c0, %c0_0, %c0_1] : memref<1x256x64xf32, #tpu.memory_space<vmem>>, vector<1x256x64xf32>
    %1 = vector.shape_cast %0 : vector<1x256x64xf32> to vector<256x64xf32>
    %2 = arith.truncf %1 : vector<256x64xf32> to vector<256x64xbf16>
    %c0_2 = arith.constant 0 : index
    %c0_3 = arith.constant 0 : index
    %3 = vector.load %arg2[%c0_2, %c0_3] : memref<64x32xbf16, #tpu.memory_space<vmem>>, vector<64x32xbf16>
    %cst = arith.constant dense<0.000000e+00> : vector<256x32xf32>
    %4 = tpu.matmul %2, %3, %cst {dimension_numbers = #tpu.dot_dimension_numbers<[1], [0], [0], [1], [0, 0, 1, 1], [], []>} : vector<256x64xbf16>, vector<64x32xbf16>, vector<256x32xf32> -> vector<256x32xf32>
    %c0_4 = arith.constant 0 : index
    %c0_5 = arith.constant 0 : index
    %5 = vector.load %arg3[%c0_4, %c0_5] : memref<1x32xf32, #tpu.memory_space<vmem>>, vector<1x32xf32>
    %6 = vector.broadcast %5 : vector<1x32xf32> to vector<256x32xf32>
    %7 = arith.addf %4, %6 : vector<256x32xf32>
    %cst_6 = arith.constant 1.000000e-01 : f32
    %8 = vector.broadcast %cst_6 : f32 to vector<256x32xf32>
    %9 = arith.mulf %8, %7 : vector<256x32xf32>
    %10 = arith.maximumf %7, %9 : vector<256x32xf32>
    %cst_7 = arith.constant 0.000000e+00 : f32
    %11 = vector.broadcast %cst_7 : f32 to vector<304x32xf32>
    %c0_8 = arith.constant 0 : index
    %c0_9 = arith.constant 0 : index
    %12 = vector.load %arg7[%c0_8, %c0_9] : memref<304x32xf32, #tpu.memory_space<vmem>>, vector<304x32xf32>
    tpu.vector_store %arg7[%c0_8, %c0_9], %11 {strides = array<i32>} : memref<304x32xf32, #tpu.memory_space<vmem>>, vector<304x32xf32>,
    %c24 = arith.constant 24 : index
    %c0_10 = arith.constant 0 : index
    %13 = vector.load %arg7[%c24, %c0_10] : memref<304x32xf32, #tpu.memory_space<vmem>>, vector<256x32xf32>
    tpu.vector_store %arg7[%c24, %c0_10], %10 {strides = array<i32>} : memref<304x32xf32, #tpu.memory_space<vmem>>, vector<256x32xf32>,
    %14 = tpu.iota {dimensions = array<i32: 0>} : vector<256x96xi32>
    %c16_i32 = arith.constant 16 : i32
    %c0_i32 = arith.constant 0 : i32
    %15 = arith.cmpi eq, %c16_i32, %c0_i32 : i32
    %c1_i32 = arith.constant 1 : i32
    %16 = arith.select %15, %c1_i32, %c16_i32 : i32
    %17 = vector.broadcast %16 : i32 to vector<256x96xi32>
    %18 = arith.remsi %14, %17 : vector<256x96xi32>
    %c0_i32_11 = arith.constant 0 : i32
    %19 = vector.broadcast %c0_i32_11 : i32 to vector<256x96xi32>
    %20 = arith.cmpi ne, %18, %19 : vector<256x96xi32>
    %c0_i32_12 = arith.constant 0 : i32
    %21 = vector.broadcast %c0_i32_12 : i32 to vector<256x96xi32>
    %22 = arith.cmpi slt, %18, %21 : vector<256x96xi32>
    %c0_i32_13 = arith.constant 0 : i32
    %23 = arith.cmpi slt, %16, %c0_i32_13 : i32
    %24 = vector.broadcast %23 : i1 to vector<256x96xi1>
    %25 = vector.broadcast %24 : vector<256x96xi1> to vector<256x96xi1>
    %26 = arith.xori %22, %25 : vector<256x96xi1>
    %27 = arith.andi %26, %20 : vector<256x96xi1>
    %28 = vector.broadcast %16 : i32 to vector<256x96xi32>
    %29 = arith.addi %18, %28 : vector<256x96xi32>
    %30 = arith.select %27, %29, %18 : vector<256x96xi1>, vector<256x96xi32>
    %cst_14 = arith.constant 0.000000e+00 : f32
    %31 = vector.broadcast %cst_14 : f32 to vector<256x64xf32>
    %c7 = arith.constant 7 : index
    %c0_15 = arith.constant 0 : index
    %32 = vector.load %arg7[%c7, %c0_15] : memref<304x32xf32, #tpu.memory_space<vmem>>, vector<256x32xf32>
    %c23 = arith.constant 23 : index
    %c0_16 = arith.constant 0 : index
    %33 = vector.load %arg7[%c23, %c0_16] : memref<304x32xf32, #tpu.memory_space<vmem>>, vector<256x32xf32>
    %c39 = arith.constant 39 : index
    %c0_17 = arith.constant 0 : index
    %34 = vector.load %arg7[%c39, %c0_17] : memref<304x32xf32, #tpu.memory_space<vmem>>, vector<256x32xf32>
    %35 = tpu.concatenate %32, %33, %34 in 1 : vector<256x32xf32>, vector<256x32xf32>, vector<256x32xf32> -> vector<256x96xf32>
    %36 = arith.truncf %35 : vector<256x96xf32> to vector<256x96xbf16>
    %c1_i32_18 = arith.constant 1 : i32
    %37 = vector.broadcast %c1_i32_18 : i32 to vector<256x96xi32>
    %38 = arith.cmpi sge, %30, %37 : vector<256x96xi32>
    %cst_19 = arith.constant 0.000000e+00 : bf16
    %39 = vector.broadcast %cst_19 : bf16 to vector<256x96xbf16>
    %40 = arith.select %38, %36, %39 : vector<256x96xi1>, vector<256x96xbf16>
    %c0_20 = arith.constant 0 : index
    %c0_21 = arith.constant 0 : index
    %c0_22 = arith.constant 0 : index
    %41 = vector.load %arg4[%c0_20, %c0_21, %c0_22] : memref<3x96x64xbf16, #tpu.memory_space<vmem>>, vector<1x96x64xbf16>
    %42 = vector.shape_cast %41 : vector<1x96x64xbf16> to vector<96x64xbf16>
    %cst_23 = arith.constant dense<0.000000e+00> : vector<256x64xf32>
    %43 = tpu.matmul %40, %42, %cst_23 {dimension_numbers = #tpu.dot_dimension_numbers<[1], [0], [0], [1], [0, 0, 1, 1], [], []>} : vector<256x96xbf16>, vector<96x64xbf16>, vector<256x64xf32> -> vector<256x64xf32>
    %44 = arith.addf %31, %43 : vector<256x64xf32>
    %c8 = arith.constant 8 : index
    %c0_24 = arith.constant 0 : index
    %45 = vector.load %arg7[%c8, %c0_24] : memref<304x32xf32, #tpu.memory_space<vmem>>, vector<256x32xf32>
    %c24_25 = arith.constant 24 : index
    %c0_26 = arith.constant 0 : index
    %46 = vector.load %arg7[%c24_25, %c0_26] : memref<304x32xf32, #tpu.memory_space<vmem>>, vector<256x32xf32>
    %c40 = arith.constant 40 : index
    %c0_27 = arith.constant 0 : index
    %47 = vector.load %arg7[%c40, %c0_27] : memref<304x32xf32, #tpu.memory_space<vmem>>, vector<256x32xf32>
    %48 = tpu.concatenate %45, %46, %47 in 1 : vector<256x32xf32>, vector<256x32xf32>, vector<256x32xf32> -> vector<256x96xf32>
    %49 = arith.truncf %48 : vector<256x96xf32> to vector<256x96xbf16>
    %c1 = arith.constant 1 : index
    %c0_28 = arith.constant 0 : index
    %c0_29 = arith.constant 0 : index
    %50 = vector.load %arg4[%c1, %c0_28, %c0_29] : memref<3x96x64xbf16, #tpu.memory_space<vmem>>, vector<1x96x64xbf16>
    %51 = vector.shape_cast %50 : vector<1x96x64xbf16> to vector<96x64xbf16>
    %cst_30 = arith.constant dense<0.000000e+00> : vector<256x64xf32>
    %52 = tpu.matmul %49, %51, %cst_30 {dimension_numbers = #tpu.dot_dimension_numbers<[1], [0], [0], [1], [0, 0, 1, 1], [], []>} : vector<256x96xbf16>, vector<96x64xbf16>, vector<256x64xf32> -> vector<256x64xf32>
    %53 = arith.addf %44, %52 : vector<256x64xf32>
    %c9 = arith.constant 9 : index
    %c0_31 = arith.constant 0 : index
    %54 = vector.load %arg7[%c9, %c0_31] : memref<304x32xf32, #tpu.memory_space<vmem>>, vector<256x32xf32>
    %c25 = arith.constant 25 : index
    %c0_32 = arith.constant 0 : index
    %55 = vector.load %arg7[%c25, %c0_32] : memref<304x32xf32, #tpu.memory_space<vmem>>, vector<256x32xf32>
    %c41 = arith.constant 41 : index
    %c0_33 = arith.constant 0 : index
    %56 = vector.load %arg7[%c41, %c0_33] : memref<304x32xf32, #tpu.memory_space<vmem>>, vector<256x32xf32>
    %57 = tpu.concatenate %54, %55, %56 in 1 : vector<256x32xf32>, vector<256x32xf32>, vector<256x32xf32> -> vector<256x96xf32>
    %58 = arith.truncf %57 : vector<256x96xf32> to vector<256x96xbf16>
    %c14_i32 = arith.constant 14 : i32
    %59 = vector.broadcast %c14_i32 : i32 to vector<256x96xi32>
    %60 = arith.cmpi sle, %30, %59 : vector<256x96xi32>
    %cst_34 = arith.constant 0.000000e+00 : bf16
    %61 = vector.broadcast %cst_34 : bf16 to vector<256x96xbf16>
    %62 = arith.select %60, %58, %61 : vector<256x96xi1>, vector<256x96xbf16>
    %c2 = arith.constant 2 : index
    %c0_35 = arith.constant 0 : index
    %c0_36 = arith.constant 0 : index
    %63 = vector.load %arg4[%c2, %c0_35, %c0_36] : memref<3x96x64xbf16, #tpu.memory_space<vmem>>, vector<1x96x64xbf16>
    %64 = vector.shape_cast %63 : vector<1x96x64xbf16> to vector<96x64xbf16>
    %cst_37 = arith.constant dense<0.000000e+00> : vector<256x64xf32>
    %65 = tpu.matmul %62, %64, %cst_37 {dimension_numbers = #tpu.dot_dimension_numbers<[1], [0], [0], [1], [0, 0, 1, 1], [], []>} : vector<256x96xbf16>, vector<96x64xbf16>, vector<256x64xf32> -> vector<256x64xf32>
    %66 = arith.addf %53, %65 : vector<256x64xf32>
    %c0_38 = arith.constant 0 : index
    %c0_39 = arith.constant 0 : index
    %67 = vector.load %arg5[%c0_38, %c0_39] : memref<1x64xf32, #tpu.memory_space<vmem>>, vector<1x64xf32>
    %68 = vector.broadcast %67 : vector<1x64xf32> to vector<256x64xf32>
    %69 = arith.addf %66, %68 : vector<256x64xf32>
    %cst_40 = arith.constant 1.000000e-01 : f32
    %70 = vector.broadcast %cst_40 : f32 to vector<256x64xf32>
    %71 = arith.mulf %70, %69 : vector<256x64xf32>
    %72 = arith.maximumf %69, %71 : vector<256x64xf32>
    %c0_41 = arith.constant 0 : index
    %c0_42 = arith.constant 0 : index
    %c0_43 = arith.constant 0 : index
    %73 = vector.load %arg1[%c0_41, %c0_42, %c0_43] : memref<1x256x64xf32, #tpu.memory_space<vmem>>, vector<1x256x64xf32>
    %74 = vector.shape_cast %73 : vector<1x256x64xf32> to vector<256x64xf32>
    %75 = arith.addf %72, %74 : vector<256x64xf32>
    %c0_44 = arith.constant 0 : index
    %c0_45 = arith.constant 0 : index
    %c0_46 = arith.constant 0 : index
    %76 = vector.load %arg6[%c0_44, %c0_45, %c0_46] : memref<1x256x64xf32, #tpu.memory_space<vmem>>, vector<1x256x64xf32>
    %77 = vector.shape_cast %76 : vector<1x256x64xf32> to vector<256x64xf32>
    %78 = vector.shape_cast %75 : vector<256x64xf32> to vector<1x256x64xf32>
    tpu.vector_store %arg6[%c0_44, %c0_45, %c0_46], %78 {strides = array<i32>} : memref<1x256x64xf32, #tpu.memory_space<vmem>>, vector<1x256x64xf32>,
    return
  }
  func.func @transform_0(%arg0: i32) -> (i32, i32, i32) {
    %c0_i32 = arith.constant 0 : i32
    %c0_i32_0 = arith.constant 0 : i32
    %c0_i32_1 = arith.constant 0 : i32
    return %arg0, %c0_i32, %c0_i32_0 : i32, i32, i32
  }
  func.func @transform_1(%arg0: i32) -> (i32, i32) {
    %c0_i32 = arith.constant 0 : i32
    %c0_i32_0 = arith.constant 0 : i32
    %c0_i32_1 = arith.constant 0 : i32
    return %c0_i32, %c0_i32_0 : i32, i32
  }
  func.func @transform_2(%arg0: i32) -> (i32, i32) {
    %c0_i32 = arith.constant 0 : i32
    %c0_i32_0 = arith.constant 0 : i32
    %c0_i32_1 = arith.constant 0 : i32
    return %c0_i32, %c0_i32_0 : i32, i32
  }
  func.func @transform_3(%arg0: i32) -> (i32, i32, i32) {
    %c0_i32 = arith.constant 0 : i32
    %c0_i32_0 = arith.constant 0 : i32
    %c0_i32_1 = arith.constant 0 : i32
    %c0_i32_2 = arith.constant 0 : i32
    return %c0_i32, %c0_i32_0, %c0_i32_1 : i32, i32, i32
  }
  func.func @transform_4(%arg0: i32) -> (i32, i32) {
    %c0_i32 = arith.constant 0 : i32
    %c0_i32_0 = arith.constant 0 : i32
    %c0_i32_1 = arith.constant 0 : i32
    return %c0_i32, %c0_i32_0 : i32, i32
  }
  func.func @transform_5(%arg0: i32) -> (i32, i32, i32) {
    %c0_i32 = arith.constant 0 : i32
    %c0_i32_0 = arith.constant 0 : i32
    %c0_i32_1 = arith.constant 0 : i32
    return %arg0, %c0_i32, %c0_i32_0 : i32, i32, i32
  }
}

</mosaic_0001>

<llo_original>
// kernel: resblock_forward.3
$region0: #{resblock_forward.3}
  #allocation0 [shape = 'u32[]', space=smem, size = 0x4, offset = 0x4, fixed_abs, tag = 'smem constant byte address 0x4 - core index']
  #allocation1 [shape = 'u32[72,128]{1,0:T(1,128)}', space=vmem, size = 0x9000, scoped, tag = 'internal scratch']
  #allocation2 [shape = 'f32[304,32]{1,0:T(8,128)}', space=vmem, size = 0x26000, scoped, tag = 'scratch operand']
  %s0 = inlined_call_operand.vmem [shape: f32[2,256,64], index: 0, kind: input, shape index: {}]
  %s1 = inlined_call_operand.vmem [shape: bf16[64,32], index: 1, kind: input, shape index: {}]
  %s2 = inlined_call_operand.vmem [shape: f32[1,32], index: 2, kind: input, shape index: {}]
  %s3 = inlined_call_operand.vmem [shape: bf16[3,96,64], index: 3, kind: input, shape index: {}]
  %s4 = inlined_call_operand.vmem [shape: f32[1,64], index: 4, kind: input, shape index: {}]
  %s5 = inlined_call_operand.hbm [shape: f32[2,256,64], index: 5, kind: output, shape index: {}]
  %s6 = sld [smem:[#allocation0]]
  $region53: #{resblock_forward.3} parent=0
    _
  %s8 = ssub.s32 1, %s6
  %s9 = scalar_select 0, %s8, %s6
  $region1: #{resblock_forward.3} parent=0
    #allocation3 [shape = 'u8[262144]{0}', space=vmem, size = 0x40000, scoped, tag = 'output window, operand 0']
    #allocation4 [shape = 's32[2]{0}', space=sflag, size = 0x8, scoped, tag = 'scoped memory for resblock_forward.3']
    %10 = vsyncpa [#allocation4], 0
    %s11 = scalar_lea.sflag [#allocation4], 1
    %12 = vsyncpa %s11, 0
    loop: start=0, step=1, limit=4
    $region2: #{resblock_forward.3} parent=1 // loop_pre_header
      _
    $region3: #{resblock_forward.3} parent=1 // loop_header
      %s14 = sphi 0, %s18
      %p15 = scmp.ge.s32.totalorder %s14, 4
      %s24 = sphi 0, %s26
      %s27 = sphi 0, %s24
      %s28 = sphi 0, %s27
      %s44 = sphi 0, %s28
      %s48 = sphi 0, %s48
      %s50 = sphi 0, %s48
      %s51 = sphi 0, %s50
      %s65 = sphi 0, %s51
      %s69 = sphi 0, %s69
      %s71 = sphi 0, %s69
      %s72 = sphi 0, %s71
      %s86 = sphi 0, %s72
      %s90 = sphi 0, %s90
      %s92 = sphi 0, %s90
      %s93 = sphi 0, %s92
      %s107 = sphi 0, %s93
      %s111 = sphi 0, %s111
      %s113 = sphi 0, %s111
      %s114 = sphi 0, %s113
      %s128 = sphi 0, %s114
      %s134 = sphi 0, %s136
      %s137 = sphi 0, %s134
      %s138 = sphi 0, %s137
      %s154 = sphi 0, %s138
    $region4: #{resblock_forward.3} parent=1 // loop_header_branch
      %17 = sbr.rel (%p15) target = $region8
    $region5: #{resblock_forward.3} parent=1 // loop_body
      %s19 = ssub.s32 %s14, 1
      %s20 = ssub.s32 %s14, 2
      %s21 = sadd.s32 %s14, 1
      %s22 = ssub.s32 %s14, %s21
      %p23 = scmp.eq.s32.totalorder %s22, 0
      %s25 = sadd.s32 %s24, 1
      %s26 = scalar_select %p23, %s24, %s25
      %p29 = pneg %p23
      %p30 = scmp.eq.s32.totalorder %s14, 1
      %p31 = por %p29, %p30
      %p32 = scmp.ne.s32.totalorder %s24, %s27
      %p33 = scmp.eq.s32.totalorder %s14, 0
      %p34 = por %p32, %p33
      %p35 = scmp.ne.s32.totalorder %s24, %s27
      %p36 = scmp.eq.s32.totalorder %s19, 1
      %p37 = por %p35, %p36
      %p38 = scmp.ne.s32.totalorder %s27, %s28
      %p39 = scmp.eq.s32.totalorder %s19, 0
      %p40 = por %p38, %p39
      %p41 = scmp.ne.s32.totalorder %s27, %s28
      %p42 = scmp.eq.s32.totalorder %s20, 1
      %p43 = por %p41, %p42
      %p45 = scmp.ne.s32.totalorder %s28, %s44
      %p46 = scmp.eq.s32.totalorder %s20, 0
      %p47 = por %p45, %p46
      %s49 = sadd.s32 %s48, 1
      %p52 = scmp.eq.s32.totalorder %s14, 1
      %p53 = scmp.ne.s32.totalorder %s48, %s50
      %p54 = scmp.eq.s32.totalorder %s14, 0
      %p55 = por %p53, %p54
      %p56 = scmp.ne.s32.totalorder %s48, %s50
      %p57 = scmp.eq.s32.totalorder %s19, 1
      %p58 = por %p56, %p57
      %p59 = scmp.ne.s32.totalorder %s50, %s51
      %p60 = scmp.eq.s32.totalorder %s19, 0
      %p61 = por %p59, %p60
      %p62 = scmp.ne.s32.totalorder %s50, %s51
      %p63 = scmp.eq.s32.totalorder %s20, 1
      %p64 = por %p62, %p63
      %p66 = scmp.ne.s32.totalorder %s51, %s65
      %p67 = scmp.eq.s32.totalorder %s20, 0
      %p68 = por %p66, %p67
      %s70 = sadd.s32 %s69, 1
      %p73 = scmp.eq.s32.totalorder %s14, 1
      %p74 = scmp.ne.s32.totalorder %s69, %s71
      %p75 = scmp.eq.s32.totalorder %s14, 0
      %p76 = por %p74, %p75
      %p77 = scmp.ne.s32.totalorder %s69, %s71
      %p78 = scmp.eq.s32.totalorder %s19, 1
      %p79 = por %p77, %p78
      %p80 = scmp.ne.s32.totalorder %s71, %s72
      %p81 = scmp.eq.s32.totalorder %s19, 0
      %p82 = por %p80, %p81
      %p83 = scmp.ne.s32.totalorder %s71, %s72
      %p84 = scmp.eq.s32.totalorder %s20, 1
      %p85 = por %p83, %p84
      %p87 = scmp.ne.s32.totalorder %s72, %s86
      %p88 = scmp.eq.s32.totalorder %s20, 0
      %p89 = por %p87, %p88
      %s91 = sadd.s32 %s90, 1
      %p94 = scmp.eq.s32.totalorder %s14, 1
      %p95 = scmp.ne.s32.totalorder %s90, %s92
      %p96 = scmp.eq.s32.totalorder %s14, 0
      %p97 = por %p95, %p96
      %p98 = scmp.ne.s32.totalorder %s90, %s92
      %p99 = scmp.eq.s32.totalorder %s19, 1
      %p100 = por %p98, %p99
      %p101 = scmp.ne.s32.totalorder %s92, %s93
      %p102 = scmp.eq.s32.totalorder %s19, 0
      %p103 = por %p101, %p102
      %p104 = scmp.ne.s32.totalorder %s92, %s93
      %p105 = scmp.eq.s32.totalorder %s20, 1
      %p106 = por %p104, %p105
      %p108 = scmp.ne.s32.totalorder %s93, %s107
      %p109 = scmp.eq.s32.totalorder %s20, 0
      %p110 = por %p108, %p109
      %s112 = sadd.s32 %s111, 1
      %p115 = scmp.eq.s32.totalorder %s14, 1
      %p116 = scmp.ne.s32.totalorder %s111, %s113
      %p117 = scmp.eq.s32.totalorder %s14, 0
      %p118 = por %p116, %p117
      %p119 = scmp.ne.s32.totalorder %s111, %s113
      %p120 = scmp.eq.s32.totalorder %s19, 1
      %p121 = por %p119, %p120
      %p122 = scmp.ne.s32.totalorder %s113, %s114
      %p123 = scmp.eq.s32.totalorder %s19, 0
      %p124 = por %p122, %p123
      %p125 = scmp.ne.s32.totalorder %s113, %s114
      %p126 = scmp.eq.s32.totalorder %s20, 1
      %p127 = por %p125, %p126
      %p129 = scmp.ne.s32.totalorder %s114, %s128
      %p130 = scmp.eq.s32.totalorder %s20, 0
      %p131 = por %p129, %p130
      %s132 = ssub.s32 %s14, %s21
      %p133 = scmp.eq.s32.totalorder %s132, 0
      %s135 = sadd.s32 %s134, 1
      %s136 = scalar_select %p133, %s134, %s135
      %p139 = pneg %p133
      %p140 = scmp.eq.s32.totalorder %s14, 1
      %p141 = por %p139, %p140
      %p142 = scmp.ne.s32.totalorder %s134, %s137
      %p143 = scmp.eq.s32.totalorder %s14, 0
      %p144 = por %p142, %p143
      %p145 = scmp.ne.s32.totalorder %s134, %s137
      %p146 = scmp.eq.s32.totalorder %s19, 1
      %p147 = por %p145, %p146
      %p148 = scmp.ne.s32.totalorder %s137, %s138
      %p149 = scmp.eq.s32.totalorder %s19, 0
      %p150 = por %p148, %p149
      %p151 = scmp.ne.s32.totalorder %s137, %s138
      %p152 = scmp.eq.s32.totalorder %s20, 1
      %p153 = por %p151, %p152
      %p155 = scmp.ne.s32.totalorder %s138, %s154
      %p156 = scmp.eq.s32.totalorder %s20, 0
      %p157 = por %p155, %p156
      %p158 = scmp.le.s32.totalorder 1, %s14
      %p159 = scmp.lt.s32.totalorder %s14, 3
      %p160 = pnand %p158, %p159
      %p161 = pneg %p160
      // Predicated region
      $region9: #{resblock_forward.3} parent=5 // pred_check
        _
      $region10: #{resblock_forward.3} parent=5 // pred_check_branch
        %163 = sbr.rel (%p160) target = $region12
      $region11: #{resblock_forward.3} parent=5 // pred_region
        %s164 = ssub.s32 %s14, 1
        // Predicated region
        $region13: #{resblock_forward.3} parent=11 // pred_check
          %p165 = pneg %p61
        $region14: #{resblock_forward.3} parent=11 // pred_check_branch
          %167 = sbr.rel (%p165) target = $region16
        $region15: #{resblock_forward.3} parent=11 // pred_region
          _
        $region16: #{resblock_forward.3} parent=11 // pred_fallthru
          _
        // Predicated region
        $region17: #{resblock_forward.3} parent=11 // pred_check
          %p168 = pneg %p82
        $region18: #{resblock_forward.3} parent=11 // pred_check_branch
          %170 = sbr.rel (%p168) target = $region20
        $region19: #{resblock_forward.3} parent=11 // pred_region
          _
        $region20: #{resblock_forward.3} parent=11 // pred_fallthru
          _
        // Predicated region
        $region21: #{resblock_forward.3} parent=11 // pred_check
          %p171 = pneg %p103
        $region22: #{resblock_forward.3} parent=11 // pred_check_branch
          %173 = sbr.rel (%p171) target = $region24
        $region23: #{resblock_forward.3} parent=11 // pred_region
          _
        $region24: #{resblock_forward.3} parent=11 // pred_fallthru
          _
        // Predicated region
        $region25: #{resblock_forward.3} parent=11 // pred_check
          %p174 = pneg %p124
        $region26: #{resblock_forward.3} parent=11 // pred_check_branch
          %176 = sbr.rel (%p174) target = $region28
        $region27: #{resblock_forward.3} parent=11 // pred_region
          _
        $region28: #{resblock_forward.3} parent=11 // pred_fallthru
          _
      $region12: #{resblock_forward.3} parent=5 // pred_fallthru
        _
      %p177 = scmp.lt.s32.totalorder %s14, 2
      // Predicated region
      $region29: #{resblock_forward.3} parent=5 // pred_check
        %p178 = pneg %p177
      $region30: #{resblock_forward.3} parent=5 // pred_check_branch
        %180 = sbr.rel (%p178) target = $region32
      $region31: #{resblock_forward.3} parent=5 // pred_region
        // Predicated region
        $region33: #{resblock_forward.3} parent=31 // pred_check
          %p181 = pneg %p34
        $region34: #{resblock_forward.3} parent=31 // pred_check_branch
          %183 = sbr.rel (%p181) target = $region36
        $region35: #{resblock_forward.3} parent=31 // pred_region
          %p184 = scmp.lt.s32.totalorder %s14, 1
          %s185 = scalar_select %p184, %s14, 1
          %s186 = smul.addr %s185, 32
          %s187 = smul.addr %s186, 8
          %s188 = scalar_lea.vmem %s0, %s187
        $region36: #{resblock_forward.3} parent=31 // pred_fallthru
          _
      $region32: #{resblock_forward.3} parent=5 // pred_fallthru
        _
      %p189 = scmp.le.s32.totalorder 1, %s14
      %p190 = scmp.lt.s32.totalorder %s14, 3
      %p191 = pnand %p189, %p190
      %p192 = pneg %p191
      // Predicated region
      $region37: #{resblock_forward.3} parent=5 // pred_check
        _
      $region38: #{resblock_forward.3} parent=5 // pred_check_branch
        %194 = sbr.rel (%p191) target = $region40
      $region39: #{resblock_forward.3} parent=5 // pred_region
        %s195 = ssub.s32 %s14, 1
        %p196 = scmp.lt.s32.totalorder %s19, 1
        %s197 = scalar_select %p196, %s19, 1
        %s198 = smul.addr %s197, 32
        %s199 = smul.addr %s198, 8
        %s200 = scalar_lea.vmem %s0, %s199
        %p201 = pneg %p40
        %p202 = pneg %p37
        %p203 = pneg %p61
        %p204 = pneg %p58
        %p205 = pneg %p82
        %p206 = pneg %p79
        %p207 = pneg %p103
        %p208 = pneg %p100
        %p209 = pneg %p124
        %p210 = pneg %p121
        %p211 = pneg %p150
        %p212 = pneg %p147
        %s213 = sand.u32 %s137, 1
        %s214 = scalar_lea.sflag [#allocation4], %s213
        %s215 = sand.u32 %s137, 1
        %s216 = smul.addr %s215, 256
        %s217 = scalar_lea.vmem [#allocation3], %s216
        %p218 = scmp.lt.s32.totalorder %s19, 1
        %s219 = scalar_select %p218, %s19, 1
        %s220 = smul.addr %s219, 32
        %s221 = smul.addr %s220, 8
        %s222 = scalar_lea.vmem %s0, %s221
        %v224 = vld [vmem:[%s222] sm:$0xff]
        %v225 = vld [vmem:[%s222 + $0x8] sm:$0xff]
        %v226 = vld [vmem:[%s222 + $0x10] sm:$0xff]
        %v227 = vld [vmem:[%s222 + $0x18] sm:$0xff]
        %v228 = vld [vmem:[%s222 + $0x20] sm:$0xff]
        %v229 = vld [vmem:[%s222 + $0x28] sm:$0xff]
        %v230 = vld [vmem:[%s222 + $0x30] sm:$0xff]
        %v231 = vld [vmem:[%s222 + $0x38] sm:$0xff]
        %v232 = vld [vmem:[%s222 + $0x40] sm:$0xff]
        %v233 = vld [vmem:[%s222 + $0x48] sm:$0xff]
        %v234 = vld [vmem:[%s222 + $0x50] sm:$0xff]
        %v235 = vld [vmem:[%s222 + $0x58] sm:$0xff]
        %v236 = vld [vmem:[%s222 + $0x60] sm:$0xff]
        %v237 = vld [vmem:[%s222 + $0x68] sm:$0xff]
        %v238 = vld [vmem:[%s222 + $0x70] sm:$0xff]
        %v239 = vld [vmem:[%s222 + $0x78] sm:$0xff]
        %v240 = vld [vmem:[%s222 + $0x80] sm:$0xff]
        %v241 = vld [vmem:[%s222 + $0x88] sm:$0xff]
        %v242 = vld [vmem:[%s222 + $0x90] sm:$0xff]
        %v243 = vld [vmem:[%s222 + $0x98] sm:$0xff]
        %v244 = vld [vmem:[%s222 + $0xa0] sm:$0xff]
        %v245 = vld [vmem:[%s222 + $0xa8] sm:$0xff]
        %v246 = vld [vmem:[%s222 + $0xb0] sm:$0xff]
        %v247 = vld [vmem:[%s222 + $0xb8] sm:$0xff]
        %v248 = vld [vmem:[%s222 + $0xc0] sm:$0xff]
        %v249 = vld [vmem:[%s222 + $0xc8] sm:$0xff]
        %v250 = vld [vmem:[%s222 + $0xd0] sm:$0xff]
        %v251 = vld [vmem:[%s222 + $0xd8] sm:$0xff]
        %v252 = vld [vmem:[%s222 + $0xe0] sm:$0xff]
        %v253 = vld [vmem:[%s222 + $0xe8] sm:$0xff]
        %v254 = vld [vmem:[%s222 + $0xf0] sm:$0xff]
        %v255 = vld [vmem:[%s222 + $0xf8] sm:$0xff]
        %v256 = vpack.c.bf16 %v225, %v224
        %v257 = vpack.c.bf16 %v227, %v226
        %v258 = vpack.c.bf16 %v229, %v228
        %v259 = vpack.c.bf16 %v231, %v230
        %v260 = vpack.c.bf16 %v233, %v232
        %v261 = vpack.c.bf16 %v235, %v234
        %v262 = vpack.c.bf16 %v237, %v236
        %v263 = vpack.c.bf16 %v239, %v238
        %v264 = vpack.c.bf16 %v241, %v240
        %v265 = vpack.c.bf16 %v243, %v242
        %v266 = vpack.c.bf16 %v245, %v244
        %v267 = vpack.c.bf16 %v247, %v246
        %v268 = vpack.c.bf16 %v249, %v248
        %v269 = vpack.c.bf16 %v251, %v250
        %v270 = vpack.c.bf16 %v253, %v252
        %v271 = vpack.c.bf16 %v255, %v254
        %v272 = vld [vmem:[%s1] sm:$0xf]
        %v273 = vld [vmem:[%s1 + $0x4] sm:$0xf]
        %v274 = vld [vmem:[%s1 + $0x8] sm:$0xf]
        %v275 = vld [vmem:[%s1 + $0xc] sm:$0xf]
        %v276 = vld [vmem:[%s1 + $0x10] sm:$0xf]
        %v277 = vld [vmem:[%s1 + $0x14] sm:$0xf]
        %v278 = vld [vmem:[%s1 + $0x18] sm:$0xf]
        %v279 = vld [vmem:[%s1 + $0x1c] sm:$0xf]
        %v280 = vld [vmem:[%s2] sm:$0x1]
        %v282 = vperm.slane %v280, 0
        %v292 = vunpack.c.l.b16 %v272
        %v293 = vunpack.c.l.b16 %v273
        %v294 = vunpack.c.l.b16 %v274
        %v295 = vunpack.c.l.b16 %v275
        %v296 = vunpack.c.l.b16 %v276
        %v297 = vunpack.c.l.b16 %v277
        %v298 = vunpack.c.l.b16 %v278
        %v299 = vunpack.c.l.b16 %v279
        %v300 = vpack.c.b16 %v293, %v292
        %v301 = vpack.c.b16 %v295, %v294
        %v302 = vpack.c.b16 %v297, %v296
        %v303 = vpack.c.b16 %v299, %v298
        %vm308 = vcmask 523264
        %v310 = vsel %vm308, %v256, 0
        %v313 = vsel %vm308, %v257, 0
        %v316 = vsel %vm308, %v258, 0
        %v319 = vsel %vm308, %v259, 0
        %v322 = vsel %vm308, %v260, 0
        %v325 = vsel %vm308, %v261, 0
        %v328 = vsel %vm308, %v262, 0
        %v331 = vsel %vm308, %v263, 0
        %v334 = vsel %vm308, %v264, 0
        %v337 = vsel %vm308, %v265, 0
        %v340 = vsel %vm308, %v266, 0
        %v343 = vsel %vm308, %v267, 0
        %v346 = vsel %vm308, %v268, 0
        %v349 = vsel %vm308, %v269, 0
        %v352 = vsel %vm308, %v270, 0
        %v355 = vsel %vm308, %v271, 0
        %357 = vmatpush.bf16.msra.mxu0 0
        %358 = vmatpush.bf16.msra.mxu0 0
        %359 = vmatpush.bf16.msra.mxu0 0
        %360 = vmatpush.bf16.msra.mxu0 0
        %361 = vmatpush.bf16.msra.mxu0 %v303
        %362 = vmatpush.bf16.msra.mxu0 %v302
        %363 = vmatpush.bf16.msra.mxu0 %v301
        %364 = vmatpush.bf16.msra.mxu0 %v300
        %365 = vmatmul.bf16.gmra.mxu0 %v310
        %v366 = vpop.f32.mrf.mxu0
        %v367 = vadd.f32 %v282, %v366
        %v368 = vpop.f32.mrf.mxu0
        %v369 = vadd.f32 %v282, %v368
        %370 = vmatmul.bf16.gmra.mxu0 %v313
        %v371 = vpop.f32.mrf.mxu0
        %v372 = vadd.f32 %v282, %v371
        %v373 = vpop.f32.mrf.mxu0
        %v374 = vadd.f32 %v282, %v373
        %375 = vmatmul.bf16.gmra.mxu0 %v316
        %v376 = vpop.f32.mrf.mxu0
        %v377 = vadd.f32 %v282, %v376
        %v378 = vpop.f32.mrf.mxu0
        %v379 = vadd.f32 %v282, %v378
        %380 = vmatmul.bf16.gmra.mxu0 %v319
        %v381 = vpop.f32.mrf.mxu0
        %v382 = vadd.f32 %v282, %v381
        %v383 = vpop.f32.mrf.mxu0
        %v384 = vadd.f32 %v282, %v383
        %385 = vmatmul.bf16.gmra.mxu0 %v322
        %v386 = vpop.f32.mrf.mxu0
        %v387 = vadd.f32 %v282, %v386
        %v388 = vpop.f32.mrf.mxu0
        %v389 = vadd.f32 %v282, %v388
        %390 = vmatmul.bf16.gmra.mxu0 %v325
        %v391 = vpop.f32.mrf.mxu0
        %v392 = vadd.f32 %v282, %v391
        %v393 = vpop.f32.mrf.mxu0
        %v394 = vadd.f32 %v282, %v393
        %395 = vmatmul.bf16.gmra.mxu0 %v328
        %v396 = vpop.f32.mrf.mxu0
        %v397 = vadd.f32 %v282, %v396
        %v398 = vpop.f32.mrf.mxu0
        %v399 = vadd.f32 %v282, %v398
        %400 = vmatmul.bf16.gmra.mxu0 %v331
        %v401 = vpop.f32.mrf.mxu0
        %v402 = vadd.f32 %v282, %v401
        %v403 = vpop.f32.mrf.mxu0
        %v404 = vadd.f32 %v282, %v403
        %405 = vmatmul.bf16.gmra.mxu0 %v334
        %v406 = vpop.f32.mrf.mxu0
        %v407 = vadd.f32 %v282, %v406
        %v408 = vpop.f32.mrf.mxu0
        %v409 = vadd.f32 %v282, %v408
        %410 = vmatmul.bf16.gmra.mxu0 %v337
        %v411 = vpop.f32.mrf.mxu0
        %v412 = vadd.f32 %v282, %v411
        %v413 = vpop.f32.mrf.mxu0
        %v414 = vadd.f32 %v282, %v413
        %415 = vmatmul.bf16.gmra.mxu0 %v340
        %v416 = vpop.f32.mrf.mxu0
        %v417 = vadd.f32 %v282, %v416
        %v418 = vpop.f32.mrf.mxu0
        %v419 = vadd.f32 %v282, %v418
        %420 = vmatmul.bf16.gmra.mxu0 %v343
        %v421 = vpop.f32.mrf.mxu0
        %v422 = vadd.f32 %v282, %v421
        %v423 = vpop.f32.mrf.mxu0
        %v424 = vadd.f32 %v282, %v423
        %425 = vmatmul.bf16.gmra.mxu0 %v346
        %v426 = vpop.f32.mrf.mxu0
        %v427 = vadd.f32 %v282, %v426
        %v428 = vpop.f32.mrf.mxu0
        %v429 = vadd.f32 %v282, %v428
        %430 = vmatmul.bf16.gmra.mxu0 %v349
        %v431 = vpop.f32.mrf.mxu0
        %v432 = vadd.f32 %v282, %v431
        %v433 = vpop.f32.mrf.mxu0
        %v434 = vadd.f32 %v282, %v433
        %435 = vmatmul.bf16.gmra.mxu0 %v352
        %v436 = vpop.f32.mrf.mxu0
        %v437 = vadd.f32 %v282, %v436
        %v438 = vpop.f32.mrf.mxu0
        %v439 = vadd.f32 %v282, %v438
        %440 = vmatmul.bf16.gmra.mxu0 %v355
        %v441 = vpop.f32.mrf.mxu0
        %v442 = vadd.f32 %v282, %v441
        %v443 = vpop.f32.mrf.mxu0
        %v444 = vadd.f32 %v282, %v443
        %445 = vdwg.mxu0
        %v446 = vmul.f32 %v367, 0.1
        %v447 = vmul.f32 %v369, 0.1
        %v448 = vmul.f32 %v372, 0.1
        %v449 = vmul.f32 %v374, 0.1
        %v450 = vmul.f32 %v377, 0.1
        %v451 = vmul.f32 %v379, 0.1
        %v452 = vmul.f32 %v382, 0.1
        %v453 = vmul.f32 %v384, 0.1
        %v454 = vmul.f32 %v387, 0.1
        %v455 = vmul.f32 %v389, 0.1
        %v456 = vmul.f32 %v392, 0.1
        %v457 = vmul.f32 %v394, 0.1
        %v458 = vmul.f32 %v397, 0.1
        %v459 = vmul.f32 %v399, 0.1
        %v460 = vmul.f32 %v402, 0.1
        %v461 = vmul.f32 %v404, 0.1
        %v462 = vmul.f32 %v407, 0.1
        %v463 = vmul.f32 %v409, 0.1
        %v464 = vmul.f32 %v412, 0.1
        %v465 = vmul.f32 %v414, 0.1
        %v466 = vmul.f32 %v417, 0.1
        %v467 = vmul.f32 %v419, 0.1
        %v468 = vmul.f32 %v422, 0.1
        %v469 = vmul.f32 %v424, 0.1
        %v470 = vmul.f32 %v427, 0.1
        %v471 = vmul.f32 %v429, 0.1
        %v472 = vmul.f32 %v432, 0.1
        %v473 = vmul.f32 %v434, 0.1
        %v474 = vmul.f32 %v437, 0.1
        %v475 = vmul.f32 %v439, 0.1
        %v476 = vmul.f32 %v442, 0.1
        %v477 = vmul.f32 %v444, 0.1
        %v478 = vmax.f32 %v367, %v446
        %v479 = vmax.f32 %v369, %v447
        %v480 = vmax.f32 %v372, %v448
        %v481 = vmax.f32 %v374, %v449
        %v482 = vmax.f32 %v377, %v450
        %v483 = vmax.f32 %v379, %v451
        %v484 = vmax.f32 %v382, %v452
        %v485 = vmax.f32 %v384, %v453
        %v486 = vmax.f32 %v387, %v454
        %v487 = vmax.f32 %v389, %v455
        %v488 = vmax.f32 %v392, %v456
        %v489 = vmax.f32 %v394, %v457
        %v490 = vmax.f32 %v397, %v458
        %v491 = vmax.f32 %v399, %v459
        %v492 = vmax.f32 %v402, %v460
        %v493 = vmax.f32 %v404, %v461
        %v494 = vmax.f32 %v407, %v462
        %v495 = vmax.f32 %v409, %v463
        %v496 = vmax.f32 %v412, %v464
        %v497 = vmax.f32 %v414, %v465
        %v498 = vmax.f32 %v417, %v466
        %v499 = vmax.f32 %v419, %v467
        %v500 = vmax.f32 %v422, %v468
        %v501 = vmax.f32 %v424, %v469
        %v502 = vmax.f32 %v427, %v470
        %v503 = vmax.f32 %v429, %v471
        %v504 = vmax.f32 %v432, %v472
        %v505 = vmax.f32 %v434, %v473
        %v506 = vmax.f32 %v437, %v474
        %v507 = vmax.f32 %v439, %v475
        %v508 = vmax.f32 %v442, %v476
        %v509 = vmax.f32 %v444, %v477
        %vm510 = vcmask 261120
        %511 = vst.msk [vmem:[#allocation2] sm:$0xff] %vm510, 0.0
        %512 = vst.msk [vmem:[#allocation2 + $0x8] sm:$0xff] %vm510, 0.0
        %513 = vst.msk [vmem:[#allocation2 + $0x10] sm:$0xff] %vm510, 0.0
        %514 = vst.msk [vmem:[#allocation2 + $0x18] sm:$0xff] %vm510, 0.0
        %515 = vst.msk [vmem:[#allocation2 + $0x20] sm:$0xff] %vm510, 0.0
        %516 = vst.msk [vmem:[#allocation2 + $0x28] sm:$0xff] %vm510, 0.0
        %517 = vst.msk [vmem:[#allocation2 + $0x30] sm:$0xff] %vm510, 0.0
        %518 = vst.msk [vmem:[#allocation2 + $0x38] sm:$0xff] %vm510, 0.0
        %519 = vst.msk [vmem:[#allocation2 + $0x40] sm:$0xff] %vm510, 0.0
        %520 = vst.msk [vmem:[#allocation2 + $0x48] sm:$0xff] %vm510, 0.0
        %521 = vst.msk [vmem:[#allocation2 + $0x50] sm:$0xff] %vm510, 0.0
        %522 = vst.msk [vmem:[#allocation2 + $0x58] sm:$0xff] %vm510, 0.0
        %523 = vst.msk [vmem:[#allocation2 + $0x60] sm:$0xff] %vm510, 0.0
        %524 = vst.msk [vmem:[#allocation2 + $0x68] sm:$0xff] %vm510, 0.0
        %525 = vst.msk [vmem:[#allocation2 + $0x70] sm:$0xff] %vm510, 0.0
        %526 = vst.msk [vmem:[#allocation2 + $0x78] sm:$0xff] %vm510, 0.0
        %527 = vst.msk [vmem:[#allocation2 + $0x80] sm:$0xff] %vm510, 0.0
        %528 = vst.msk [vmem:[#allocation2 + $0x88] sm:$0xff] %vm510, 0.0
        %529 = vst.msk [vmem:[#allocation2 + $0x90] sm:$0xff] %vm510, 0.0
        %530 = vst.msk [vmem:[#allocation2 + $0x98] sm:$0xff] %vm510, 0.0
        %531 = vst.msk [vmem:[#allocation2 + $0xa0] sm:$0xff] %vm510, 0.0
        %532 = vst.msk [vmem:[#allocation2 + $0xa8] sm:$0xff] %vm510, 0.0
        %533 = vst.msk [vmem:[#allocation2 + $0xb0] sm:$0xff] %vm510, 0.0
        %534 = vst.msk [vmem:[#allocation2 + $0xb8] sm:$0xff] %vm510, 0.0
        %535 = vst.msk [vmem:[#allocation2 + $0xc0] sm:$0xff] %vm510, 0.0
        %536 = vst.msk [vmem:[#allocation2 + $0xc8] sm:$0xff] %vm510, 0.0
        %537 = vst.msk [vmem:[#allocation2 + $0xd0] sm:$0xff] %vm510, 0.0
        %538 = vst.msk [vmem:[#allocation2 + $0xd8] sm:$0xff] %vm510, 0.0
        %539 = vst.msk [vmem:[#allocation2 + $0xe0] sm:$0xff] %vm510, 0.0
        %540 = vst.msk [vmem:[#allocation2 + $0xe8] sm:$0xff] %vm510, 0.0
        %541 = vst.msk [vmem:[#allocation2 + $0xf0] sm:$0xff] %vm510, 0.0
        %542 = vst.msk [vmem:[#allocation2 + $0xf8] sm:$0xff] %vm510, 0.0
        %543 = vst.msk [vmem:[#allocation2 + $0x100] sm:$0xff] %vm510, 0.0
        %544 = vst.msk [vmem:[#allocation2 + $0x108] sm:$0xff] %vm510, 0.0
        %545 = vst.msk [vmem:[#allocation2 + $0x110] sm:$0xff] %vm510, 0.0
        %546 = vst.msk [vmem:[#allocation2 + $0x118] sm:$0xff] %vm510, 0.0
        %547 = vst.msk [vmem:[#allocation2 + $0x120] sm:$0xff] %vm510, 0.0
        %548 = vst.msk [vmem:[#allocation2 + $0x128] sm:$0xff] %vm510, 0.0
        %549 = vst.msk [vmem:[#allocation2 + $0x18] sm:$0xff] %vm510, %v478
        %550 = vst.msk [vmem:[#allocation2 + $0x20] sm:$0xff] %vm510, %v479
        %551 = vst.msk [vmem:[#allocation2 + $0x28] sm:$0xff] %vm510, %v480
        %552 = vst.msk [vmem:[#allocation2 + $0x30] sm:$0xff] %vm510, %v481
        %553 = vst.msk [vmem:[#allocation2 + $0x38] sm:$0xff] %vm510, %v482
        %554 = vst.msk [vmem:[#allocation2 + $0x40] sm:$0xff] %vm510, %v483
        %555 = vst.msk [vmem:[#allocation2 + $0x48] sm:$0xff] %vm510, %v484
        %556 = vst.msk [vmem:[#allocation2 + $0x50] sm:$0xff] %vm510, %v485
        %557 = vst.msk [vmem:[#allocation2 + $0x58] sm:$0xff] %vm510, %v486
        %558 = vst.msk [vmem:[#allocation2 + $0x60] sm:$0xff] %vm510, %v487
        %559 = vst.msk [vmem:[#allocation2 + $0x68] sm:$0xff] %vm510, %v488
        %560 = vst.msk [vmem:[#allocation2 + $0x70] sm:$0xff] %vm510, %v489
        %561 = vst.msk [vmem:[#allocation2 + $0x78] sm:$0xff] %vm510, %v490
        %562 = vst.msk [vmem:[#allocation2 + $0x80] sm:$0xff] %vm510, %v491
        %563 = vst.msk [vmem:[#allocation2 + $0x88] sm:$0xff] %vm510, %v492
        %564 = vst.msk [vmem:[#allocation2 + $0x90] sm:$0xff] %vm510, %v493
        %565 = vst.msk [vmem:[#allocation2 + $0x98] sm:$0xff] %vm510, %v494
        %566 = vst.msk [vmem:[#allocation2 + $0xa0] sm:$0xff] %vm510, %v495
        %567 = vst.msk [vmem:[#allocation2 + $0xa8] sm:$0xff] %vm510, %v496
        %568 = vst.msk [vmem:[#allocation2 + $0xb0] sm:$0xff] %vm510, %v497
        %569 = vst.msk [vmem:[#allocation2 + $0xb8] sm:$0xff] %vm510, %v498
        %570 = vst.msk [vmem:[#allocation2 + $0xc0] sm:$0xff] %vm510, %v499
        %571 = vst.msk [vmem:[#allocation2 + $0xc8] sm:$0xff] %vm510, %v500
        %572 = vst.msk [vmem:[#allocation2 + $0xd0] sm:$0xff] %vm510, %v501
        %573 = vst.msk [vmem:[#allocation2 + $0xd8] sm:$0xff] %vm510, %v502
        %574 = vst.msk [vmem:[#allocation2 + $0xe0] sm:$0xff] %vm510, %v503
        %575 = vst.msk [vmem:[#allocation2 + $0xe8] sm:$0xff] %vm510, %v504
        %576 = vst.msk [vmem:[#allocation2 + $0xf0] sm:$0xff] %vm510, %v505
        %577 = vst.msk [vmem:[#allocation2 + $0xf8] sm:$0xff] %vm510, %v506
        %578 = vst.msk [vmem:[#allocation2 + $0x100] sm:$0xff] %vm510, %v507
        %579 = vst.msk [vmem:[#allocation2 + $0x108] sm:$0xff] %vm510, %v508
        %580 = vst.msk [vmem:[#allocation2 + $0x110] sm:$0xff] %vm510, %v509
        %v581 = vlaneseq
        %v582 = vshrl.u32 %v581, 7
        %v583 = vadd.s32 %v582, 8
        %v584 = vadd.s32 %v582, 16
        %v585 = vadd.s32 %v582, 24
        %v586 = vadd.s32 %v582, 32
        %v587 = vadd.s32 %v582, 40
        %v588 = vadd.s32 %v582, 48
        %v589 = vadd.s32 %v582, 56
        %v590 = vadd.s32 %v582, 64
        %v591 = vadd.s32 %v582, 72
        %v592 = vadd.s32 %v582, 80
        %v593 = vadd.s32 %v582, 88
        %v594 = vadd.s32 %v582, 96
        %v595 = vadd.s32 %v582, 104
        %v596 = vadd.s32 %v582, 112
        %v597 = vadd.s32 %v582, 120
        %v598 = vadd.s32 %v582, 128
        %v599 = vadd.s32 %v582, 136
        %v600 = vadd.s32 %v582, 144
        %v601 = vadd.s32 %v582, 152
        %v602 = vadd.s32 %v582, 160
        %v603 = vadd.s32 %v582, 168
        %v604 = vadd.s32 %v582, 176
        %v605 = vadd.s32 %v582, 184
        %v606 = vadd.s32 %v582, 192
        %v607 = vadd.s32 %v582, 200
        %v608 = vadd.s32 %v582, 208
        %v609 = vadd.s32 %v582, 216
        %v610 = vadd.s32 %v582, 224
        %v611 = vadd.s32 %v582, 232
        %v612 = vadd.s32 %v582, 240
        %v613 = vadd.s32 %v582, 248
        %vm614 = vcmp.lt.s32.totalorder %v582, 0
        %v615 = vsub.s32 0, %v582
        %v616 = vsel %vm614, %v615, %v582
        %v617 = vshrl.u32 %v616, 4
        %v618 = vand.u32 %v616, 15
        %v619 = vsub.s32 0, %v618
        %v620 = vsel %vm614, %v619, %v618
        %vm621 = vcmp.lt.s32.totalorder %v583, 0
        %v622 = vsub.s32 0, %v583
        %v623 = vsel %vm621, %v622, %v583
        %v624 = vshrl.u32 %v623, 4
        %v625 = vand.u32 %v623, 15
        %v626 = vsub.s32 0, %v625
        %v627 = vsel %vm621, %v626, %v625
        %vm628 = vcmp.lt.s32.totalorder %v584, 0
        %v629 = vsub.s32 0, %v584
        %v630 = vsel %vm628, %v629, %v584
        %v631 = vshrl.u32 %v630, 4
        %v632 = vand.u32 %v630, 15
        %v633 = vsub.s32 0, %v632
        %v634 = vsel %vm628, %v633, %v632
        %vm635 = vcmp.lt.s32.totalorder %v585, 0
        %v636 = vsub.s32 0, %v585
        %v637 = vsel %vm635, %v636, %v585
        %v638 = vshrl.u32 %v637, 4
        %v639 = vand.u32 %v637, 15
        %v640 = vsub.s32 0, %v639
        %v641 = vsel %vm635, %v640, %v639
        %vm642 = vcmp.lt.s32.totalorder %v586, 0
        %v643 = vsub.s32 0, %v586
        %v644 = vsel %vm642, %v643, %v586
        %v645 = vshrl.u32 %v644, 4
        %v646 = vand.u32 %v644, 15
        %v647 = vsub.s32 0, %v646
        %v648 = vsel %vm642, %v647, %v646
        %vm649 = vcmp.lt.s32.totalorder %v587, 0
        %v650 = vsub.s32 0, %v587
        %v651 = vsel %vm649, %v650, %v587
        %v652 = vshrl.u32 %v651, 4
        %v653 = vand.u32 %v651, 15
        %v654 = vsub.s32 0, %v653
        %v655 = vsel %vm649, %v654, %v653
        %vm656 = vcmp.lt.s32.totalorder %v588, 0
        %v657 = vsub.s32 0, %v588
        %v658 = vsel %vm656, %v657, %v588
        %v659 = vshrl.u32 %v658, 4
        %v660 = vand.u32 %v658, 15
        %v661 = vsub.s32 0, %v660
        %v662 = vsel %vm656, %v661, %v660
        %vm663 = vcmp.lt.s32.totalorder %v589, 0
        %v664 = vsub.s32 0, %v589
        %v665 = vsel %vm663, %v664, %v589
        %v666 = vshrl.u32 %v665, 4
        %v667 = vand.u32 %v665, 15
        %v668 = vsub.s32 0, %v667
        %v669 = vsel %vm663, %v668, %v667
        %vm670 = vcmp.lt.s32.totalorder %v590, 0
        %v671 = vsub.s32 0, %v590
        %v672 = vsel %vm670, %v671, %v590
        %v673 = vshrl.u32 %v672, 4
        %v674 = vand.u32 %v672, 15
        %v675 = vsub.s32 0, %v674
        %v676 = vsel %vm670, %v675, %v674
        %vm677 = vcmp.lt.s32.totalorder %v591, 0
        %v678 = vsub.s32 0, %v591
        %v679 = vsel %vm677, %v678, %v591
        %v680 = vshrl.u32 %v679, 4
        %v681 = vand.u32 %v679, 15
        %v682 = vsub.s32 0, %v681
        %v683 = vsel %vm677, %v682, %v681
        %vm684 = vcmp.lt.s32.totalorder %v592, 0
        %v685 = vsub.s32 0, %v592
        %v686 = vsel %vm684, %v685, %v592
        %v687 = vshrl.u32 %v686, 4
        %v688 = vand.u32 %v686, 15
        %v689 = vsub.s32 0, %v688
        %v690 = vsel %vm684, %v689, %v688
        %vm691 = vcmp.lt.s32.totalorder %v593, 0
        %v692 = vsub.s32 0, %v593
        %v693 = vsel %vm691, %v692, %v593
        %v694 = vshrl.u32 %v693, 4
        %v695 = vand.u32 %v693, 15
        %v696 = vsub.s32 0, %v695
        %v697 = vsel %vm691, %v696, %v695
        %vm698 = vcmp.lt.s32.totalorder %v594, 0
        %v699 = vsub.s32 0, %v594
        %v700 = vsel %vm698, %v699, %v594
        %v701 = vshrl.u32 %v700, 4
        %v702 = vand.u32 %v700, 15
        %v703 = vsub.s32 0, %v702
        %v704 = vsel %vm698, %v703, %v702
        %vm705 = vcmp.lt.s32.totalorder %v595, 0
        %v706 = vsub.s32 0, %v595
        %v707 = vsel %vm705, %v706, %v595
        %v708 = vshrl.u32 %v707, 4
        %v709 = vand.u32 %v707, 15
        %v710 = vsub.s32 0, %v709
        %v711 = vsel %vm705, %v710, %v709
        %vm712 = vcmp.lt.s32.totalorder %v596, 0
        %v713 = vsub.s32 0, %v596
        %v714 = vsel %vm712, %v713, %v596
        %v715 = vshrl.u32 %v714, 4
        %v716 = vand.u32 %v714, 15
        %v717 = vsub.s32 0, %v716
        %v718 = vsel %vm712, %v717, %v716
        %vm719 = vcmp.lt.s32.totalorder %v597, 0
        %v720 = vsub.s32 0, %v597
        %v721 = vsel %vm719, %v720, %v597
        %v722 = vshrl.u32 %v721, 4
        %v723 = vand.u32 %v721, 15
        %v724 = vsub.s32 0, %v723
        %v725 = vsel %vm719, %v724, %v723
        %vm726 = vcmp.lt.s32.totalorder %v598, 0
        %v727 = vsub.s32 0, %v598
        %v728 = vsel %vm726, %v727, %v598
        %v729 = vshrl.u32 %v728, 4
        %v730 = vand.u32 %v728, 15
        %v731 = vsub.s32 0, %v730
        %v732 = vsel %vm726, %v731, %v730
        %vm733 = vcmp.lt.s32.totalorder %v599, 0
        %v734 = vsub.s32 0, %v599
        %v735 = vsel %vm733, %v734, %v599
        %v736 = vshrl.u32 %v735, 4
        %v737 = vand.u32 %v735, 15
        %v738 = vsub.s32 0, %v737
        %v739 = vsel %vm733, %v738, %v737
        %vm740 = vcmp.lt.s32.totalorder %v600, 0
        %v741 = vsub.s32 0, %v600
        %v742 = vsel %vm740, %v741, %v600
        %v743 = vshrl.u32 %v742, 4
        %v744 = vand.u32 %v742, 15
        %v745 = vsub.s32 0, %v744
        %v746 = vsel %vm740, %v745, %v744
        %vm747 = vcmp.lt.s32.totalorder %v601, 0
        %v748 = vsub.s32 0, %v601
        %v749 = vsel %vm747, %v748, %v601
        %v750 = vshrl.u32 %v749, 4
        %v751 = vand.u32 %v749, 15
        %v752 = vsub.s32 0, %v751
        %v753 = vsel %vm747, %v752, %v751
        %vm754 = vcmp.lt.s32.totalorder %v602, 0
        %v755 = vsub.s32 0, %v602
        %v756 = vsel %vm754, %v755, %v602
        %v757 = vshrl.u32 %v756, 4
        %v758 = vand.u32 %v756, 15
        %v759 = vsub.s32 0, %v758
        %v760 = vsel %vm754, %v759, %v758
        %vm761 = vcmp.lt.s32.totalorder %v603, 0
        %v762 = vsub.s32 0, %v603
        %v763 = vsel %vm761, %v762, %v603
        %v764 = vshrl.u32 %v763, 4
        %v765 = vand.u32 %v763, 15
        %v766 = vsub.s32 0, %v765
        %v767 = vsel %vm761, %v766, %v765
        %vm768 = vcmp.lt.s32.totalorder %v604, 0
        %v769 = vsub.s32 0, %v604
        %v770 = vsel %vm768, %v769, %v604
        %v771 = vshrl.u32 %v770, 4
        %v772 = vand.u32 %v770, 15
        %v773 = vsub.s32 0, %v772
        %v774 = vsel %vm768, %v773, %v772
        %vm775 = vcmp.lt.s32.totalorder %v605, 0
        %v776 = vsub.s32 0, %v605
        %v777 = vsel %vm775, %v776, %v605
        %v778 = vshrl.u32 %v777, 4
        %v779 = vand.u32 %v777, 15
        %v780 = vsub.s32 0, %v779
        %v781 = vsel %vm775, %v780, %v779
        %vm782 = vcmp.lt.s32.totalorder %v606, 0
        %v783 = vsub.s32 0, %v606
        %v784 = vsel %vm782, %v783, %v606
        %v785 = vshrl.u32 %v784, 4
        %v786 = vand.u32 %v784, 15
        %v787 = vsub.s32 0, %v786
        %v788 = vsel %vm782, %v787, %v786
        %vm789 = vcmp.lt.s32.totalorder %v607, 0
        %v790 = vsub.s32 0, %v607
        %v791 = vsel %vm789, %v790, %v607
        %v792 = vshrl.u32 %v791, 4
        %v793 = vand.u32 %v791, 15
        %v794 = vsub.s32 0, %v793
        %v795 = vsel %vm789, %v794, %v793
        %vm796 = vcmp.lt.s32.totalorder %v608, 0
        %v797 = vsub.s32 0, %v608
        %v798 = vsel %vm796, %v797, %v608
        %v799 = vshrl.u32 %v798, 4
        %v800 = vand.u32 %v798, 15
        %v801 = vsub.s32 0, %v800
        %v802 = vsel %vm796, %v801, %v800
        %vm803 = vcmp.lt.s32.totalorder %v609, 0
        %v804 = vsub.s32 0, %v609
        %v805 = vsel %vm803, %v804, %v609
        %v806 = vshrl.u32 %v805, 4
        %v807 = vand.u32 %v805, 15
        %v808 = vsub.s32 0, %v807
        %v809 = vsel %vm803, %v808, %v807
        %vm810 = vcmp.lt.s32.totalorder %v610, 0
        %v811 = vsub.s32 0, %v610
        %v812 = vsel %vm810, %v811, %v610
        %v813 = vshrl.u32 %v812, 4
        %v814 = vand.u32 %v812, 15
        %v815 = vsub.s32 0, %v814
        %v816 = vsel %vm810, %v815, %v814
        %vm817 = vcmp.lt.s32.totalorder %v611, 0
        %v818 = vsub.s32 0, %v611
        %v819 = vsel %vm817, %v818, %v611
        %v820 = vshrl.u32 %v819, 4
        %v821 = vand.u32 %v819, 15
        %v822 = vsub.s32 0, %v821
        %v823 = vsel %vm817, %v822, %v821
        %vm824 = vcmp.lt.s32.totalorder %v612, 0
        %v825 = vsub.s32 0, %v612
        %v826 = vsel %vm824, %v825, %v612
        %v827 = vshrl.u32 %v826, 4
        %v828 = vand.u32 %v826, 15
        %v829 = vsub.s32 0, %v828
        %v830 = vsel %vm824, %v829, %v828
        %vm831 = vcmp.lt.s32.totalorder %v613, 0
        %v832 = vsub.s32 0, %v613
        %v833 = vsel %vm831, %v832, %v613
        %v834 = vshrl.u32 %v833, 4
        %v835 = vand.u32 %v833, 15
        %v836 = vsub.s32 0, %v835
        %v837 = vsel %vm831, %v836, %v835
        %vm838 = vcmp.ne.s32.totalorder %v620, 0
        %vm839 = vcmp.ne.s32.totalorder %v627, 0
        %vm840 = vcmp.ne.s32.totalorder %v634, 0
        %vm841 = vcmp.ne.s32.totalorder %v641, 0
        %vm842 = vcmp.ne.s32.totalorder %v648, 0
        %vm843 = vcmp.ne.s32.totalorder %v655, 0
        %vm844 = vcmp.ne.s32.totalorder %v662, 0
        %vm845 = vcmp.ne.s32.totalorder %v669, 0
        %vm846 = vcmp.ne.s32.totalorder %v676, 0
        %vm847 = vcmp.ne.s32.totalorder %v683, 0
        %vm848 = vcmp.ne.s32.totalorder %v690, 0
        %vm849 = vcmp.ne.s32.totalorder %v697, 0
        %vm850 = vcmp.ne.s32.totalorder %v704, 0
        %vm851 = vcmp.ne.s32.totalorder %v711, 0
        %vm852 = vcmp.ne.s32.totalorder %v718, 0
        %vm853 = vcmp.ne.s32.totalorder %v725, 0
        %vm854 = vcmp.ne.s32.totalorder %v732, 0
        %vm855 = vcmp.ne.s32.totalorder %v739, 0
        %vm856 = vcmp.ne.s32.totalorder %v746, 0
        %vm857 = vcmp.ne.s32.totalorder %v753, 0
        %vm858 = vcmp.ne.s32.totalorder %v760, 0
        %vm859 = vcmp.ne.s32.totalorder %v767, 0
        %vm860 = vcmp.ne.s32.totalorder %v774, 0
        %vm861 = vcmp.ne.s32.totalorder %v781, 0
        %vm862 = vcmp.ne.s32.totalorder %v788, 0
        %vm863 = vcmp.ne.s32.totalorder %v795, 0
        %vm864 = vcmp.ne.s32.totalorder %v802, 0
        %vm865 = vcmp.ne.s32.totalorder %v809, 0
        %vm866 = vcmp.ne.s32.totalorder %v816, 0
        %vm867 = vcmp.ne.s32.totalorder %v823, 0
        %vm868 = vcmp.ne.s32.totalorder %v830, 0
        %vm869 = vcmp.ne.s32.totalorder %v837, 0
        %vm870 = vcmp.lt.s32.totalorder %v620, 0
        %vm871 = vcmp.lt.s32.totalorder %v627, 0
        %vm872 = vcmp.lt.s32.totalorder %v634, 0
        %vm873 = vcmp.lt.s32.totalorder %v641, 0
        %vm874 = vcmp.lt.s32.totalorder %v648, 0
        %vm875 = vcmp.lt.s32.totalorder %v655, 0
        %vm876 = vcmp.lt.s32.totalorder %v662, 0
        %vm877 = vcmp.lt.s32.totalorder %v669, 0
        %vm878 = vcmp.lt.s32.totalorder %v676, 0
        %vm879 = vcmp.lt.s32.totalorder %v683, 0
        %vm880 = vcmp.lt.s32.totalorder %v690, 0
        %vm881 = vcmp.lt.s32.totalorder %v697, 0
        %vm882 = vcmp.lt.s32.totalorder %v704, 0
        %vm883 = vcmp.lt.s32.totalorder %v711, 0
        %vm884 = vcmp.lt.s32.totalorder %v718, 0
        %vm885 = vcmp.lt.s32.totalorder %v725, 0
        %vm886 = vcmp.lt.s32.totalorder %v732, 0
        %vm887 = vcmp.lt.s32.totalorder %v739, 0
        %vm888 = vcmp.lt.s32.totalorder %v746, 0
        %vm889 = vcmp.lt.s32.totalorder %v753, 0
        %vm890 = vcmp.lt.s32.totalorder %v760, 0
        %vm891 = vcmp.lt.s32.totalorder %v767, 0
        %vm892 = vcmp.lt.s32.totalorder %v774, 0
        %vm893 = vcmp.lt.s32.totalorder %v781, 0
        %vm894 = vcmp.lt.s32.totalorder %v788, 0
        %vm895 = vcmp.lt.s32.totalorder %v795, 0
        %vm896 = vcmp.lt.s32.totalorder %v802, 0
        %vm897 = vcmp.lt.s32.totalorder %v809, 0
        %vm898 = vcmp.lt.s32.totalorder %v816, 0
        %vm899 = vcmp.lt.s32.totalorder %v823, 0
        %vm900 = vcmp.lt.s32.totalorder %v830, 0
        %vm901 = vcmp.lt.s32.totalorder %v837, 0
        %vm902 = vmand %vm870, %vm838
        %vm903 = vmand %vm871, %vm839
        %vm904 = vmand %vm872, %vm840
        %vm905 = vmand %vm873, %vm841
        %vm906 = vmand %vm874, %vm842
        %vm907 = vmand %vm875, %vm843
        %vm908 = vmand %vm876, %vm844
        %vm909 = vmand %vm877, %vm845
        %vm910 = vmand %vm878, %vm846
        %vm911 = vmand %vm879, %vm847
        %vm912 = vmand %vm880, %vm848
        %vm913 = vmand %vm881, %vm849
        %vm914 = vmand %vm882, %vm850
        %vm915 = vmand %vm883, %vm851
        %vm916 = vmand %vm884, %vm852
        %vm917 = vmand %vm885, %vm853
        %vm918 = vmand %vm886, %vm854
        %vm919 = vmand %vm887, %vm855
        %vm920 = vmand %vm888, %vm856
        %vm921 = vmand %vm889, %vm857
        %vm922 = vmand %vm890, %vm858
        %vm923 = vmand %vm891, %vm859
        %vm924 = vmand %vm892, %vm860
        %vm925 = vmand %vm893, %vm861
        %vm926 = vmand %vm894, %vm862
        %vm927 = vmand %vm895, %vm863
        %vm928 = vmand %vm896, %vm864
        %vm929 = vmand %vm897, %vm865
        %vm930 = vmand %vm898, %vm866
        %vm931 = vmand %vm899, %vm867
        %vm932 = vmand %vm900, %vm868
        %vm933 = vmand %vm901, %vm869
        %v934 = vadd.s32 %v620, 16
        %v935 = vadd.s32 %v627, 16
        %v936 = vadd.s32 %v634, 16
        %v937 = vadd.s32 %v641, 16
        %v938 = vadd.s32 %v648, 16
        %v939 = vadd.s32 %v655, 16
        %v940 = vadd.s32 %v662, 16
        %v941 = vadd.s32 %v669, 16
        %v942 = vadd.s32 %v676, 16
        %v943 = vadd.s32 %v683, 16
        %v944 = vadd.s32 %v690, 16
        %v945 = vadd.s32 %v697, 16
        %v946 = vadd.s32 %v704, 16
        %v947 = vadd.s32 %v711, 16
        %v948 = vadd.s32 %v718, 16
        %v949 = vadd.s32 %v725, 16
        %v950 = vadd.s32 %v732, 16
        %v951 = vadd.s32 %v739, 16
        %v952 = vadd.s32 %v746, 16
        %v953 = vadd.s32 %v753, 16
        %v954 = vadd.s32 %v760, 16
        %v955 = vadd.s32 %v767, 16
        %v956 = vadd.s32 %v774, 16
        %v957 = vadd.s32 %v781, 16
        %v958 = vadd.s32 %v788, 16
        %v959 = vadd.s32 %v795, 16
        %v960 = vadd.s32 %v802, 16
        %v961 = vadd.s32 %v809, 16
        %v962 = vadd.s32 %v816, 16
        %v963 = vadd.s32 %v823, 16
        %v964 = vadd.s32 %v830, 16
        %v965 = vadd.s32 %v837, 16
        %v966 = vsel %vm902, %v934, %v620
        %v967 = vsel %vm903, %v935, %v627
        %v968 = vsel %vm904, %v936, %v634
        %v969 = vsel %vm905, %v937, %v641
        %v970 = vsel %vm906, %v938, %v648
        %v971 = vsel %vm907, %v939, %v655
        %v972 = vsel %vm908, %v940, %v662
        %v973 = vsel %vm909, %v941, %v669
        %v974 = vsel %vm910, %v942, %v676
        %v975 = vsel %vm911, %v943, %v683
        %v976 = vsel %vm912, %v944, %v690
        %v977 = vsel %vm913, %v945, %v697
        %v978 = vsel %vm914, %v946, %v704
        %v979 = vsel %vm915, %v947, %v711
        %v980 = vsel %vm916, %v948, %v718
        %v981 = vsel %vm917, %v949, %v725
        %v982 = vsel %vm918, %v950, %v732
        %v983 = vsel %vm919, %v951, %v739
        %v984 = vsel %vm920, %v952, %v746
        %v985 = vsel %vm921, %v953, %v753
        %v986 = vsel %vm922, %v954, %v760
        %v987 = vsel %vm923, %v955, %v767
        %v988 = vsel %vm924, %v956, %v774
        %v989 = vsel %vm925, %v957, %v781
        %v990 = vsel %vm926, %v958, %v788
        %v991 = vsel %vm927, %v959, %v795
        %v992 = vsel %vm928, %v960, %v802
        %v993 = vsel %vm929, %v961, %v809
        %v994 = vsel %vm930, %v962, %v816
        %v995 = vsel %vm931, %v963, %v823
        %v996 = vsel %vm932, %v964, %v830
        %v997 = vsel %vm933, %v965, %v837
        %v998 = vld [vmem:[#allocation2 + $0x7] sm:$0xff]
        %v999 = vld [vmem:[#allocation2 + $0xf] sm:$0xff]
        %v1000 = vld [vmem:[#allocation2 + $0x17] sm:$0xff]
        %v1001 = vld [vmem:[#allocation2 + $0x1f] sm:$0xff]
        %v1002 = vld [vmem:[#allocation2 + $0x27] sm:$0xff]
        %v1003 = vld [vmem:[#allocation2 + $0x2f] sm:$0xff]
        %v1004 = vld [vmem:[#allocation2 + $0x37] sm:$0xff]
        %v1005 = vld [vmem:[#allocation2 + $0x3f] sm:$0xff]
        %v1006 = vld [vmem:[#allocation2 + $0x47] sm:$0xff]
        %v1007 = vld [vmem:[#allocation2 + $0x4f] sm:$0xff]
        %v1008 = vld [vmem:[#allocation2 + $0x57] sm:$0xff]
        %v1009 = vld [vmem:[#allocation2 + $0x5f] sm:$0xff]
        %v1010 = vld [vmem:[#allocation2 + $0x67] sm:$0xff]
        %v1011 = vld [vmem:[#allocation2 + $0x6f] sm:$0xff]
        %v1012 = vld [vmem:[#allocation2 + $0x77] sm:$0xff]
        %v1013 = vld [vmem:[#allocation2 + $0x7f] sm:$0xff]
        %v1014 = vld [vmem:[#allocation2 + $0x87] sm:$0xff]
        %v1015 = vld [vmem:[#allocation2 + $0x8f] sm:$0xff]
        %v1016 = vld [vmem:[#allocation2 + $0x97] sm:$0xff]
        %v1017 = vld [vmem:[#allocation2 + $0x9f] sm:$0xff]
        %v1018 = vld [vmem:[#allocation2 + $0xa7] sm:$0xff]
        %v1019 = vld [vmem:[#allocation2 + $0xaf] sm:$0xff]
        %v1020 = vld [vmem:[#allocation2 + $0xb7] sm:$0xff]
        %v1021 = vld [vmem:[#allocation2 + $0xbf] sm:$0xff]
        %v1022 = vld [vmem:[#allocation2 + $0xc7] sm:$0xff]
        %v1023 = vld [vmem:[#allocation2 + $0xcf] sm:$0xff]
        %v1024 = vld [vmem:[#allocation2 + $0xd7] sm:$0xff]
        %v1025 = vld [vmem:[#allocation2 + $0xdf] sm:$0xff]
        %v1026 = vld [vmem:[#allocation2 + $0xe7] sm:$0xff]
        %v1027 = vld [vmem:[#allocation2 + $0xef] sm:$0xff]
        %v1028 = vld [vmem:[#allocation2 + $0xf7] sm:$0xff]
        %v1029 = vld [vmem:[#allocation2 + $0xff] sm:$0xff]
        %v1030 = vld [vmem:[#allocation2 + $0x107] sm:$0xff]
        %v1031 = vld [vmem:[#allocation2 + $0x10f] sm:$0xff]
        %v1032 = vld [vmem:[#allocation2 + $0x117] sm:$0xff]
        %v1033 = vld [vmem:[#allocation2 + $0x11f] sm:$0xff]
        %1066 = vrot.lane.b32.xlu0 %v1000, 32
        %v1067 = vpop.permute.xlu0 %1066
        %1068 = vrot.lane.b32.xlu0 %v1001, 32
        %v1069 = vpop.permute.xlu0 %1068
        %1070 = vrot.lane.b32.xlu0 %v1002, 32
        %v1071 = vpop.permute.xlu0 %1070
        %1072 = vrot.lane.b32.xlu0 %v1003, 32
        %v1073 = vpop.permute.xlu0 %1072
        %1074 = vrot.lane.b32.xlu0 %v1004, 32
        %v1075 = vpop.permute.xlu0 %1074
        %1076 = vrot.lane.b32.xlu0 %v1005, 32
        %v1077 = vpop.permute.xlu0 %1076
        %1078 = vrot.lane.b32.xlu0 %v1006, 32
        %v1079 = vpop.permute.xlu0 %1078
        %1080 = vrot.lane.b32.xlu0 %v1007, 32
        %v1081 = vpop.permute.xlu0 %1080
        %1082 = vrot.lane.b32.xlu0 %v1008, 32
        %v1083 = vpop.permute.xlu0 %1082
        %1084 = vrot.lane.b32.xlu0 %v1009, 32
        %v1085 = vpop.permute.xlu0 %1084
        %1086 = vrot.lane.b32.xlu0 %v1010, 32
        %v1087 = vpop.permute.xlu0 %1086
        %1088 = vrot.lane.b32.xlu0 %v1011, 32
        %v1089 = vpop.permute.xlu0 %1088
        %1090 = vrot.lane.b32.xlu0 %v1012, 32
        %v1091 = vpop.permute.xlu0 %1090
        %1092 = vrot.lane.b32.xlu0 %v1013, 32
        %v1093 = vpop.permute.xlu0 %1092
        %1094 = vrot.lane.b32.xlu0 %v1014, 32
        %v1095 = vpop.permute.xlu0 %1094
        %1096 = vrot.lane.b32.xlu0 %v1015, 32
        %v1097 = vpop.permute.xlu0 %1096
        %1098 = vrot.lane.b32.xlu0 %v1016, 32
        %v1099 = vpop.permute.xlu0 %1098
        %1100 = vrot.lane.b32.xlu0 %v1017, 32
        %v1101 = vpop.permute.xlu0 %1100
        %1102 = vrot.lane.b32.xlu0 %v1018, 32
        %v1103 = vpop.permute.xlu0 %1102
        %1104 = vrot.lane.b32.xlu0 %v1019, 32
        %v1105 = vpop.permute.xlu0 %1104
        %1106 = vrot.lane.b32.xlu0 %v1020, 32
        %v1107 = vpop.permute.xlu0 %1106
        %1108 = vrot.lane.b32.xlu0 %v1021, 32
        %v1109 = vpop.permute.xlu0 %1108
        %1110 = vrot.lane.b32.xlu0 %v1022, 32
        %v1111 = vpop.permute.xlu0 %1110
        %1112 = vrot.lane.b32.xlu0 %v1023, 32
        %v1113 = vpop.permute.xlu0 %1112
        %1114 = vrot.lane.b32.xlu0 %v1024, 32
        %v1115 = vpop.permute.xlu0 %1114
        %1116 = vrot.lane.b32.xlu0 %v1025, 32
        %v1117 = vpop.permute.xlu0 %1116
        %1118 = vrot.lane.b32.xlu0 %v1026, 32
        %v1119 = vpop.permute.xlu0 %1118
        %1120 = vrot.lane.b32.xlu0 %v1027, 32
        %v1121 = vpop.permute.xlu0 %1120
        %1122 = vrot.lane.b32.xlu0 %v1028, 32
        %v1123 = vpop.permute.xlu0 %1122
        %1124 = vrot.lane.b32.xlu0 %v1029, 32
        %v1125 = vpop.permute.xlu0 %1124
        %1126 = vrot.lane.b32.xlu0 %v1030, 32
        %v1127 = vpop.permute.xlu0 %1126
        %1128 = vrot.lane.b32.xlu0 %v1031, 32
        %v1129 = vpop.permute.xlu0 %1128
        %1164 = vrot.lane.b32.xlu0 %v1002, 64
        %v1165 = vpop.permute.xlu0 %1164
        %1166 = vrot.lane.b32.xlu0 %v1003, 64
        %v1167 = vpop.permute.xlu0 %1166
        %1168 = vrot.lane.b32.xlu0 %v1004, 64
        %v1169 = vpop.permute.xlu0 %1168
        %1170 = vrot.lane.b32.xlu0 %v1005, 64
        %v1171 = vpop.permute.xlu0 %1170
        %1172 = vrot.lane.b32.xlu0 %v1006, 64
        %v1173 = vpop.permute.xlu0 %1172
        %1174 = vrot.lane.b32.xlu0 %v1007, 64
        %v1175 = vpop.permute.xlu0 %1174
        %1176 = vrot.lane.b32.xlu0 %v1008, 64
        %v1177 = vpop.permute.xlu0 %1176
        %1178 = vrot.lane.b32.xlu0 %v1009, 64
        %v1179 = vpop.permute.xlu0 %1178
        %1180 = vrot.lane.b32.xlu0 %v1010, 64
        %v1181 = vpop.permute.xlu0 %1180
        %1182 = vrot.lane.b32.xlu0 %v1011, 64
        %v1183 = vpop.permute.xlu0 %1182
        %1184 = vrot.lane.b32.xlu0 %v1012, 64
        %v1185 = vpop.permute.xlu0 %1184
        %1186 = vrot.lane.b32.xlu0 %v1013, 64
        %v1187 = vpop.permute.xlu0 %1186
        %1188 = vrot.lane.b32.xlu0 %v1014, 64
        %v1189 = vpop.permute.xlu0 %1188
        %1190 = vrot.lane.b32.xlu0 %v1015, 64
        %v1191 = vpop.permute.xlu0 %1190
        %1192 = vrot.lane.b32.xlu0 %v1016, 64
        %v1193 = vpop.permute.xlu0 %1192
        %1194 = vrot.lane.b32.xlu0 %v1017, 64
        %v1195 = vpop.permute.xlu0 %1194
        %1196 = vrot.lane.b32.xlu0 %v1018, 64
        %v1197 = vpop.permute.xlu0 %1196
        %1198 = vrot.lane.b32.xlu0 %v1019, 64
        %v1199 = vpop.permute.xlu0 %1198
        %1200 = vrot.lane.b32.xlu0 %v1020, 64
        %v1201 = vpop.permute.xlu0 %1200
        %1202 = vrot.lane.b32.xlu0 %v1021, 64
        %v1203 = vpop.permute.xlu0 %1202
        %1204 = vrot.lane.b32.xlu0 %v1022, 64
        %v1205 = vpop.permute.xlu0 %1204
        %1206 = vrot.lane.b32.xlu0 %v1023, 64
        %v1207 = vpop.permute.xlu0 %1206
        %1208 = vrot.lane.b32.xlu0 %v1024, 64
        %v1209 = vpop.permute.xlu0 %1208
        %1210 = vrot.lane.b32.xlu0 %v1025, 64
        %v1211 = vpop.permute.xlu0 %1210
        %1212 = vrot.lane.b32.xlu0 %v1026, 64
        %v1213 = vpop.permute.xlu0 %1212
        %1214 = vrot.lane.b32.xlu0 %v1027, 64
        %v1215 = vpop.permute.xlu0 %1214
        %1216 = vrot.lane.b32.xlu0 %v1028, 64
        %v1217 = vpop.permute.xlu0 %1216
        %1218 = vrot.lane.b32.xlu0 %v1029, 64
        %v1219 = vpop.permute.xlu0 %1218
        %1220 = vrot.lane.b32.xlu0 %v1030, 64
        %v1221 = vpop.permute.xlu0 %1220
        %1222 = vrot.lane.b32.xlu0 %v1031, 64
        %v1223 = vpop.permute.xlu0 %1222
        %1224 = vrot.lane.b32.xlu0 %v1032, 64
        %v1225 = vpop.permute.xlu0 %1224
        %1226 = vrot.lane.b32.xlu0 %v1033, 64
        %v1227 = vpop.permute.xlu0 %1226
        %v1260 = vsel %vm510, %v998, %v1067
        %v1261 = vsel %vm510, %v999, %v1069
        %v1262 = vsel %vm510, %v1000, %v1071
        %v1263 = vsel %vm510, %v1001, %v1073
        %v1264 = vsel %vm510, %v1002, %v1075
        %v1265 = vsel %vm510, %v1003, %v1077
        %v1266 = vsel %vm510, %v1004, %v1079
        %v1267 = vsel %vm510, %v1005, %v1081
        %v1268 = vsel %vm510, %v1006, %v1083
        %v1269 = vsel %vm510, %v1007, %v1085
        %v1270 = vsel %vm510, %v1008, %v1087
        %v1271 = vsel %vm510, %v1009, %v1089
        %v1272 = vsel %vm510, %v1010, %v1091
        %v1273 = vsel %vm510, %v1011, %v1093
        %v1274 = vsel %vm510, %v1012, %v1095
        %v1275 = vsel %vm510, %v1013, %v1097
        %v1276 = vsel %vm510, %v1014, %v1099
        %v1277 = vsel %vm510, %v1015, %v1101
        %v1278 = vsel %vm510, %v1016, %v1103
        %v1279 = vsel %vm510, %v1017, %v1105
        %v1280 = vsel %vm510, %v1018, %v1107
        %v1281 = vsel %vm510, %v1019, %v1109
        %v1282 = vsel %vm510, %v1020, %v1111
        %v1283 = vsel %vm510, %v1021, %v1113
        %v1284 = vsel %vm510, %v1022, %v1115
        %v1285 = vsel %vm510, %v1023, %v1117
        %v1286 = vsel %vm510, %v1024, %v1119
        %v1287 = vsel %vm510, %v1025, %v1121
        %v1288 = vsel %vm510, %v1026, %v1123
        %v1289 = vsel %vm510, %v1027, %v1125
        %v1290 = vsel %vm510, %v1028, %v1127
        %v1291 = vsel %vm510, %v1029, %v1129
        %v1292 = vsel %vm308, %v1260, %v1165
        %v1293 = vsel %vm308, %v1261, %v1167
        %v1294 = vsel %vm308, %v1262, %v1169
        %v1295 = vsel %vm308, %v1263, %v1171
        %v1296 = vsel %vm308, %v1264, %v1173
        %v1297 = vsel %vm308, %v1265, %v1175
        %v1298 = vsel %vm308, %v1266, %v1177
        %v1299 = vsel %vm308, %v1267, %v1179
        %v1300 = vsel %vm308, %v1268, %v1181
        %v1301 = vsel %vm308, %v1269, %v1183
        %v1302 = vsel %vm308, %v1270, %v1185
        %v1303 = vsel %vm308, %v1271, %v1187
        %v1304 = vsel %vm308, %v1272, %v1189
        %v1305 = vsel %vm308, %v1273, %v1191
        %v1306 = vsel %vm308, %v1274, %v1193
        %v1307 = vsel %vm308, %v1275, %v1195
        %v1308 = vsel %vm308, %v1276, %v1197
        %v1309 = vsel %vm308, %v1277, %v1199
        %v1310 = vsel %vm308, %v1278, %v1201
        %v1311 = vsel %vm308, %v1279, %v1203
        %v1312 = vsel %vm308, %v1280, %v1205
        %v1313 = vsel %vm308, %v1281, %v1207
        %v1314 = vsel %vm308, %v1282, %v1209
        %v1315 = vsel %vm308, %v1283, %v1211
        %v1316 = vsel %vm308, %v1284, %v1213
        %v1317 = vsel %vm308, %v1285, %v1215
        %v1318 = vsel %vm308, %v1286, %v1217
        %v1319 = vsel %vm308, %v1287, %v1219
        %v1320 = vsel %vm308, %v1288, %v1221
        %v1321 = vsel %vm308, %v1289, %v1223
        %v1322 = vsel %vm308, %v1290, %v1225
        %v1323 = vsel %vm308, %v1291, %v1227
        %v1324 = vpack.c.bf16 %v1292, %v1292
        %v1325 = vpack.c.bf16 %v1293, %v1293
        %v1326 = vpack.c.bf16 %v1294, %v1294
        %v1327 = vpack.c.bf16 %v1295, %v1295
        %v1328 = vpack.c.bf16 %v1296, %v1296
        %v1329 = vpack.c.bf16 %v1297, %v1297
        %v1330 = vpack.c.bf16 %v1298, %v1298
        %v1331 = vpack.c.bf16 %v1299, %v1299
        %v1332 = vpack.c.bf16 %v1300, %v1300
        %v1333 = vpack.c.bf16 %v1301, %v1301
        %v1334 = vpack.c.bf16 %v1302, %v1302
        %v1335 = vpack.c.bf16 %v1303, %v1303
        %v1336 = vpack.c.bf16 %v1304, %v1304
        %v1337 = vpack.c.bf16 %v1305, %v1305
        %v1338 = vpack.c.bf16 %v1306, %v1306
        %v1339 = vpack.c.bf16 %v1307, %v1307
        %v1340 = vpack.c.bf16 %v1308, %v1308
        %v1341 = vpack.c.bf16 %v1309, %v1309
        %v1342 = vpack.c.bf16 %v1310, %v1310
        %v1343 = vpack.c.bf16 %v1311, %v1311
        %v1344 = vpack.c.bf16 %v1312, %v1312
        %v1345 = vpack.c.bf16 %v1313, %v1313
        %v1346 = vpack.c.bf16 %v1314, %v1314
        %v1347 = vpack.c.bf16 %v1315, %v1315
        %v1348 = vpack.c.bf16 %v1316, %v1316
        %v1349 = vpack.c.bf16 %v1317, %v1317
        %v1350 = vpack.c.bf16 %v1318, %v1318
        %v1351 = vpack.c.bf16 %v1319, %v1319
        %v1352 = vpack.c.bf16 %v1320, %v1320
        %v1353 = vpack.c.bf16 %v1321, %v1321
        %v1354 = vpack.c.bf16 %v1322, %v1322
        %v1355 = vpack.c.bf16 %v1323, %v1323
        %vm1356 = vcmp.ge.s32.totalorder %v966, 1
        %vm1357 = vcmp.ge.s32.totalorder %v967, 1
        %vm1358 = vcmp.ge.s32.totalorder %v968, 1
        %vm1359 = vcmp.ge.s32.totalorder %v969, 1
        %vm1360 = vcmp.ge.s32.totalorder %v970, 1
        %vm1361 = vcmp.ge.s32.totalorder %v971, 1
        %vm1362 = vcmp.ge.s32.totalorder %v972, 1
        %vm1363 = vcmp.ge.s32.totalorder %v973, 1
        %vm1364 = vcmp.ge.s32.totalorder %v974, 1
        %vm1365 = vcmp.ge.s32.totalorder %v975, 1
        %vm1366 = vcmp.ge.s32.totalorder %v976, 1
        %vm1367 = vcmp.ge.s32.totalorder %v977, 1
        %vm1368 = vcmp.ge.s32.totalorder %v978, 1
        %vm1369 = vcmp.ge.s32.totalorder %v979, 1
        %vm1370 = vcmp.ge.s32.totalorder %v980, 1
        %vm1371 = vcmp.ge.s32.totalorder %v981, 1
        %vm1372 = vcmp.ge.s32.totalorder %v982, 1
        %vm1373 = vcmp.ge.s32.totalorder %v983, 1
        %vm1374 = vcmp.ge.s32.totalorder %v984, 1
        %vm1375 = vcmp.ge.s32.totalorder %v985, 1
        %vm1376 = vcmp.ge.s32.totalorder %v986, 1
        %vm1377 = vcmp.ge.s32.totalorder %v987, 1
        %vm1378 = vcmp.ge.s32.totalorder %v988, 1
        %vm1379 = vcmp.ge.s32.totalorder %v989, 1
        %vm1380 = vcmp.ge.s32.totalorder %v990, 1
        %vm1381 = vcmp.ge.s32.totalorder %v991, 1
        %vm1382 = vcmp.ge.s32.totalorder %v992, 1
        %vm1383 = vcmp.ge.s32.totalorder %v993, 1
        %vm1384 = vcmp.ge.s32.totalorder %v994, 1
        %vm1385 = vcmp.ge.s32.totalorder %v995, 1
        %vm1386 = vcmp.ge.s32.totalorder %v996, 1
        %vm1387 = vcmp.ge.s32.totalorder %v997, 1
        %vm1388 = vmpackc.low %vm1356, %vm1356
        %vm1389 = vmpackc.low %vm1357, %vm1357
        %vm1390 = vmpackc.low %vm1358, %vm1358
        %vm1391 = vmpackc.low %vm1359, %vm1359
        %vm1392 = vmpackc.low %vm1360, %vm1360
        %vm1393 = vmpackc.low %vm1361, %vm1361
        %vm1394 = vmpackc.low %vm1362, %vm1362
        %vm1395 = vmpackc.low %vm1363, %vm1363
        %vm1396 = vmpackc.low %vm1364, %vm1364
        %vm1397 = vmpackc.low %vm1365, %vm1365
        %vm1398 = vmpackc.low %vm1366, %vm1366
        %vm1399 = vmpackc.low %vm1367, %vm1367
        %vm1400 = vmpackc.low %vm1368, %vm1368
        %vm1401 = vmpackc.low %vm1369, %vm1369
        %vm1402 = vmpackc.low %vm1370, %vm1370
        %vm1403 = vmpackc.low %vm1371, %vm1371
        %vm1404 = vmpackc.low %vm1372, %vm1372
        %vm1405 = vmpackc.low %vm1373, %vm1373
        %vm1406 = vmpackc.low %vm1374, %vm1374
        %vm1407 = vmpackc.low %vm1375, %vm1375
        %vm1408 = vmpackc.low %vm1376, %vm1376
        %vm1409 = vmpackc.low %vm1377, %vm1377
        %vm1410 = vmpackc.low %vm1378, %vm1378
        %vm1411 = vmpackc.low %vm1379, %vm1379
        %vm1412 = vmpackc.low %vm1380, %vm1380
        %vm1413 = vmpackc.low %vm1381, %vm1381
        %vm1414 = vmpackc.low %vm1382, %vm1382
        %vm1415 = vmpackc.low %vm1383, %vm1383
        %vm1416 = vmpackc.low %vm1384, %vm1384
        %vm1417 = vmpackc.low %vm1385, %vm1385
        %vm1418 = vmpackc.low %vm1386, %vm1386
        %vm1419 = vmpackc.low %vm1387, %vm1387
        %v1420 = vsel %vm1388, %v1324, 0
        %v1421 = vsel %vm1389, %v1325, 0
        %v1422 = vsel %vm1390, %v1326, 0
        %v1423 = vsel %vm1391, %v1327, 0
        %v1424 = vsel %vm1392, %v1328, 0
        %v1425 = vsel %vm1393, %v1329, 0
        %v1426 = vsel %vm1394, %v1330, 0
        %v1427 = vsel %vm1395, %v1331, 0
        %v1428 = vsel %vm1396, %v1332, 0
        %v1429 = vsel %vm1397, %v1333, 0
        %v1430 = vsel %vm1398, %v1334, 0
        %v1431 = vsel %vm1399, %v1335, 0
        %v1432 = vsel %vm1400, %v1336, 0
        %v1433 = vsel %vm1401, %v1337, 0
        %v1434 = vsel %vm1402, %v1338, 0
        %v1435 = vsel %vm1403, %v1339, 0
        %v1436 = vsel %vm1404, %v1340, 0
        %v1437 = vsel %vm1405, %v1341, 0
        %v1438 = vsel %vm1406, %v1342, 0
        %v1439 = vsel %vm1407, %v1343, 0
        %v1440 = vsel %vm1408, %v1344, 0
        %v1441 = vsel %vm1409, %v1345, 0
        %v1442 = vsel %vm1410, %v1346, 0
        %v1443 = vsel %vm1411, %v1347, 0
        %v1444 = vsel %vm1412, %v1348, 0
        %v1445 = vsel %vm1413, %v1349, 0
        %v1446 = vsel %vm1414, %v1350, 0
        %v1447 = vsel %vm1415, %v1351, 0
        %v1448 = vsel %vm1416, %v1352, 0
        %v1449 = vsel %vm1417, %v1353, 0
        %v1450 = vsel %vm1418, %v1354, 0
        %v1451 = vsel %vm1419, %v1355, 0
        %v1452 = vld [vmem:[%s3] sm:$0xf]
        %v1453 = vld [vmem:[%s3 + $0x4] sm:$0xf]
        %v1454 = vld [vmem:[%s3 + $0x8] sm:$0xf]
        %v1455 = vld [vmem:[%s3 + $0xc] sm:$0xf]
        %v1456 = vld [vmem:[%s3 + $0x10] sm:$0xf]
        %v1457 = vld [vmem:[%s3 + $0x14] sm:$0xf]
        %v1458 = vld [vmem:[%s3 + $0x18] sm:$0xf]
        %v1459 = vld [vmem:[%s3 + $0x1c] sm:$0xf]
        %v1460 = vld [vmem:[%s3 + $0x20] sm:$0xf]
        %v1461 = vld [vmem:[%s3 + $0x24] sm:$0xf]
        %v1462 = vld [vmem:[%s3 + $0x28] sm:$0xf]
        %v1463 = vld [vmem:[%s3 + $0x2c] sm:$0xf]
        %v1464 = vld [vmem:[#allocation2 + $0x8] sm:$0xff]
        %v1465 = vld [vmem:[#allocation2 + $0x10] sm:$0xff]
        %v1466 = vld [vmem:[#allocation2 + $0x18] sm:$0xff]
        %v1467 = vld [vmem:[#allocation2 + $0x20] sm:$0xff]
        %v1468 = vld [vmem:[#allocation2 + $0x28] sm:$0xff]
        %v1469 = vld [vmem:[#allocation2 + $0x30] sm:$0xff]
        %v1470 = vld [vmem:[#allocation2 + $0x38] sm:$0xff]
        %v1471 = vld [vmem:[#allocation2 + $0x40] sm:$0xff]
        %v1472 = vld [vmem:[#allocation2 + $0x48] sm:$0xff]
        %v1473 = vld [vmem:[#allocation2 + $0x50] sm:$0xff]
        %v1474 = vld [vmem:[#allocation2 + $0x58] sm:$0xff]
        %v1475 = vld [vmem:[#allocation2 + $0x60] sm:$0xff]
        %v1476 = vld [vmem:[#allocation2 + $0x68] sm:$0xff]
        %v1477 = vld [vmem:[#allocation2 + $0x70] sm:$0xff]
        %v1478 = vld [vmem:[#allocation2 + $0x78] sm:$0xff]
        %v1479 = vld [vmem:[#allocation2 + $0x80] sm:$0xff]
        %v1480 = vld [vmem:[#allocation2 + $0x88] sm:$0xff]
        %v1481 = vld [vmem:[#allocation2 + $0x90] sm:$0xff]
        %v1482 = vld [vmem:[#allocation2 + $0x98] sm:$0xff]
        %v1483 = vld [vmem:[#allocation2 + $0xa0] sm:$0xff]
        %v1484 = vld [vmem:[#allocation2 + $0xa8] sm:$0xff]
        %v1485 = vld [vmem:[#allocation2 + $0xb0] sm:$0xff]
        %v1486 = vld [vmem:[#allocation2 + $0xb8] sm:$0xff]
        %v1487 = vld [vmem:[#allocation2 + $0xc0] sm:$0xff]
        %v1488 = vld [vmem:[#allocation2 + $0xc8] sm:$0xff]
        %v1489 = vld [vmem:[#allocation2 + $0xd0] sm:$0xff]
        %v1490 = vld [vmem:[#allocation2 + $0xd8] sm:$0xff]
        %v1491 = vld [vmem:[#allocation2 + $0xe0] sm:$0xff]
        %v1492 = vld [vmem:[#allocation2 + $0xe8] sm:$0xff]
        %v1493 = vld [vmem:[#allocation2 + $0xf0] sm:$0xff]
        %v1494 = vld [vmem:[#allocation2 + $0xf8] sm:$0xff]
        %v1495 = vld [vmem:[#allocation2 + $0x100] sm:$0xff]
        %v1496 = vld [vmem:[#allocation2 + $0x108] sm:$0xff]
        %v1497 = vld [vmem:[#allocation2 + $0x110] sm:$0xff]
        %v1498 = vld [vmem:[#allocation2 + $0x118] sm:$0xff]
        %v1499 = vld [vmem:[#allocation2 + $0x120] sm:$0xff]
        %1532 = vrot.lane.b32.xlu0 %v1466, 32
        %v1533 = vpop.permute.xlu0 %1532
        %1534 = vrot.lane.b32.xlu0 %v1467, 32
        %v1535 = vpop.permute.xlu0 %1534
        %1536 = vrot.lane.b32.xlu0 %v1468, 32
        %v1537 = vpop.permute.xlu0 %1536
        %1538 = vrot.lane.b32.xlu0 %v1469, 32
        %v1539 = vpop.permute.xlu0 %1538
        %1540 = vrot.lane.b32.xlu0 %v1470, 32
        %v1541 = vpop.permute.xlu0 %1540
        %1542 = vrot.lane.b32.xlu0 %v1471, 32
        %v1543 = vpop.permute.xlu0 %1542
        %1544 = vrot.lane.b32.xlu0 %v1472, 32
        %v1545 = vpop.permute.xlu0 %1544
        %1546 = vrot.lane.b32.xlu0 %v1473, 32
        %v1547 = vpop.permute.xlu0 %1546
        %1548 = vrot.lane.b32.xlu0 %v1474, 32
        %v1549 = vpop.permute.xlu0 %1548
        %1550 = vrot.lane.b32.xlu0 %v1475, 32
        %v1551 = vpop.permute.xlu0 %1550
        %1552 = vrot.lane.b32.xlu0 %v1476, 32
        %v1553 = vpop.permute.xlu0 %1552
        %1554 = vrot.lane.b32.xlu0 %v1477, 32
        %v1555 = vpop.permute.xlu0 %1554
        %1556 = vrot.lane.b32.xlu0 %v1478, 32
        %v1557 = vpop.permute.xlu0 %1556
        %1558 = vrot.lane.b32.xlu0 %v1479, 32
        %v1559 = vpop.permute.xlu0 %1558
        %1560 = vrot.lane.b32.xlu0 %v1480, 32
        %v1561 = vpop.permute.xlu0 %1560
        %1562 = vrot.lane.b32.xlu0 %v1481, 32
        %v1563 = vpop.permute.xlu0 %1562
        %1564 = vrot.lane.b32.xlu0 %v1482, 32
        %v1565 = vpop.permute.xlu0 %1564
        %1566 = vrot.lane.b32.xlu0 %v1483, 32
        %v1567 = vpop.permute.xlu0 %1566
        %1568 = vrot.lane.b32.xlu0 %v1484, 32
        %v1569 = vpop.permute.xlu0 %1568
        %1570 = vrot.lane.b32.xlu0 %v1485, 32
        %v1571 = vpop.permute.xlu0 %1570
        %1572 = vrot.lane.b32.xlu0 %v1486, 32
        %v1573 = vpop.permute.xlu0 %1572
        %1574 = vrot.lane.b32.xlu0 %v1487, 32
        %v1575 = vpop.permute.xlu0 %1574
        %1576 = vrot.lane.b32.xlu0 %v1488, 32
        %v1577 = vpop.permute.xlu0 %1576
        %1578 = vrot.lane.b32.xlu0 %v1489, 32
        %v1579 = vpop.permute.xlu0 %1578
        %1580 = vrot.lane.b32.xlu0 %v1490, 32
        %v1581 = vpop.permute.xlu0 %1580
        %1582 = vrot.lane.b32.xlu0 %v1491, 32
        %v1583 = vpop.permute.xlu0 %1582
        %1584 = vrot.lane.b32.xlu0 %v1492, 32
        %v1585 = vpop.permute.xlu0 %1584
        %1586 = vrot.lane.b32.xlu0 %v1493, 32
        %v1587 = vpop.permute.xlu0 %1586
        %1588 = vrot.lane.b32.xlu0 %v1494, 32
        %v1589 = vpop.permute.xlu0 %1588
        %1590 = vrot.lane.b32.xlu0 %v1495, 32
        %v1591 = vpop.permute.xlu0 %1590
        %1592 = vrot.lane.b32.xlu0 %v1496, 32
        %v1593 = vpop.permute.xlu0 %1592
        %1594 = vrot.lane.b32.xlu0 %v1497, 32
        %v1595 = vpop.permute.xlu0 %1594
        %1630 = vrot.lane.b32.xlu0 %v1468, 64
        %v1631 = vpop.permute.xlu0 %1630
        %1632 = vrot.lane.b32.xlu0 %v1469, 64
        %v1633 = vpop.permute.xlu0 %1632
        %1634 = vrot.lane.b32.xlu0 %v1470, 64
        %v1635 = vpop.permute.xlu0 %1634
        %1636 = vrot.lane.b32.xlu0 %v1471, 64
        %v1637 = vpop.permute.xlu0 %1636
        %1638 = vrot.lane.b32.xlu0 %v1472, 64
        %v1639 = vpop.permute.xlu0 %1638
        %1640 = vrot.lane.b32.xlu0 %v1473, 64
        %v1641 = vpop.permute.xlu0 %1640
        %1642 = vrot.lane.b32.xlu0 %v1474, 64
        %v1643 = vpop.permute.xlu0 %1642
        %1644 = vrot.lane.b32.xlu0 %v1475, 64
        %v1645 = vpop.permute.xlu0 %1644
        %1646 = vrot.lane.b32.xlu0 %v1476, 64
        %v1647 = vpop.permute.xlu0 %1646
        %1648 = vrot.lane.b32.xlu0 %v1477, 64
        %v1649 = vpop.permute.xlu0 %1648
        %1650 = vrot.lane.b32.xlu0 %v1478, 64
        %v1651 = vpop.permute.xlu0 %1650
        %1652 = vrot.lane.b32.xlu0 %v1479, 64
        %v1653 = vpop.permute.xlu0 %1652
        %1654 = vrot.lane.b32.xlu0 %v1480, 64
        %v1655 = vpop.permute.xlu0 %1654
        %1656 = vrot.lane.b32.xlu0 %v1481, 64
        %v1657 = vpop.permute.xlu0 %1656
        %1658 = vrot.lane.b32.xlu0 %v1482, 64
        %v1659 = vpop.permute.xlu0 %1658
        %1660 = vrot.lane.b32.xlu0 %v1483, 64
        %v1661 = vpop.permute.xlu0 %1660
        %1662 = vrot.lane.b32.xlu0 %v1484, 64
        %v1663 = vpop.permute.xlu0 %1662
        %1664 = vrot.lane.b32.xlu0 %v1485, 64
        %v1665 = vpop.permute.xlu0 %1664
        %1666 = vrot.lane.b32.xlu0 %v1486, 64
        %v1667 = vpop.permute.xlu0 %1666
        %1668 = vrot.lane.b32.xlu0 %v1487, 64
        %v1669 = vpop.permute.xlu0 %1668
        %1670 = vrot.lane.b32.xlu0 %v1488, 64
        %v1671 = vpop.permute.xlu0 %1670
        %1672 = vrot.lane.b32.xlu0 %v1489, 64
        %v1673 = vpop.permute.xlu0 %1672
        %1674 = vrot.lane.b32.xlu0 %v1490, 64
        %v1675 = vpop.permute.xlu0 %1674
        %1676 = vrot.lane.b32.xlu0 %v1491, 64
        %v1677 = vpop.permute.xlu0 %1676
        %1678 = vrot.lane.b32.xlu0 %v1492, 64
        %v1679 = vpop.permute.xlu0 %1678
        %1680 = vrot.lane.b32.xlu0 %v1493, 64
        %v1681 = vpop.permute.xlu0 %1680
        %1682 = vrot.lane.b32.xlu0 %v1494, 64
        %v1683 = vpop.permute.xlu0 %1682
        %1684 = vrot.lane.b32.xlu0 %v1495, 64
        %v1685 = vpop.permute.xlu0 %1684
        %1686 = vrot.lane.b32.xlu0 %v1496, 64
        %v1687 = vpop.permute.xlu0 %1686
        %1688 = vrot.lane.b32.xlu0 %v1497, 64
        %v1689 = vpop.permute.xlu0 %1688
        %1690 = vrot.lane.b32.xlu0 %v1498, 64
        %v1691 = vpop.permute.xlu0 %1690
        %1692 = vrot.lane.b32.xlu0 %v1499, 64
        %v1693 = vpop.permute.xlu0 %1692
        %v1726 = vsel %vm510, %v1464, %v1533
        %v1727 = vsel %vm510, %v1465, %v1535
        %v1728 = vsel %vm510, %v1466, %v1537
        %v1729 = vsel %vm510, %v1467, %v1539
        %v1730 = vsel %vm510, %v1468, %v1541
        %v1731 = vsel %vm510, %v1469, %v1543
        %v1732 = vsel %vm510, %v1470, %v1545
        %v1733 = vsel %vm510, %v1471, %v1547
        %v1734 = vsel %vm510, %v1472, %v1549
        %v1735 = vsel %vm510, %v1473, %v1551
        %v1736 = vsel %vm510, %v1474, %v1553
        %v1737 = vsel %vm510, %v1475, %v1555
        %v1738 = vsel %vm510, %v1476, %v1557
        %v1739 = vsel %vm510, %v1477, %v1559
        %v1740 = vsel %vm510, %v1478, %v1561
        %v1741 = vsel %vm510, %v1479, %v1563
        %v1742 = vsel %vm510, %v1480, %v1565
        %v1743 = vsel %vm510, %v1481, %v1567
        %v1744 = vsel %vm510, %v1482, %v1569
        %v1745 = vsel %vm510, %v1483, %v1571
        %v1746 = vsel %vm510, %v1484, %v1573
        %v1747 = vsel %vm510, %v1485, %v1575
        %v1748 = vsel %vm510, %v1486, %v1577
        %v1749 = vsel %vm510, %v1487, %v1579
        %v1750 = vsel %vm510, %v1488, %v1581
        %v1751 = vsel %vm510, %v1489, %v1583
        %v1752 = vsel %vm510, %v1490, %v1585
        %v1753 = vsel %vm510, %v1491, %v1587
        %v1754 = vsel %vm510, %v1492, %v1589
        %v1755 = vsel %vm510, %v1493, %v1591
        %v1756 = vsel %vm510, %v1494, %v1593
        %v1757 = vsel %vm510, %v1495, %v1595
        %v1758 = vsel %vm308, %v1726, %v1631
        %v1759 = vsel %vm308, %v1727, %v1633
        %v1760 = vsel %vm308, %v1728, %v1635
        %v1761 = vsel %vm308, %v1729, %v1637
        %v1762 = vsel %vm308, %v1730, %v1639
        %v1763 = vsel %vm308, %v1731, %v1641
        %v1764 = vsel %vm308, %v1732, %v1643
        %v1765 = vsel %vm308, %v1733, %v1645
        %v1766 = vsel %vm308, %v1734, %v1647
        %v1767 = vsel %vm308, %v1735, %v1649
        %v1768 = vsel %vm308, %v1736, %v1651
        %v1769 = vsel %vm308, %v1737, %v1653
        %v1770 = vsel %vm308, %v1738, %v1655
        %v1771 = vsel %vm308, %v1739, %v1657
        %v1772 = vsel %vm308, %v1740, %v1659
        %v1773 = vsel %vm308, %v1741, %v1661
        %v1774 = vsel %vm308, %v1742, %v1663
        %v1775 = vsel %vm308, %v1743, %v1665
        %v1776 = vsel %vm308, %v1744, %v1667
        %v1777 = vsel %vm308, %v1745, %v1669
        %v1778 = vsel %vm308, %v1746, %v1671
        %v1779 = vsel %vm308, %v1747, %v1673
        %v1780 = vsel %vm308, %v1748, %v1675
        %v1781 = vsel %vm308, %v1749, %v1677
        %v1782 = vsel %vm308, %v1750, %v1679
        %v1783 = vsel %vm308, %v1751, %v1681
        %v1784 = vsel %vm308, %v1752, %v1683
        %v1785 = vsel %vm308, %v1753, %v1685
        %v1786 = vsel %vm308, %v1754, %v1687
        %v1787 = vsel %vm308, %v1755, %v1689
        %v1788 = vsel %vm308, %v1756, %v1691
        %v1789 = vsel %vm308, %v1757, %v1693
        %v1790 = vpack.c.bf16 %v1759, %v1758
        %v1791 = vpack.c.bf16 %v1761, %v1760
        %v1792 = vpack.c.bf16 %v1763, %v1762
        %v1793 = vpack.c.bf16 %v1765, %v1764
        %v1794 = vpack.c.bf16 %v1767, %v1766
        %v1795 = vpack.c.bf16 %v1769, %v1768
        %v1796 = vpack.c.bf16 %v1771, %v1770
        %v1797 = vpack.c.bf16 %v1773, %v1772
        %v1798 = vpack.c.bf16 %v1775, %v1774
        %v1799 = vpack.c.bf16 %v1777, %v1776
        %v1800 = vpack.c.bf16 %v1779, %v1778
        %v1801 = vpack.c.bf16 %v1781, %v1780
        %v1802 = vpack.c.bf16 %v1783, %v1782
        %v1803 = vpack.c.bf16 %v1785, %v1784
        %v1804 = vpack.c.bf16 %v1787, %v1786
        %v1805 = vpack.c.bf16 %v1789, %v1788
        %s1806 = scalar_lea.vmem %s3, 48
        %v1807 = vld [vmem:[%s1806] sm:$0xf]
        %v1808 = vld [vmem:[%s1806 + $0x4] sm:$0xf]
        %v1809 = vld [vmem:[%s1806 + $0x8] sm:$0xf]
        %v1810 = vld [vmem:[%s1806 + $0xc] sm:$0xf]
        %v1811 = vld [vmem:[%s1806 + $0x10] sm:$0xf]
        %v1812 = vld [vmem:[%s1806 + $0x14] sm:$0xf]
        %v1813 = vld [vmem:[%s1806 + $0x18] sm:$0xf]
        %v1814 = vld [vmem:[%s1806 + $0x1c] sm:$0xf]
        %v1815 = vld [vmem:[%s1806 + $0x20] sm:$0xf]
        %v1816 = vld [vmem:[%s1806 + $0x24] sm:$0xf]
        %v1817 = vld [vmem:[%s1806 + $0x28] sm:$0xf]
        %v1818 = vld [vmem:[%s1806 + $0x2c] sm:$0xf]
        %v1831 = vunpack.c.l.b16 %v1807
        %v1832 = vunpack.c.l.b16 %v1808
        %v1833 = vunpack.c.l.b16 %v1809
        %v1834 = vunpack.c.l.b16 %v1810
        %v1835 = vunpack.c.l.b16 %v1811
        %v1836 = vunpack.c.l.b16 %v1812
        %v1837 = vunpack.c.l.b16 %v1813
        %v1838 = vunpack.c.l.b16 %v1814
        %v1839 = vunpack.c.l.b16 %v1815
        %v1840 = vunpack.c.l.b16 %v1816
        %v1841 = vunpack.c.l.b16 %v1817
        %v1842 = vunpack.c.l.b16 %v1818
        %v1843 = vpack.c.b16 %v1832, %v1831
        %v1844 = vpack.c.b16 %v1834, %v1833
        %v1845 = vpack.c.b16 %v1836, %v1835
        %v1846 = vpack.c.b16 %v1838, %v1837
        %v1847 = vpack.c.b16 %v1840, %v1839
        %v1848 = vpack.c.b16 %v1842, %v1841
        %vm1855 = vcmask 785408
        %v1857 = vsel %vm1855, %v1790, 0
        %v1860 = vsel %vm1855, %v1791, 0
        %v1863 = vsel %vm1855, %v1792, 0
        %v1866 = vsel %vm1855, %v1793, 0
        %v1869 = vsel %vm1855, %v1794, 0
        %v1872 = vsel %vm1855, %v1795, 0
        %v1875 = vsel %vm1855, %v1796, 0
        %v1878 = vsel %vm1855, %v1797, 0
        %v1881 = vsel %vm1855, %v1798, 0
        %v1884 = vsel %vm1855, %v1799, 0
        %v1887 = vsel %vm1855, %v1800, 0
        %v1890 = vsel %vm1855, %v1801, 0
        %v1893 = vsel %vm1855, %v1802, 0
        %v1896 = vsel %vm1855, %v1803, 0
        %v1899 = vsel %vm1855, %v1804, 0
        %v1902 = vsel %vm1855, %v1805, 0
        %1904 = vmatpush.bf16.msra.mxu0 0
        %1905 = vmatpush.bf16.msra.mxu0 0
        %1906 = vmatpush.bf16.msra.mxu0 %v1848
        %1907 = vmatpush.bf16.msra.mxu0 %v1847
        %1908 = vmatpush.bf16.msra.mxu0 %v1846
        %1909 = vmatpush.bf16.msra.mxu0 %v1845
        %1910 = vmatpush.bf16.msra.mxu0 %v1844
        %1911 = vmatpush.bf16.msra.mxu0 %v1843
        %1912 = vmatmul.bf16.gmra.mxu0 %v1857
        %v1913 = vpop.f32.mrf.mxu0
        %v1914 = vadd.f32 0.0, %v1913
        %v1915 = vpop.f32.mrf.mxu0
        %v1916 = vadd.f32 0.0, %v1915
        %1917 = vmatmul.bf16.gmra.mxu0 %v1860
        %v1918 = vpop.f32.mrf.mxu0
        %v1919 = vadd.f32 0.0, %v1918
        %v1920 = vpop.f32.mrf.mxu0
        %v1921 = vadd.f32 0.0, %v1920
        %1922 = vmatmul.bf16.gmra.mxu0 %v1863
        %v1923 = vpop.f32.mrf.mxu0
        %v1924 = vadd.f32 0.0, %v1923
        %v1925 = vpop.f32.mrf.mxu0
        %v1926 = vadd.f32 0.0, %v1925
        %1927 = vmatmul.bf16.gmra.mxu0 %v1866
        %v1928 = vpop.f32.mrf.mxu0
        %v1929 = vadd.f32 0.0, %v1928
        %v1930 = vpop.f32.mrf.mxu0
        %v1931 = vadd.f32 0.0, %v1930
        %1932 = vmatmul.bf16.gmra.mxu0 %v1869
        %v1933 = vpop.f32.mrf.mxu0
        %v1934 = vadd.f32 0.0, %v1933
        %v1935 = vpop.f32.mrf.mxu0
        %v1936 = vadd.f32 0.0, %v1935
        %1937 = vmatmul.bf16.gmra.mxu0 %v1872
        %v1938 = vpop.f32.mrf.mxu0
        %v1939 = vadd.f32 0.0, %v1938
        %v1940 = vpop.f32.mrf.mxu0
        %v1941 = vadd.f32 0.0, %v1940
        %1942 = vmatmul.bf16.gmra.mxu0 %v1875
        %v1943 = vpop.f32.mrf.mxu0
        %v1944 = vadd.f32 0.0, %v1943
        %v1945 = vpop.f32.mrf.mxu0
        %v1946 = vadd.f32 0.0, %v1945
        %1947 = vmatmul.bf16.gmra.mxu0 %v1878
        %v1948 = vpop.f32.mrf.mxu0
        %v1949 = vadd.f32 0.0, %v1948
        %v1950 = vpop.f32.mrf.mxu0
        %v1951 = vadd.f32 0.0, %v1950
        %1952 = vmatmul.bf16.gmra.mxu0 %v1881
        %v1953 = vpop.f32.mrf.mxu0
        %v1954 = vadd.f32 0.0, %v1953
        %v1955 = vpop.f32.mrf.mxu0
        %v1956 = vadd.f32 0.0, %v1955
        %1957 = vmatmul.bf16.gmra.mxu0 %v1884
        %v1958 = vpop.f32.mrf.mxu0
        %v1959 = vadd.f32 0.0, %v1958
        %v1960 = vpop.f32.mrf.mxu0
        %v1961 = vadd.f32 0.0, %v1960
        %1962 = vmatmul.bf16.gmra.mxu0 %v1887
        %v1963 = vpop.f32.mrf.mxu0
        %v1964 = vadd.f32 0.0, %v1963
        %v1965 = vpop.f32.mrf.mxu0
        %v1966 = vadd.f32 0.0, %v1965
        %1967 = vmatmul.bf16.gmra.mxu0 %v1890
        %v1968 = vpop.f32.mrf.mxu0
        %v1969 = vadd.f32 0.0, %v1968
        %v1970 = vpop.f32.mrf.mxu0
        %v1971 = vadd.f32 0.0, %v1970
        %1972 = vmatmul.bf16.gmra.mxu0 %v1893
        %v1973 = vpop.f32.mrf.mxu0
        %v1974 = vadd.f32 0.0, %v1973
        %v1975 = vpop.f32.mrf.mxu0
        %v1976 = vadd.f32 0.0, %v1975
        %1977 = vmatmul.bf16.gmra.mxu0 %v1896
        %v1978 = vpop.f32.mrf.mxu0
        %v1979 = vadd.f32 0.0, %v1978
        %v1980 = vpop.f32.mrf.mxu0
        %v1981 = vadd.f32 0.0, %v1980
        %1982 = vmatmul.bf16.gmra.mxu0 %v1899
        %v1983 = vpop.f32.mrf.mxu0
        %v1984 = vadd.f32 0.0, %v1983
        %v1985 = vpop.f32.mrf.mxu0
        %v1986 = vadd.f32 0.0, %v1985
        %1987 = vmatmul.bf16.gmra.mxu0 %v1902
        %v1988 = vpop.f32.mrf.mxu0
        %v1989 = vadd.f32 0.0, %v1988
        %v1990 = vpop.f32.mrf.mxu0
        %v1991 = vadd.f32 0.0, %v1990
        %1992 = vdwg.mxu0
        %v2025 = vunpack.c.l.b16 %v1420
        %v2026 = vunpack.c.l.b16 %v1421
        %v2027 = vunpack.c.l.b16 %v1422
        %v2028 = vunpack.c.l.b16 %v1423
        %v2029 = vunpack.c.l.b16 %v1424
        %v2030 = vunpack.c.l.b16 %v1425
        %v2031 = vunpack.c.l.b16 %v1426
        %v2032 = vunpack.c.l.b16 %v1427
        %v2033 = vunpack.c.l.b16 %v1428
        %v2034 = vunpack.c.l.b16 %v1429
        %v2035 = vunpack.c.l.b16 %v1430
        %v2036 = vunpack.c.l.b16 %v1431
        %v2037 = vunpack.c.l.b16 %v1432
        %v2038 = vunpack.c.l.b16 %v1433
        %v2039 = vunpack.c.l.b16 %v1434
        %v2040 = vunpack.c.l.b16 %v1435
        %v2041 = vunpack.c.l.b16 %v1436
        %v2042 = vunpack.c.l.b16 %v1437
        %v2043 = vunpack.c.l.b16 %v1438
        %v2044 = vunpack.c.l.b16 %v1439
        %v2045 = vunpack.c.l.b16 %v1440
        %v2046 = vunpack.c.l.b16 %v1441
        %v2047 = vunpack.c.l.b16 %v1442
        %v2048 = vunpack.c.l.b16 %v1443
        %v2049 = vunpack.c.l.b16 %v1444
        %v2050 = vunpack.c.l.b16 %v1445
        %v2051 = vunpack.c.l.b16 %v1446
        %v2052 = vunpack.c.l.b16 %v1447
        %v2053 = vunpack.c.l.b16 %v1448
        %v2054 = vunpack.c.l.b16 %v1449
        %v2055 = vunpack.c.l.b16 %v1450
        %v2056 = vunpack.c.l.b16 %v1451
        %v2057 = vpack.c.b16 %v2026, %v2025
        %v2058 = vpack.c.b16 %v2028, %v2027
        %v2059 = vpack.c.b16 %v2030, %v2029
        %v2060 = vpack.c.b16 %v2032, %v2031
        %v2061 = vpack.c.b16 %v2034, %v2033
        %v2062 = vpack.c.b16 %v2036, %v2035
        %v2063 = vpack.c.b16 %v2038, %v2037
        %v2064 = vpack.c.b16 %v2040, %v2039
        %v2065 = vpack.c.b16 %v2042, %v2041
        %v2066 = vpack.c.b16 %v2044, %v2043
        %v2067 = vpack.c.b16 %v2046, %v2045
        %v2068 = vpack.c.b16 %v2048, %v2047
        %v2069 = vpack.c.b16 %v2050, %v2049
        %v2070 = vpack.c.b16 %v2052, %v2051
        %v2071 = vpack.c.b16 %v2054, %v2053
        %v2072 = vpack.c.b16 %v2056, %v2055
        %v2085 = vunpack.c.l.b16 %v1452
        %v2086 = vunpack.c.l.b16 %v1453
        %v2087 = vunpack.c.l.b16 %v1454
        %v2088 = vunpack.c.l.b16 %v1455
        %v2089 = vunpack.c.l.b16 %v1456
        %v2090 = vunpack.c.l.b16 %v1457
        %v2091 = vunpack.c.l.b16 %v1458
        %v2092 = vunpack.c.l.b16 %v1459
        %v2093 = vunpack.c.l.b16 %v1460
        %v2094 = vunpack.c.l.b16 %v1461
        %v2095 = vunpack.c.l.b16 %v1462
        %v2096 = vunpack.c.l.b16 %v1463
        %v2097 = vpack.c.b16 %v2086, %v2085
        %v2098 = vpack.c.b16 %v2088, %v2087
        %v2099 = vpack.c.b16 %v2090, %v2089
        %v2100 = vpack.c.b16 %v2092, %v2091
        %v2101 = vpack.c.b16 %v2094, %v2093
        %v2102 = vpack.c.b16 %v2096, %v2095
        %v2110 = vsel %vm1855, %v2057, 0
        %v2113 = vsel %vm1855, %v2058, 0
        %v2116 = vsel %vm1855, %v2059, 0
        %v2119 = vsel %vm1855, %v2060, 0
        %v2122 = vsel %vm1855, %v2061, 0
        %v2125 = vsel %vm1855, %v2062, 0
        %v2128 = vsel %vm1855, %v2063, 0
        %v2131 = vsel %vm1855, %v2064, 0
        %v2134 = vsel %vm1855, %v2065, 0
        %v2137 = vsel %vm1855, %v2066, 0
        %v2140 = vsel %vm1855, %v2067, 0
        %v2143 = vsel %vm1855, %v2068, 0
        %v2146 = vsel %vm1855, %v2069, 0
        %v2149 = vsel %vm1855, %v2070, 0
        %v2152 = vsel %vm1855, %v2071, 0
        %v2155 = vsel %vm1855, %v2072, 0
        %2157 = vmatpush.bf16.msra.mxu0 0
        %2158 = vmatpush.bf16.msra.mxu0 0
        %2159 = vmatpush.bf16.msra.mxu0 %v2102
        %2160 = vmatpush.bf16.msra.mxu0 %v2101
        %2161 = vmatpush.bf16.msra.mxu0 %v2100
        %2162 = vmatpush.bf16.msra.mxu0 %v2099
        %2163 = vmatpush.bf16.msra.mxu0 %v2098
        %2164 = vmatpush.bf16.msra.mxu0 %v2097
        %2165 = vmatmul.bf16.gmra.mxu0 %v2110
        %v2166 = vpop.f32.mrf.mxu0
        %v2167 = vadd.f32 %v1914, %v2166
        %v2168 = vpop.f32.mrf.mxu0
        %v2169 = vadd.f32 %v1916, %v2168
        %2170 = vmatmul.bf16.gmra.mxu0 %v2113
        %v2171 = vpop.f32.mrf.mxu0
        %v2172 = vadd.f32 %v1919, %v2171
        %v2173 = vpop.f32.mrf.mxu0
        %v2174 = vadd.f32 %v1921, %v2173
        %2175 = vmatmul.bf16.gmra.mxu0 %v2116
        %v2176 = vpop.f32.mrf.mxu0
        %v2177 = vadd.f32 %v1924, %v2176
        %v2178 = vpop.f32.mrf.mxu0
        %v2179 = vadd.f32 %v1926, %v2178
        %2180 = vmatmul.bf16.gmra.mxu0 %v2119
        %v2181 = vpop.f32.mrf.mxu0
        %v2182 = vadd.f32 %v1929, %v2181
        %v2183 = vpop.f32.mrf.mxu0
        %v2184 = vadd.f32 %v1931, %v2183
        %2185 = vmatmul.bf16.gmra.mxu0 %v2122
        %v2186 = vpop.f32.mrf.mxu0
        %v2187 = vadd.f32 %v1934, %v2186
        %v2188 = vpop.f32.mrf.mxu0
        %v2189 = vadd.f32 %v1936, %v2188
        %2190 = vmatmul.bf16.gmra.mxu0 %v2125
        %v2191 = vpop.f32.mrf.mxu0
        %v2192 = vadd.f32 %v1939, %v2191
        %v2193 = vpop.f32.mrf.mxu0
        %v2194 = vadd.f32 %v1941, %v2193
        %2195 = vmatmul.bf16.gmra.mxu0 %v2128
        %v2196 = vpop.f32.mrf.mxu0
        %v2197 = vadd.f32 %v1944, %v2196
        %v2198 = vpop.f32.mrf.mxu0
        %v2199 = vadd.f32 %v1946, %v2198
        %2200 = vmatmul.bf16.gmra.mxu0 %v2131
        %v2201 = vpop.f32.mrf.mxu0
        %v2202 = vadd.f32 %v1949, %v2201
        %v2203 = vpop.f32.mrf.mxu0
        %v2204 = vadd.f32 %v1951, %v2203
        %2205 = vmatmul.bf16.gmra.mxu0 %v2134
        %v2206 = vpop.f32.mrf.mxu0
        %v2207 = vadd.f32 %v1954, %v2206
        %v2208 = vpop.f32.mrf.mxu0
        %v2209 = vadd.f32 %v1956, %v2208
        %2210 = vmatmul.bf16.gmra.mxu0 %v2137
        %v2211 = vpop.f32.mrf.mxu0
        %v2212 = vadd.f32 %v1959, %v2211
        %v2213 = vpop.f32.mrf.mxu0
        %v2214 = vadd.f32 %v1961, %v2213
        %2215 = vmatmul.bf16.gmra.mxu0 %v2140
        %v2216 = vpop.f32.mrf.mxu0
        %v2217 = vadd.f32 %v1964, %v2216
        %v2218 = vpop.f32.mrf.mxu0
        %v2219 = vadd.f32 %v1966, %v2218
        %2220 = vmatmul.bf16.gmra.mxu0 %v2143
        %v2221 = vpop.f32.mrf.mxu0
        %v2222 = vadd.f32 %v1969, %v2221
        %v2223 = vpop.f32.mrf.mxu0
        %v2224 = vadd.f32 %v1971, %v2223
        %2225 = vmatmul.bf16.gmra.mxu0 %v2146
        %v2226 = vpop.f32.mrf.mxu0
        %v2227 = vadd.f32 %v1974, %v2226
        %v2228 = vpop.f32.mrf.mxu0
        %v2229 = vadd.f32 %v1976, %v2228
        %2230 = vmatmul.bf16.gmra.mxu0 %v2149
        %v2231 = vpop.f32.mrf.mxu0
        %v2232 = vadd.f32 %v1979, %v2231
        %v2233 = vpop.f32.mrf.mxu0
        %v2234 = vadd.f32 %v1981, %v2233
        %2235 = vmatmul.bf16.gmra.mxu0 %v2152
        %v2236 = vpop.f32.mrf.mxu0
        %v2237 = vadd.f32 %v1984, %v2236
        %v2238 = vpop.f32.mrf.mxu0
        %v2239 = vadd.f32 %v1986, %v2238
        %2240 = vmatmul.bf16.gmra.mxu0 %v2155
        %v2241 = vpop.f32.mrf.mxu0
        %v2242 = vadd.f32 %v1989, %v2241
        %v2243 = vpop.f32.mrf.mxu0
        %v2244 = vadd.f32 %v1991, %v2243
        %2245 = vdwg.mxu0
        %v2246 = vld [vmem:[#allocation2 + $0x9] sm:$0xff]
        %v2247 = vld [vmem:[#allocation2 + $0x11] sm:$0xff]
        %v2248 = vld [vmem:[#allocation2 + $0x19] sm:$0xff]
        %v2249 = vld [vmem:[#allocation2 + $0x21] sm:$0xff]
        %v2250 = vld [vmem:[#allocation2 + $0x29] sm:$0xff]
        %v2251 = vld [vmem:[#allocation2 + $0x31] sm:$0xff]
        %v2252 = vld [vmem:[#allocation2 + $0x39] sm:$0xff]
        %v2253 = vld [vmem:[#allocation2 + $0x41] sm:$0xff]
        %v2254 = vld [vmem:[#allocation2 + $0x49] sm:$0xff]
        %v2255 = vld [vmem:[#allocation2 + $0x51] sm:$0xff]
        %v2256 = vld [vmem:[#allocation2 + $0x59] sm:$0xff]
        %v2257 = vld [vmem:[#allocation2 + $0x61] sm:$0xff]
        %v2258 = vld [vmem:[#allocation2 + $0x69] sm:$0xff]
        %v2259 = vld [vmem:[#allocation2 + $0x71] sm:$0xff]
        %v2260 = vld [vmem:[#allocation2 + $0x79] sm:$0xff]
        %v2261 = vld [vmem:[#allocation2 + $0x81] sm:$0xff]
        %v2262 = vld [vmem:[#allocation2 + $0x89] sm:$0xff]
        %v2263 = vld [vmem:[#allocation2 + $0x91] sm:$0xff]
        %v2264 = vld [vmem:[#allocation2 + $0x99] sm:$0xff]
        %v2265 = vld [vmem:[#allocation2 + $0xa1] sm:$0xff]
        %v2266 = vld [vmem:[#allocation2 + $0xa9] sm:$0xff]
        %v2267 = vld [vmem:[#allocation2 + $0xb1] sm:$0xff]
        %v2268 = vld [vmem:[#allocation2 + $0xb9] sm:$0xff]
        %v2269 = vld [vmem:[#allocation2 + $0xc1] sm:$0xff]
        %v2270 = vld [vmem:[#allocation2 + $0xc9] sm:$0xff]
        %v2271 = vld [vmem:[#allocation2 + $0xd1] sm:$0xff]
        %v2272 = vld [vmem:[#allocation2 + $0xd9] sm:$0xff]
        %v2273 = vld [vmem:[#allocation2 + $0xe1] sm:$0xff]
        %v2274 = vld [vmem:[#allocation2 + $0xe9] sm:$0xff]
        %v2275 = vld [vmem:[#allocation2 + $0xf1] sm:$0xff]
        %v2276 = vld [vmem:[#allocation2 + $0xf9] sm:$0xff]
        %v2277 = vld [vmem:[#allocation2 + $0x101] sm:$0xff]
        %v2278 = vld [vmem:[#allocation2 + $0x109] sm:$0xff]
        %v2279 = vld [vmem:[#allocation2 + $0x111] sm:$0xff]
        %v2280 = vld [vmem:[#allocation2 + $0x119] sm:$0xff]
        %v2281 = vld [vmem:[#allocation2 + $0x121] sm:$0xff]
        %2314 = vrot.lane.b32.xlu0 %v2248, 32
        %v2315 = vpop.permute.xlu0 %2314
        %2316 = vrot.lane.b32.xlu0 %v2249, 32
        %v2317 = vpop.permute.xlu0 %2316
        %2318 = vrot.lane.b32.xlu0 %v2250, 32
        %v2319 = vpop.permute.xlu0 %2318
        %2320 = vrot.lane.b32.xlu0 %v2251, 32
        %v2321 = vpop.permute.xlu0 %2320
        %2322 = vrot.lane.b32.xlu0 %v2252, 32
        %v2323 = vpop.permute.xlu0 %2322
        %2324 = vrot.lane.b32.xlu0 %v2253, 32
        %v2325 = vpop.permute.xlu0 %2324
        %2326 = vrot.lane.b32.xlu0 %v2254, 32
        %v2327 = vpop.permute.xlu0 %2326
        %2328 = vrot.lane.b32.xlu0 %v2255, 32
        %v2329 = vpop.permute.xlu0 %2328
        %2330 = vrot.lane.b32.xlu0 %v2256, 32
        %v2331 = vpop.permute.xlu0 %2330
        %2332 = vrot.lane.b32.xlu0 %v2257, 32
        %v2333 = vpop.permute.xlu0 %2332
        %2334 = vrot.lane.b32.xlu0 %v2258, 32
        %v2335 = vpop.permute.xlu0 %2334
        %2336 = vrot.lane.b32.xlu0 %v2259, 32
        %v2337 = vpop.permute.xlu0 %2336
        %2338 = vrot.lane.b32.xlu0 %v2260, 32
        %v2339 = vpop.permute.xlu0 %2338
        %2340 = vrot.lane.b32.xlu0 %v2261, 32
        %v2341 = vpop.permute.xlu0 %2340
        %2342 = vrot.lane.b32.xlu0 %v2262, 32
        %v2343 = vpop.permute.xlu0 %2342
        %2344 = vrot.lane.b32.xlu0 %v2263, 32
        %v2345 = vpop.permute.xlu0 %2344
        %2346 = vrot.lane.b32.xlu0 %v2264, 32
        %v2347 = vpop.permute.xlu0 %2346
        %2348 = vrot.lane.b32.xlu0 %v2265, 32
        %v2349 = vpop.permute.xlu0 %2348
        %2350 = vrot.lane.b32.xlu0 %v2266, 32
        %v2351 = vpop.permute.xlu0 %2350
        %2352 = vrot.lane.b32.xlu0 %v2267, 32
        %v2353 = vpop.permute.xlu0 %2352
        %2354 = vrot.lane.b32.xlu0 %v2268, 32
        %v2355 = vpop.permute.xlu0 %2354
        %2356 = vrot.lane.b32.xlu0 %v2269, 32
        %v2357 = vpop.permute.xlu0 %2356
        %2358 = vrot.lane.b32.xlu0 %v2270, 32
        %v2359 = vpop.permute.xlu0 %2358
        %2360 = vrot.lane.b32.xlu0 %v2271, 32
        %v2361 = vpop.permute.xlu0 %2360
        %2362 = vrot.lane.b32.xlu0 %v2272, 32
        %v2363 = vpop.permute.xlu0 %2362
        %2364 = vrot.lane.b32.xlu0 %v2273, 32
        %v2365 = vpop.permute.xlu0 %2364
        %2366 = vrot.lane.b32.xlu0 %v2274, 32
        %v2367 = vpop.permute.xlu0 %2366
        %2368 = vrot.lane.b32.xlu0 %v2275, 32
        %v2369 = vpop.permute.xlu0 %2368
        %2370 = vrot.lane.b32.xlu0 %v2276, 32
        %v2371 = vpop.permute.xlu0 %2370
        %2372 = vrot.lane.b32.xlu0 %v2277, 32
        %v2373 = vpop.permute.xlu0 %2372
        %2374 = vrot.lane.b32.xlu0 %v2278, 32
        %v2375 = vpop.permute.xlu0 %2374
        %2376 = vrot.lane.b32.xlu0 %v2279, 32
        %v2377 = vpop.permute.xlu0 %2376
        %2412 = vrot.lane.b32.xlu0 %v2250, 64
        %v2413 = vpop.permute.xlu0 %2412
        %2414 = vrot.lane.b32.xlu0 %v2251, 64
        %v2415 = vpop.permute.xlu0 %2414
        %2416 = vrot.lane.b32.xlu0 %v2252, 64
        %v2417 = vpop.permute.xlu0 %2416
        %2418 = vrot.lane.b32.xlu0 %v2253, 64
        %v2419 = vpop.permute.xlu0 %2418
        %2420 = vrot.lane.b32.xlu0 %v2254, 64
        %v2421 = vpop.permute.xlu0 %2420
        %2422 = vrot.lane.b32.xlu0 %v2255, 64
        %v2423 = vpop.permute.xlu0 %2422
        %2424 = vrot.lane.b32.xlu0 %v2256, 64
        %v2425 = vpop.permute.xlu0 %2424
        %2426 = vrot.lane.b32.xlu0 %v2257, 64
        %v2427 = vpop.permute.xlu0 %2426
        %2428 = vrot.lane.b32.xlu0 %v2258, 64
        %v2429 = vpop.permute.xlu0 %2428
        %2430 = vrot.lane.b32.xlu0 %v2259, 64
        %v2431 = vpop.permute.xlu0 %2430
        %2432 = vrot.lane.b32.xlu0 %v2260, 64
        %v2433 = vpop.permute.xlu0 %2432
        %2434 = vrot.lane.b32.xlu0 %v2261, 64
        %v2435 = vpop.permute.xlu0 %2434
        %2436 = vrot.lane.b32.xlu0 %v2262, 64
        %v2437 = vpop.permute.xlu0 %2436
        %2438 = vrot.lane.b32.xlu0 %v2263, 64
        %v2439 = vpop.permute.xlu0 %2438
        %2440 = vrot.lane.b32.xlu0 %v2264, 64
        %v2441 = vpop.permute.xlu0 %2440
        %2442 = vrot.lane.b32.xlu0 %v2265, 64
        %v2443 = vpop.permute.xlu0 %2442
        %2444 = vrot.lane.b32.xlu0 %v2266, 64
        %v2445 = vpop.permute.xlu0 %2444
        %2446 = vrot.lane.b32.xlu0 %v2267, 64
        %v2447 = vpop.permute.xlu0 %2446
        %2448 = vrot.lane.b32.xlu0 %v2268, 64
        %v2449 = vpop.permute.xlu0 %2448
        %2450 = vrot.lane.b32.xlu0 %v2269, 64
        %v2451 = vpop.permute.xlu0 %2450
        %2452 = vrot.lane.b32.xlu0 %v2270, 64
        %v2453 = vpop.permute.xlu0 %2452
        %2454 = vrot.lane.b32.xlu0 %v2271, 64
        %v2455 = vpop.permute.xlu0 %2454
        %2456 = vrot.lane.b32.xlu0 %v2272, 64
        %v2457 = vpop.permute.xlu0 %2456
        %2458 = vrot.lane.b32.xlu0 %v2273, 64
        %v2459 = vpop.permute.xlu0 %2458
        %2460 = vrot.lane.b32.xlu0 %v2274, 64
        %v2461 = vpop.permute.xlu0 %2460
        %2462 = vrot.lane.b32.xlu0 %v2275, 64
        %v2463 = vpop.permute.xlu0 %2462
        %2464 = vrot.lane.b32.xlu0 %v2276, 64
        %v2465 = vpop.permute.xlu0 %2464
        %2466 = vrot.lane.b32.xlu0 %v2277, 64
        %v2467 = vpop.permute.xlu0 %2466
        %2468 = vrot.lane.b32.xlu0 %v2278, 64
        %v2469 = vpop.permute.xlu0 %2468
        %2470 = vrot.lane.b32.xlu0 %v2279, 64
        %v2471 = vpop.permute.xlu0 %2470
        %2472 = vrot.lane.b32.xlu0 %v2280, 64
        %v2473 = vpop.permute.xlu0 %2472
        %2474 = vrot.lane.b32.xlu0 %v2281, 64
        %v2475 = vpop.permute.xlu0 %2474
        %v2508 = vsel %vm510, %v2246, %v2315
        %v2509 = vsel %vm510, %v2247, %v2317
        %v2510 = vsel %vm510, %v2248, %v2319
        %v2511 = vsel %vm510, %v2249, %v2321
        %v2512 = vsel %vm510, %v2250, %v2323
        %v2513 = vsel %vm510, %v2251, %v2325
        %v2514 = vsel %vm510, %v2252, %v2327
        %v2515 = vsel %vm510, %v2253, %v2329
        %v2516 = vsel %vm510, %v2254, %v2331
        %v2517 = vsel %vm510, %v2255, %v2333
        %v2518 = vsel %vm510, %v2256, %v2335
        %v2519 = vsel %vm510, %v2257, %v2337
        %v2520 = vsel %vm510, %v2258, %v2339
        %v2521 = vsel %vm510, %v2259, %v2341
        %v2522 = vsel %vm510, %v2260, %v2343
        %v2523 = vsel %vm510, %v2261, %v2345
        %v2524 = vsel %vm510, %v2262, %v2347
        %v2525 = vsel %vm510, %v2263, %v2349
        %v2526 = vsel %vm510, %v2264, %v2351
        %v2527 = vsel %vm510, %v2265, %v2353
        %v2528 = vsel %vm510, %v2266, %v2355
        %v2529 = vsel %vm510, %v2267, %v2357
        %v2530 = vsel %vm510, %v2268, %v2359
        %v2531 = vsel %vm510, %v2269, %v2361
        %v2532 = vsel %vm510, %v2270, %v2363
        %v2533 = vsel %vm510, %v2271, %v2365
        %v2534 = vsel %vm510, %v2272, %v2367
        %v2535 = vsel %vm510, %v2273, %v2369
        %v2536 = vsel %vm510, %v2274, %v2371
        %v2537 = vsel %vm510, %v2275, %v2373
        %v2538 = vsel %vm510, %v2276, %v2375
        %v2539 = vsel %vm510, %v2277, %v2377
        %v2540 = vsel %vm308, %v2508, %v2413
        %v2541 = vsel %vm308, %v2509, %v2415
        %v2542 = vsel %vm308, %v2510, %v2417
        %v2543 = vsel %vm308, %v2511, %v2419
        %v2544 = vsel %vm308, %v2512, %v2421
        %v2545 = vsel %vm308, %v2513, %v2423
        %v2546 = vsel %vm308, %v2514, %v2425
        %v2547 = vsel %vm308, %v2515, %v2427
        %v2548 = vsel %vm308, %v2516, %v2429
        %v2549 = vsel %vm308, %v2517, %v2431
        %v2550 = vsel %vm308, %v2518, %v2433
        %v2551 = vsel %vm308, %v2519, %v2435
        %v2552 = vsel %vm308, %v2520, %v2437
        %v2553 = vsel %vm308, %v2521, %v2439
        %v2554 = vsel %vm308, %v2522, %v2441
        %v2555 = vsel %vm308, %v2523, %v2443
        %v2556 = vsel %vm308, %v2524, %v2445
        %v2557 = vsel %vm308, %v2525, %v2447
        %v2558 = vsel %vm308, %v2526, %v2449
        %v2559 = vsel %vm308, %v2527, %v2451
        %v2560 = vsel %vm308, %v2528, %v2453
        %v2561 = vsel %vm308, %v2529, %v2455
        %v2562 = vsel %vm308, %v2530, %v2457
        %v2563 = vsel %vm308, %v2531, %v2459
        %v2564 = vsel %vm308, %v2532, %v2461
        %v2565 = vsel %vm308, %v2533, %v2463
        %v2566 = vsel %vm308, %v2534, %v2465
        %v2567 = vsel %vm308, %v2535, %v2467
        %v2568 = vsel %vm308, %v2536, %v2469
        %v2569 = vsel %vm308, %v2537, %v2471
        %v2570 = vsel %vm308, %v2538, %v2473
        %v2571 = vsel %vm308, %v2539, %v2475
        %v2572 = vpack.c.bf16 %v2540, %v2540
        %v2573 = vpack.c.bf16 %v2541, %v2541
        %v2574 = vpack.c.bf16 %v2542, %v2542
        %v2575 = vpack.c.bf16 %v2543, %v2543
        %v2576 = vpack.c.bf16 %v2544, %v2544
        %v2577 = vpack.c.bf16 %v2545, %v2545
        %v2578 = vpack.c.bf16 %v2546, %v2546
        %v2579 = vpack.c.bf16 %v2547, %v2547
        %v2580 = vpack.c.bf16 %v2548, %v2548
        %v2581 = vpack.c.bf16 %v2549, %v2549
        %v2582 = vpack.c.bf16 %v2550, %v2550
        %v2583 = vpack.c.bf16 %v2551, %v2551
        %v2584 = vpack.c.bf16 %v2552, %v2552
        %v2585 = vpack.c.bf16 %v2553, %v2553
        %v2586 = vpack.c.bf16 %v2554, %v2554
        %v2587 = vpack.c.bf16 %v2555, %v2555
        %v2588 = vpack.c.bf16 %v2556, %v2556
        %v2589 = vpack.c.bf16 %v2557, %v2557
        %v2590 = vpack.c.bf16 %v2558, %v2558
        %v2591 = vpack.c.bf16 %v2559, %v2559
        %v2592 = vpack.c.bf16 %v2560, %v2560
        %v2593 = vpack.c.bf16 %v2561, %v2561
        %v2594 = vpack.c.bf16 %v2562, %v2562
        %v2595 = vpack.c.bf16 %v2563, %v2563
        %v2596 = vpack.c.bf16 %v2564, %v2564
        %v2597 = vpack.c.bf16 %v2565, %v2565
        %v2598 = vpack.c.bf16 %v2566, %v2566
        %v2599 = vpack.c.bf16 %v2567, %v2567
        %v2600 = vpack.c.bf16 %v2568, %v2568
        %v2601 = vpack.c.bf16 %v2569, %v2569
        %v2602 = vpack.c.bf16 %v2570, %v2570
        %v2603 = vpack.c.bf16 %v2571, %v2571
        %vm2604 = vcmp.le.s32.totalorder %v966, 14
        %vm2605 = vcmp.le.s32.totalorder %v967, 14
        %vm2606 = vcmp.le.s32.totalorder %v968, 14
        %vm2607 = vcmp.le.s32.totalorder %v969, 14
        %vm2608 = vcmp.le.s32.totalorder %v970, 14
        %vm2609 = vcmp.le.s32.totalorder %v971, 14
        %vm2610 = vcmp.le.s32.totalorder %v972, 14
        %vm2611 = vcmp.le.s32.totalorder %v973, 14
        %vm2612 = vcmp.le.s32.totalorder %v974, 14
        %vm2613 = vcmp.le.s32.totalorder %v975, 14
        %vm2614 = vcmp.le.s32.totalorder %v976, 14
        %vm2615 = vcmp.le.s32.totalorder %v977, 14
        %vm2616 = vcmp.le.s32.totalorder %v978, 14
        %vm2617 = vcmp.le.s32.totalorder %v979, 14
        %vm2618 = vcmp.le.s32.totalorder %v980, 14
        %vm2619 = vcmp.le.s32.totalorder %v981, 14
        %vm2620 = vcmp.le.s32.totalorder %v982, 14
        %vm2621 = vcmp.le.s32.totalorder %v983, 14
        %vm2622 = vcmp.le.s32.totalorder %v984, 14
        %vm2623 = vcmp.le.s32.totalorder %v985, 14
        %vm2624 = vcmp.le.s32.totalorder %v986, 14
        %vm2625 = vcmp.le.s32.totalorder %v987, 14
        %vm2626 = vcmp.le.s32.totalorder %v988, 14
        %vm2627 = vcmp.le.s32.totalorder %v989, 14
        %vm2628 = vcmp.le.s32.totalorder %v990, 14
        %vm2629 = vcmp.le.s32.totalorder %v991, 14
        %vm2630 = vcmp.le.s32.totalorder %v992, 14
        %vm2631 = vcmp.le.s32.totalorder %v993, 14
        %vm2632 = vcmp.le.s32.totalorder %v994, 14
        %vm2633 = vcmp.le.s32.totalorder %v995, 14
        %vm2634 = vcmp.le.s32.totalorder %v996, 14
        %vm2635 = vcmp.le.s32.totalorder %v997, 14
        %vm2636 = vmpackc.low %vm2604, %vm2604
        %vm2637 = vmpackc.low %vm2605, %vm2605
        %vm2638 = vmpackc.low %vm2606, %vm2606
        %vm2639 = vmpackc.low %vm2607, %vm2607
        %vm2640 = vmpackc.low %vm2608, %vm2608
        %vm2641 = vmpackc.low %vm2609, %vm2609
        %vm2642 = vmpackc.low %vm2610, %vm2610
        %vm2643 = vmpackc.low %vm2611, %vm2611
        %vm2644 = vmpackc.low %vm2612, %vm2612
        %vm2645 = vmpackc.low %vm2613, %vm2613
        %vm2646 = vmpackc.low %vm2614, %vm2614
        %vm2647 = vmpackc.low %vm2615, %vm2615
        %vm2648 = vmpackc.low %vm2616, %vm2616
        %vm2649 = vmpackc.low %vm2617, %vm2617
        %vm2650 = vmpackc.low %vm2618, %vm2618
        %vm2651 = vmpackc.low %vm2619, %vm2619
        %vm2652 = vmpackc.low %vm2620, %vm2620
        %vm2653 = vmpackc.low %vm2621, %vm2621
        %vm2654 = vmpackc.low %vm2622, %vm2622
        %vm2655 = vmpackc.low %vm2623, %vm2623
        %vm2656 = vmpackc.low %vm2624, %vm2624
        %vm2657 = vmpackc.low %vm2625, %vm2625
        %vm2658 = vmpackc.low %vm2626, %vm2626
        %vm2659 = vmpackc.low %vm2627, %vm2627
        %vm2660 = vmpackc.low %vm2628, %vm2628
        %vm2661 = vmpackc.low %vm2629, %vm2629
        %vm2662 = vmpackc.low %vm2630, %vm2630
        %vm2663 = vmpackc.low %vm2631, %vm2631
        %vm2664 = vmpackc.low %vm2632, %vm2632
        %vm2665 = vmpackc.low %vm2633, %vm2633
        %vm2666 = vmpackc.low %vm2634, %vm2634
        %vm2667 = vmpackc.low %vm2635, %vm2635
        %v2668 = vsel %vm2636, %v2572, 0
        %v2669 = vsel %vm2637, %v2573, 0
        %v2670 = vsel %vm2638, %v2574, 0
        %v2671 = vsel %vm2639, %v2575, 0
        %v2672 = vsel %vm2640, %v2576, 0
        %v2673 = vsel %vm2641, %v2577, 0
        %v2674 = vsel %vm2642, %v2578, 0
        %v2675 = vsel %vm2643, %v2579, 0
        %v2676 = vsel %vm2644, %v2580, 0
        %v2677 = vsel %vm2645, %v2581, 0
        %v2678 = vsel %vm2646, %v2582, 0
        %v2679 = vsel %vm2647, %v2583, 0
        %v2680 = vsel %vm2648, %v2584, 0
        %v2681 = vsel %vm2649, %v2585, 0
        %v2682 = vsel %vm2650, %v2586, 0
        %v2683 = vsel %vm2651, %v2587, 0
        %v2684 = vsel %vm2652, %v2588, 0
        %v2685 = vsel %vm2653, %v2589, 0
        %v2686 = vsel %vm2654, %v2590, 0
        %v2687 = vsel %vm2655, %v2591, 0
        %v2688 = vsel %vm2656, %v2592, 0
        %v2689 = vsel %vm2657, %v2593, 0
        %v2690 = vsel %vm2658, %v2594, 0
        %v2691 = vsel %vm2659, %v2595, 0
        %v2692 = vsel %vm2660, %v2596, 0
        %v2693 = vsel %vm2661, %v2597, 0
        %v2694 = vsel %vm2662, %v2598, 0
        %v2695 = vsel %vm2663, %v2599, 0
        %v2696 = vsel %vm2664, %v2600, 0
        %v2697 = vsel %vm2665, %v2601, 0
        %v2698 = vsel %vm2666, %v2602, 0
        %v2699 = vsel %vm2667, %v2603, 0
        %s2700 = scalar_lea.vmem %s3, 96
        %v2701 = vld [vmem:[%s2700] sm:$0xf]
        %v2702 = vld [vmem:[%s2700 + $0x4] sm:$0xf]
        %v2703 = vld [vmem:[%s2700 + $0x8] sm:$0xf]
        %v2704 = vld [vmem:[%s2700 + $0xc] sm:$0xf]
        %v2705 = vld [vmem:[%s2700 + $0x10] sm:$0xf]
        %v2706 = vld [vmem:[%s2700 + $0x14] sm:$0xf]
        %v2707 = vld [vmem:[%s2700 + $0x18] sm:$0xf]
        %v2708 = vld [vmem:[%s2700 + $0x1c] sm:$0xf]
        %v2709 = vld [vmem:[%s2700 + $0x20] sm:$0xf]
        %v2710 = vld [vmem:[%s2700 + $0x24] sm:$0xf]
        %v2711 = vld [vmem:[%s2700 + $0x28] sm:$0xf]
        %v2712 = vld [vmem:[%s2700 + $0x2c] sm:$0xf]
        %v2745 = vunpack.c.l.b16 %v2668
        %v2746 = vunpack.c.l.b16 %v2669
        %v2747 = vunpack.c.l.b16 %v2670
        %v2748 = vunpack.c.l.b16 %v2671
        %v2749 = vunpack.c.l.b16 %v2672
        %v2750 = vunpack.c.l.b16 %v2673
        %v2751 = vunpack.c.l.b16 %v2674
        %v2752 = vunpack.c.l.b16 %v2675
        %v2753 = vunpack.c.l.b16 %v2676
        %v2754 = vunpack.c.l.b16 %v2677
        %v2755 = vunpack.c.l.b16 %v2678
        %v2756 = vunpack.c.l.b16 %v2679
        %v2757 = vunpack.c.l.b16 %v2680
        %v2758 = vunpack.c.l.b16 %v2681
        %v2759 = vunpack.c.l.b16 %v2682
        %v2760 = vunpack.c.l.b16 %v2683
        %v2761 = vunpack.c.l.b16 %v2684
        %v2762 = vunpack.c.l.b16 %v2685
        %v2763 = vunpack.c.l.b16 %v2686
        %v2764 = vunpack.c.l.b16 %v2687
        %v2765 = vunpack.c.l.b16 %v2688
        %v2766 = vunpack.c.l.b16 %v2689
        %v2767 = vunpack.c.l.b16 %v2690
        %v2768 = vunpack.c.l.b16 %v2691
        %v2769 = vunpack.c.l.b16 %v2692
        %v2770 = vunpack.c.l.b16 %v2693
        %v2771 = vunpack.c.l.b16 %v2694
        %v2772 = vunpack.c.l.b16 %v2695
        %v2773 = vunpack.c.l.b16 %v2696
        %v2774 = vunpack.c.l.b16 %v2697
        %v2775 = vunpack.c.l.b16 %v2698
        %v2776 = vunpack.c.l.b16 %v2699
        %v2777 = vpack.c.b16 %v2746, %v2745
        %v2778 = vpack.c.b16 %v2748, %v2747
        %v2779 = vpack.c.b16 %v2750, %v2749
        %v2780 = vpack.c.b16 %v2752, %v2751
        %v2781 = vpack.c.b16 %v2754, %v2753
        %v2782 = vpack.c.b16 %v2756, %v2755
        %v2783 = vpack.c.b16 %v2758, %v2757
        %v2784 = vpack.c.b16 %v2760, %v2759
        %v2785 = vpack.c.b16 %v2762, %v2761
        %v2786 = vpack.c.b16 %v2764, %v2763
        %v2787 = vpack.c.b16 %v2766, %v2765
        %v2788 = vpack.c.b16 %v2768, %v2767
        %v2789 = vpack.c.b16 %v2770, %v2769
        %v2790 = vpack.c.b16 %v2772, %v2771
        %v2791 = vpack.c.b16 %v2774, %v2773
        %v2792 = vpack.c.b16 %v2776, %v2775
        %v2805 = vunpack.c.l.b16 %v2701
        %v2806 = vunpack.c.l.b16 %v2702
        %v2807 = vunpack.c.l.b16 %v2703
        %v2808 = vunpack.c.l.b16 %v2704
        %v2809 = vunpack.c.l.b16 %v2705
        %v2810 = vunpack.c.l.b16 %v2706
        %v2811 = vunpack.c.l.b16 %v2707
        %v2812 = vunpack.c.l.b16 %v2708
        %v2813 = vunpack.c.l.b16 %v2709
        %v2814 = vunpack.c.l.b16 %v2710
        %v2815 = vunpack.c.l.b16 %v2711
        %v2816 = vunpack.c.l.b16 %v2712
        %v2817 = vpack.c.b16 %v2806, %v2805
        %v2818 = vpack.c.b16 %v2808, %v2807
        %v2819 = vpack.c.b16 %v2810, %v2809
        %v2820 = vpack.c.b16 %v2812, %v2811
        %v2821 = vpack.c.b16 %v2814, %v2813
        %v2822 = vpack.c.b16 %v2816, %v2815
        %v2830 = vsel %vm1855, %v2777, 0
        %v2833 = vsel %vm1855, %v2778, 0
        %v2836 = vsel %vm1855, %v2779, 0
        %v2839 = vsel %vm1855, %v2780, 0
        %v2842 = vsel %vm1855, %v2781, 0
        %v2845 = vsel %vm1855, %v2782, 0
        %v2848 = vsel %vm1855, %v2783, 0
        %v2851 = vsel %vm1855, %v2784, 0
        %v2854 = vsel %vm1855, %v2785, 0
        %v2857 = vsel %vm1855, %v2786, 0
        %v2860 = vsel %vm1855, %v2787, 0
        %v2863 = vsel %vm1855, %v2788, 0
        %v2866 = vsel %vm1855, %v2789, 0
        %v2869 = vsel %vm1855, %v2790, 0
        %v2872 = vsel %vm1855, %v2791, 0
        %v2875 = vsel %vm1855, %v2792, 0
        %2877 = vmatpush.bf16.msra.mxu0 0
        %2878 = vmatpush.bf16.msra.mxu0 0
        %2879 = vmatpush.bf16.msra.mxu0 %v2822
        %2880 = vmatpush.bf16.msra.mxu0 %v2821
        %2881 = vmatpush.bf16.msra.mxu0 %v2820
        %2882 = vmatpush.bf16.msra.mxu0 %v2819
        %2883 = vmatpush.bf16.msra.mxu0 %v2818
        %2884 = vmatpush.bf16.msra.mxu0 %v2817
        %2885 = vmatmul.bf16.gmra.mxu0 %v2830
        %v2886 = vpop.f32.mrf.mxu0
        %v2887 = vadd.f32 0.0, %v2886
        %v2888 = vpop.f32.mrf.mxu0
        %v2889 = vadd.f32 0.0, %v2888
        %2890 = vmatmul.bf16.gmra.mxu0 %v2833
        %v2891 = vpop.f32.mrf.mxu0
        %v2892 = vadd.f32 0.0, %v2891
        %v2893 = vpop.f32.mrf.mxu0
        %v2894 = vadd.f32 0.0, %v2893
        %2895 = vmatmul.bf16.gmra.mxu0 %v2836
        %v2896 = vpop.f32.mrf.mxu0
        %v2897 = vadd.f32 0.0, %v2896
        %v2898 = vpop.f32.mrf.mxu0
        %v2899 = vadd.f32 0.0, %v2898
        %2900 = vmatmul.bf16.gmra.mxu0 %v2839
        %v2901 = vpop.f32.mrf.mxu0
        %v2902 = vadd.f32 0.0, %v2901
        %v2903 = vpop.f32.mrf.mxu0
        %v2904 = vadd.f32 0.0, %v2903
        %2905 = vmatmul.bf16.gmra.mxu0 %v2842
        %v2906 = vpop.f32.mrf.mxu0
        %v2907 = vadd.f32 0.0, %v2906
        %v2908 = vpop.f32.mrf.mxu0
        %v2909 = vadd.f32 0.0, %v2908
        %2910 = vmatmul.bf16.gmra.mxu0 %v2845
        %v2911 = vpop.f32.mrf.mxu0
        %v2912 = vadd.f32 0.0, %v2911
        %v2913 = vpop.f32.mrf.mxu0
        %v2914 = vadd.f32 0.0, %v2913
        %2915 = vmatmul.bf16.gmra.mxu0 %v2848
        %v2916 = vpop.f32.mrf.mxu0
        %v2917 = vadd.f32 0.0, %v2916
        %v2918 = vpop.f32.mrf.mxu0
        %v2919 = vadd.f32 0.0, %v2918
        %2920 = vmatmul.bf16.gmra.mxu0 %v2851
        %v2921 = vpop.f32.mrf.mxu0
        %v2922 = vadd.f32 0.0, %v2921
        %v2923 = vpop.f32.mrf.mxu0
        %v2924 = vadd.f32 0.0, %v2923
        %2925 = vmatmul.bf16.gmra.mxu0 %v2854
        %v2926 = vpop.f32.mrf.mxu0
        %v2927 = vadd.f32 0.0, %v2926
        %v2928 = vpop.f32.mrf.mxu0
        %v2929 = vadd.f32 0.0, %v2928
        %2930 = vmatmul.bf16.gmra.mxu0 %v2857
        %v2931 = vpop.f32.mrf.mxu0
        %v2932 = vadd.f32 0.0, %v2931
        %v2933 = vpop.f32.mrf.mxu0
        %v2934 = vadd.f32 0.0, %v2933
        %2935 = vmatmul.bf16.gmra.mxu0 %v2860
        %v2936 = vpop.f32.mrf.mxu0
        %v2937 = vadd.f32 0.0, %v2936
        %v2938 = vpop.f32.mrf.mxu0
        %v2939 = vadd.f32 0.0, %v2938
        %2940 = vmatmul.bf16.gmra.mxu0 %v2863
        %v2941 = vpop.f32.mrf.mxu0
        %v2942 = vadd.f32 0.0, %v2941
        %v2943 = vpop.f32.mrf.mxu0
        %v2944 = vadd.f32 0.0, %v2943
        %2945 = vmatmul.bf16.gmra.mxu0 %v2866
        %v2946 = vpop.f32.mrf.mxu0
        %v2947 = vadd.f32 0.0, %v2946
        %v2948 = vpop.f32.mrf.mxu0
        %v2949 = vadd.f32 0.0, %v2948
        %2950 = vmatmul.bf16.gmra.mxu0 %v2869
        %v2951 = vpop.f32.mrf.mxu0
        %v2952 = vadd.f32 0.0, %v2951
        %v2953 = vpop.f32.mrf.mxu0
        %v2954 = vadd.f32 0.0, %v2953
        %2955 = vmatmul.bf16.gmra.mxu0 %v2872
        %v2956 = vpop.f32.mrf.mxu0
        %v2957 = vadd.f32 0.0, %v2956
        %v2958 = vpop.f32.mrf.mxu0
        %v2959 = vadd.f32 0.0, %v2958
        %2960 = vmatmul.bf16.gmra.mxu0 %v2875
        %v2961 = vpop.f32.mrf.mxu0
        %v2962 = vadd.f32 0.0, %v2961
        %v2963 = vpop.f32.mrf.mxu0
        %v2964 = vadd.f32 0.0, %v2963
        %2965 = vdwg.mxu0
        %v2966 = vadd.f32 %v2167, %v2887
        %v2967 = vadd.f32 %v2169, %v2889
        %v2968 = vadd.f32 %v2172, %v2892
        %v2969 = vadd.f32 %v2174, %v2894
        %v2970 = vadd.f32 %v2177, %v2897
        %v2971 = vadd.f32 %v2179, %v2899
        %v2972 = vadd.f32 %v2182, %v2902
        %v2973 = vadd.f32 %v2184, %v2904
        %v2974 = vadd.f32 %v2187, %v2907
        %v2975 = vadd.f32 %v2189, %v2909
        %v2976 = vadd.f32 %v2192, %v2912
        %v2977 = vadd.f32 %v2194, %v2914
        %v2978 = vadd.f32 %v2197, %v2917
        %v2979 = vadd.f32 %v2199, %v2919
        %v2980 = vadd.f32 %v2202, %v2922
        %v2981 = vadd.f32 %v2204, %v2924
        %v2982 = vadd.f32 %v2207, %v2927
        %v2983 = vadd.f32 %v2209, %v2929
        %v2984 = vadd.f32 %v2212, %v2932
        %v2985 = vadd.f32 %v2214, %v2934
        %v2986 = vadd.f32 %v2217, %v2937
        %v2987 = vadd.f32 %v2219, %v2939
        %v2988 = vadd.f32 %v2222, %v2942
        %v2989 = vadd.f32 %v2224, %v2944
        %v2990 = vadd.f32 %v2227, %v2947
        %v2991 = vadd.f32 %v2229, %v2949
        %v2992 = vadd.f32 %v2232, %v2952
        %v2993 = vadd.f32 %v2234, %v2954
        %v2994 = vadd.f32 %v2237, %v2957
        %v2995 = vadd.f32 %v2239, %v2959
        %v2996 = vadd.f32 %v2242, %v2962
        %v2997 = vadd.f32 %v2244, %v2964
        %v2998 = vld [vmem:[%s4] sm:$0x1]
        %v3000 = vperm.slane %v2998, 0
        %v3002 = vadd.f32 %v2966, %v3000
        %v3003 = vadd.f32 %v2967, %v3000
        %v3004 = vadd.f32 %v2968, %v3000
        %v3005 = vadd.f32 %v2969, %v3000
        %v3006 = vadd.f32 %v2970, %v3000
        %v3007 = vadd.f32 %v2971, %v3000
        %v3008 = vadd.f32 %v2972, %v3000
        %v3009 = vadd.f32 %v2973, %v3000
        %v3010 = vadd.f32 %v2974, %v3000
        %v3011 = vadd.f32 %v2975, %v3000
        %v3012 = vadd.f32 %v2976, %v3000
        %v3013 = vadd.f32 %v2977, %v3000
        %v3014 = vadd.f32 %v2978, %v3000
        %v3015 = vadd.f32 %v2979, %v3000
        %v3016 = vadd.f32 %v2980, %v3000
        %v3017 = vadd.f32 %v2981, %v3000
        %v3018 = vadd.f32 %v2982, %v3000
        %v3019 = vadd.f32 %v2983, %v3000
        %v3020 = vadd.f32 %v2984, %v3000
        %v3021 = vadd.f32 %v2985, %v3000
        %v3022 = vadd.f32 %v2986, %v3000
        %v3023 = vadd.f32 %v2987, %v3000
        %v3024 = vadd.f32 %v2988, %v3000
        %v3025 = vadd.f32 %v2989, %v3000
        %v3026 = vadd.f32 %v2990, %v3000
        %v3027 = vadd.f32 %v2991, %v3000
        %v3028 = vadd.f32 %v2992, %v3000
        %v3029 = vadd.f32 %v2993, %v3000
        %v3030 = vadd.f32 %v2994, %v3000
        %v3031 = vadd.f32 %v2995, %v3000
        %v3032 = vadd.f32 %v2996, %v3000
        %v3033 = vadd.f32 %v2997, %v3000
        %v3034 = vmul.f32 %v3002, 0.1
        %v3035 = vmul.f32 %v3003, 0.1
        %v3036 = vmul.f32 %v3004, 0.1
        %v3037 = vmul.f32 %v3005, 0.1
        %v3038 = vmul.f32 %v3006, 0.1
        %v3039 = vmul.f32 %v3007, 0.1
        %v3040 = vmul.f32 %v3008, 0.1
        %v3041 = vmul.f32 %v3009, 0.1
        %v3042 = vmul.f32 %v3010, 0.1
        %v3043 = vmul.f32 %v3011, 0.1
        %v3044 = vmul.f32 %v3012, 0.1
        %v3045 = vmul.f32 %v3013, 0.1
        %v3046 = vmul.f32 %v3014, 0.1
        %v3047 = vmul.f32 %v3015, 0.1
        %v3048 = vmul.f32 %v3016, 0.1
        %v3049 = vmul.f32 %v3017, 0.1
        %v3050 = vmul.f32 %v3018, 0.1
        %v3051 = vmul.f32 %v3019, 0.1
        %v3052 = vmul.f32 %v3020, 0.1
        %v3053 = vmul.f32 %v3021, 0.1
        %v3054 = vmul.f32 %v3022, 0.1
        %v3055 = vmul.f32 %v3023, 0.1
        %v3056 = vmul.f32 %v3024, 0.1
        %v3057 = vmul.f32 %v3025, 0.1
        %v3058 = vmul.f32 %v3026, 0.1
        %v3059 = vmul.f32 %v3027, 0.1
        %v3060 = vmul.f32 %v3028, 0.1
        %v3061 = vmul.f32 %v3029, 0.1
        %v3062 = vmul.f32 %v3030, 0.1
        %v3063 = vmul.f32 %v3031, 0.1
        %v3064 = vmul.f32 %v3032, 0.1
        %v3065 = vmul.f32 %v3033, 0.1
        %v3066 = vmax.f32 %v3002, %v3034
        %v3067 = vmax.f32 %v3003, %v3035
        %v3068 = vmax.f32 %v3004, %v3036
        %v3069 = vmax.f32 %v3005, %v3037
        %v3070 = vmax.f32 %v3006, %v3038
        %v3071 = vmax.f32 %v3007, %v3039
        %v3072 = vmax.f32 %v3008, %v3040
        %v3073 = vmax.f32 %v3009, %v3041
        %v3074 = vmax.f32 %v3010, %v3042
        %v3075 = vmax.f32 %v3011, %v3043
        %v3076 = vmax.f32 %v3012, %v3044
        %v3077 = vmax.f32 %v3013, %v3045
        %v3078 = vmax.f32 %v3014, %v3046
        %v3079 = vmax.f32 %v3015, %v3047
        %v3080 = vmax.f32 %v3016, %v3048
        %v3081 = vmax.f32 %v3017, %v3049
        %v3082 = vmax.f32 %v3018, %v3050
        %v3083 = vmax.f32 %v3019, %v3051
        %v3084 = vmax.f32 %v3020, %v3052
        %v3085 = vmax.f32 %v3021, %v3053
        %v3086 = vmax.f32 %v3022, %v3054
        %v3087 = vmax.f32 %v3023, %v3055
        %v3088 = vmax.f32 %v3024, %v3056
        %v3089 = vmax.f32 %v3025, %v3057
        %v3090 = vmax.f32 %v3026, %v3058
        %v3091 = vmax.f32 %v3027, %v3059
        %v3092 = vmax.f32 %v3028, %v3060
        %v3093 = vmax.f32 %v3029, %v3061
        %v3094 = vmax.f32 %v3030, %v3062
        %v3095 = vmax.f32 %v3031, %v3063
        %v3096 = vmax.f32 %v3032, %v3064
        %v3097 = vmax.f32 %v3033, %v3065
        %v3098 = vld [vmem:[%s222] sm:$0xff]
        %v3099 = vld [vmem:[%s222 + $0x8] sm:$0xff]
        %v3100 = vld [vmem:[%s222 + $0x10] sm:$0xff]
        %v3101 = vld [vmem:[%s222 + $0x18] sm:$0xff]
        %v3102 = vld [vmem:[%s222 + $0x20] sm:$0xff]
        %v3103 = vld [vmem:[%s222 + $0x28] sm:$0xff]
        %v3104 = vld [vmem:[%s222 + $0x30] sm:$0xff]
        %v3105 = vld [vmem:[%s222 + $0x38] sm:$0xff]
        %v3106 = vld [vmem:[%s222 + $0x40] sm:$0xff]
        %v3107 = vld [vmem:[%s222 + $0x48] sm:$0xff]
        %v3108 = vld [vmem:[%s222 + $0x50] sm:$0xff]
        %v3109 = vld [vmem:[%s222 + $0x58] sm:$0xff]
        %v3110 = vld [vmem:[%s222 + $0x60] sm:$0xff]
        %v3111 = vld [vmem:[%s222 + $0x68] sm:$0xff]
        %v3112 = vld [vmem:[%s222 + $0x70] sm:$0xff]
        %v3113 = vld [vmem:[%s222 + $0x78] sm:$0xff]
        %v3114 = vld [vmem:[%s222 + $0x80] sm:$0xff]
        %v3115 = vld [vmem:[%s222 + $0x88] sm:$0xff]
        %v3116 = vld [vmem:[%s222 + $0x90] sm:$0xff]
        %v3117 = vld [vmem:[%s222 + $0x98] sm:$0xff]
        %v3118 = vld [vmem:[%s222 + $0xa0] sm:$0xff]
        %v3119 = vld [vmem:[%s222 + $0xa8] sm:$0xff]
        %v3120 = vld [vmem:[%s222 + $0xb0] sm:$0xff]
        %v3121 = vld [vmem:[%s222 + $0xb8] sm:$0xff]
        %v3122 = vld [vmem:[%s222 + $0xc0] sm:$0xff]
        %v3123 = vld [vmem:[%s222 + $0xc8] sm:$0xff]
        %v3124 = vld [vmem:[%s222 + $0xd0] sm:$0xff]
        %v3125 = vld [vmem:[%s222 + $0xd8] sm:$0xff]
        %v3126 = vld [vmem:[%s222 + $0xe0] sm:$0xff]
        %v3127 = vld [vmem:[%s222 + $0xe8] sm:$0xff]
        %v3128 = vld [vmem:[%s222 + $0xf0] sm:$0xff]
        %v3129 = vld [vmem:[%s222 + $0xf8] sm:$0xff]
        %v3130 = vadd.f32 %v3066, %v3098
        %v3131 = vadd.f32 %v3067, %v3099
        %v3132 = vadd.f32 %v3068, %v3100
        %v3133 = vadd.f32 %v3069, %v3101
        %v3134 = vadd.f32 %v3070, %v3102
        %v3135 = vadd.f32 %v3071, %v3103
        %v3136 = vadd.f32 %v3072, %v3104
        %v3137 = vadd.f32 %v3073, %v3105
        %v3138 = vadd.f32 %v3074, %v3106
        %v3139 = vadd.f32 %v3075, %v3107
        %v3140 = vadd.f32 %v3076, %v3108
        %v3141 = vadd.f32 %v3077, %v3109
        %v3142 = vadd.f32 %v3078, %v3110
        %v3143 = vadd.f32 %v3079, %v3111
        %v3144 = vadd.f32 %v3080, %v3112
        %v3145 = vadd.f32 %v3081, %v3113
        %v3146 = vadd.f32 %v3082, %v3114
        %v3147 = vadd.f32 %v3083, %v3115
        %v3148 = vadd.f32 %v3084, %v3116
        %v3149 = vadd.f32 %v3085, %v3117
        %v3150 = vadd.f32 %v3086, %v3118
        %v3151 = vadd.f32 %v3087, %v3119
        %v3152 = vadd.f32 %v3088, %v3120
        %v3153 = vadd.f32 %v3089, %v3121
        %v3154 = vadd.f32 %v3090, %v3122
        %v3155 = vadd.f32 %v3091, %v3123
        %v3156 = vadd.f32 %v3092, %v3124
        %v3157 = vadd.f32 %v3093, %v3125
        %v3158 = vadd.f32 %v3094, %v3126
        %v3159 = vadd.f32 %v3095, %v3127
        %v3160 = vadd.f32 %v3096, %v3128
        %v3161 = vadd.f32 %v3097, %v3129
        %3162 = vst.msk [vmem:[%s217] sm:$0xff] %vm308, %v3130
        %3163 = vst.msk [vmem:[%s217 + $0x8] sm:$0xff] %vm308, %v3131
        %3164 = vst.msk [vmem:[%s217 + $0x10] sm:$0xff] %vm308, %v3132
        %3165 = vst.msk [vmem:[%s217 + $0x18] sm:$0xff] %vm308, %v3133
        %3166 = vst.msk [vmem:[%s217 + $0x20] sm:$0xff] %vm308, %v3134
        %3167 = vst.msk [vmem:[%s217 + $0x28] sm:$0xff] %vm308, %v3135
        %3168 = vst.msk [vmem:[%s217 + $0x30] sm:$0xff] %vm308, %v3136
        %3169 = vst.msk [vmem:[%s217 + $0x38] sm:$0xff] %vm308, %v3137
        %3170 = vst.msk [vmem:[%s217 + $0x40] sm:$0xff] %vm308, %v3138
        %3171 = vst.msk [vmem:[%s217 + $0x48] sm:$0xff] %vm308, %v3139
        %3172 = vst.msk [vmem:[%s217 + $0x50] sm:$0xff] %vm308, %v3140
        %3173 = vst.msk [vmem:[%s217 + $0x58] sm:$0xff] %vm308, %v3141
        %3174 = vst.msk [vmem:[%s217 + $0x60] sm:$0xff] %vm308, %v3142
        %3175 = vst.msk [vmem:[%s217 + $0x68] sm:$0xff] %vm308, %v3143
        %3176 = vst.msk [vmem:[%s217 + $0x70] sm:$0xff] %vm308, %v3144
        %3177 = vst.msk [vmem:[%s217 + $0x78] sm:$0xff] %vm308, %v3145
        %3178 = vst.msk [vmem:[%s217 + $0x80] sm:$0xff] %vm308, %v3146
        %3179 = vst.msk [vmem:[%s217 + $0x88] sm:$0xff] %vm308, %v3147
        %3180 = vst.msk [vmem:[%s217 + $0x90] sm:$0xff] %vm308, %v3148
        %3181 = vst.msk [vmem:[%s217 + $0x98] sm:$0xff] %vm308, %v3149
        %3182 = vst.msk [vmem:[%s217 + $0xa0] sm:$0xff] %vm308, %v3150
        %3183 = vst.msk [vmem:[%s217 + $0xa8] sm:$0xff] %vm308, %v3151
        %3184 = vst.msk [vmem:[%s217 + $0xb0] sm:$0xff] %vm308, %v3152
        %3185 = vst.msk [vmem:[%s217 + $0xb8] sm:$0xff] %vm308, %v3153
        %3186 = vst.msk [vmem:[%s217 + $0xc0] sm:$0xff] %vm308, %v3154
        %3187 = vst.msk [vmem:[%s217 + $0xc8] sm:$0xff] %vm308, %v3155
        %3188 = vst.msk [vmem:[%s217 + $0xd0] sm:$0xff] %vm308, %v3156
        %3189 = vst.msk [vmem:[%s217 + $0xd8] sm:$0xff] %vm308, %v3157
        %3190 = vst.msk [vmem:[%s217 + $0xe0] sm:$0xff] %vm308, %v3158
        %3191 = vst.msk [vmem:[%s217 + $0xe8] sm:$0xff] %vm308, %v3159
        %3192 = vst.msk [vmem:[%s217 + $0xf0] sm:$0xff] %vm308, %v3160
        %3193 = vst.msk [vmem:[%s217 + $0xf8] sm:$0xff] %vm308, %v3161
        %s3194 = sand.u32 %s137, 1
        %s3195 = scalar_lea.sflag [#allocation4], %s3194
        %s3196 = sand.u32 %s137, 1
        %s3197 = smul.addr %s3196, 256
        %s3198 = scalar_lea.vmem [#allocation3], %s3197
        // Predicated region
        $region41: #{resblock_forward.3} parent=39 // pred_check
          %p3199 = pneg %p147
        $region42: #{resblock_forward.3} parent=39 // pred_check_branch
          %3201 = sbr.rel (%p3199) target = $region44
        $region43: #{resblock_forward.3} parent=39 // pred_region
          %3203 = vsyncadd %s3195, 0
          %s3204 = smul.addr %s19, 32
          %s3205 = smul.addr %s3204, 8
          %s3206 = scalar_lea.hbm %s5, %s3205
          %s3207 = sshll.u32 %s3198, 4
          %s3208 = int_to_ptr.vmem [resolvable:$true] %s3207
          %s3209 = sshll.u32 %s3206, 4
          %s3210 = int_to_ptr.hbm [resolvable:$true] %s3209
          %3215 = dma.vmem_to_hbm [thread:$0]  %s3208, 4096, %s3210, %s3195, 128, 128, 8
        $region44: #{resblock_forward.3} parent=39 // pred_fallthru
          _
      $region40: #{resblock_forward.3} parent=5 // pred_fallthru
        _
      %p3216 = scmp.le.s32.totalorder 2, %s14
      // Predicated region
      $region45: #{resblock_forward.3} parent=5 // pred_check
        %p3217 = pneg %p3216
      $region46: #{resblock_forward.3} parent=5 // pred_check_branch
        %3219 = sbr.rel (%p3217) target = $region48
      $region47: #{resblock_forward.3} parent=5 // pred_region
        %s3220 = ssub.s32 %s14, 2
        // Predicated region
        $region49: #{resblock_forward.3} parent=47 // pred_check
          %p3221 = pneg %p153
        $region50: #{resblock_forward.3} parent=47 // pred_check_branch
          %3223 = sbr.rel (%p3221) target = $region52
        $region51: #{resblock_forward.3} parent=47 // pred_region
          %s3224 = sand.u32 %s138, 1
          %s3225 = scalar_lea.sflag [#allocation4], %s3224
          %s3226 = sand.u32 %s138, 1
          %s3227 = smul.addr %s3226, 256
          %s3228 = scalar_lea.vmem [#allocation3], %s3227
          %3230 = dma.done %s3225, 4096
        $region52: #{resblock_forward.3} parent=47 // pred_fallthru
          _
      $region48: #{resblock_forward.3} parent=5 // pred_fallthru
        _
    $region6: #{resblock_forward.3} parent=1 // loop_footer
      %s18 = sadd.s32 1, %s14
    $region7: #{resblock_forward.3} parent=1 // loop_footer_branch
      %13 = sbr.rel target = $region3
    $region8: #{resblock_forward.3} parent=1 // loop_exit
      _
    %3231 = vsyncpa [#allocation4], 1
    %s3232 = scalar_lea.sflag [#allocation4], 1
    %3233 = vsyncpa %s3232, 1

// kernel: resblock_forward.2
$region0: #{resblock_forward.2}
  #allocation0 [shape = 'u32[]', space=smem, size = 0x4, offset = 0x4, fixed_abs, tag = 'smem constant byte address 0x4 - core index']
  #allocation1 [shape = 'u32[72,128]{1,0:T(1,128)}', space=vmem, size = 0x9000, scoped, tag = 'internal scratch']
  #allocation2 [shape = 'f32[304,32]{1,0:T(8,128)}', space=vmem, size = 0x26000, scoped, tag = 'scratch operand']
  %s0 = inlined_call_operand.hbm [shape: f32[2,256,64], index: 0, kind: input, shape index: {}]
  %s1 = inlined_call_operand.vmem [shape: bf16[64,32], index: 1, kind: input, shape index: {}]
  %s2 = inlined_call_operand.vmem [shape: f32[1,32], index: 2, kind: input, shape index: {}]
  %s3 = inlined_call_operand.vmem [shape: bf16[3,96,64], index: 3, kind: input, shape index: {}]
  %s4 = inlined_call_operand.vmem [shape: f32[1,64], index: 4, kind: input, shape index: {}]
  %s5 = inlined_call_operand.vmem [shape: f32[2,256,64], index: 5, kind: output, shape index: {}]
  %s6 = sld [smem:[#allocation0]]
  $region57: #{resblock_forward.2} parent=0
    _
  %s8 = ssub.s32 1, %s6
  %s9 = scalar_select 0, %s8, %s6
  $region1: #{resblock_forward.2} parent=0
    #allocation3 [shape = 'u8[262144]{0}', space=vmem, size = 0x40000, scoped, tag = 'input window, operand 0']
    #allocation4 [shape = 's32[2]{0}', space=sflag, size = 0x8, scoped, tag = 'scoped memory for resblock_forward.2']
    %10 = vsyncpa [#allocation4], 0
    %s11 = scalar_lea.sflag [#allocation4], 1
    %12 = vsyncpa %s11, 0
    loop: start=0, step=1, limit=4
    $region2: #{resblock_forward.2} parent=1 // loop_pre_header
      _
    $region3: #{resblock_forward.2} parent=1 // loop_header
      %s14 = sphi 0, %s18
      %p15 = scmp.ge.s32.totalorder %s14, 4
      %s24 = sphi 0, %s26
      %s27 = sphi 0, %s24
      %s28 = sphi 0, %s27
      %s44 = sphi 0, %s28
      %s48 = sphi 0, %s48
      %s50 = sphi 0, %s48
      %s51 = sphi 0, %s50
      %s65 = sphi 0, %s51
      %s69 = sphi 0, %s69
      %s71 = sphi 0, %s69
      %s72 = sphi 0, %s71
      %s86 = sphi 0, %s72
      %s90 = sphi 0, %s90
      %s92 = sphi 0, %s90
      %s93 = sphi 0, %s92
      %s107 = sphi 0, %s93
      %s111 = sphi 0, %s111
      %s113 = sphi 0, %s111
      %s114 = sphi 0, %s113
      %s128 = sphi 0, %s114
      %s134 = sphi 0, %s136
      %s137 = sphi 0, %s134
      %s138 = sphi 0, %s137
      %s154 = sphi 0, %s138
    $region4: #{resblock_forward.2} parent=1 // loop_header_branch
      %17 = sbr.rel (%p15) target = $region8
    $region5: #{resblock_forward.2} parent=1 // loop_body
      %s19 = ssub.s32 %s14, 1
      %s20 = ssub.s32 %s14, 2
      %s21 = sadd.s32 %s14, 1
      %s22 = ssub.s32 %s14, %s21
      %p23 = scmp.eq.s32.totalorder %s22, 0
      %s25 = sadd.s32 %s24, 1
      %s26 = scalar_select %p23, %s24, %s25
      %p29 = pneg %p23
      %p30 = scmp.eq.s32.totalorder %s14, 1
      %p31 = por %p29, %p30
      %p32 = scmp.ne.s32.totalorder %s24, %s27
      %p33 = scmp.eq.s32.totalorder %s14, 0
      %p34 = por %p32, %p33
      %p35 = scmp.ne.s32.totalorder %s24, %s27
      %p36 = scmp.eq.s32.totalorder %s19, 1
      %p37 = por %p35, %p36
      %p38 = scmp.ne.s32.totalorder %s27, %s28
      %p39 = scmp.eq.s32.totalorder %s19, 0
      %p40 = por %p38, %p39
      %p41 = scmp.ne.s32.totalorder %s27, %s28
      %p42 = scmp.eq.s32.totalorder %s20, 1
      %p43 = por %p41, %p42
      %p45 = scmp.ne.s32.totalorder %s28, %s44
      %p46 = scmp.eq.s32.totalorder %s20, 0
      %p47 = por %p45, %p46
      %s49 = sadd.s32 %s48, 1
      %p52 = scmp.eq.s32.totalorder %s14, 1
      %p53 = scmp.ne.s32.totalorder %s48, %s50
      %p54 = scmp.eq.s32.totalorder %s14, 0
      %p55 = por %p53, %p54
      %p56 = scmp.ne.s32.totalorder %s48, %s50
      %p57 = scmp.eq.s32.totalorder %s19, 1
      %p58 = por %p56, %p57
      %p59 = scmp.ne.s32.totalorder %s50, %s51
      %p60 = scmp.eq.s32.totalorder %s19, 0
      %p61 = por %p59, %p60
      %p62 = scmp.ne.s32.totalorder %s50, %s51
      %p63 = scmp.eq.s32.totalorder %s20, 1
      %p64 = por %p62, %p63
      %p66 = scmp.ne.s32.totalorder %s51, %s65
      %p67 = scmp.eq.s32.totalorder %s20, 0
      %p68 = por %p66, %p67
      %s70 = sadd.s32 %s69, 1
      %p73 = scmp.eq.s32.totalorder %s14, 1
      %p74 = scmp.ne.s32.totalorder %s69, %s71
      %p75 = scmp.eq.s32.totalorder %s14, 0
      %p76 = por %p74, %p75
      %p77 = scmp.ne.s32.totalorder %s69, %s71
      %p78 = scmp.eq.s32.totalorder %s19, 1
      %p79 = por %p77, %p78
      %p80 = scmp.ne.s32.totalorder %s71, %s72
      %p81 = scmp.eq.s32.totalorder %s19, 0
      %p82 = por %p80, %p81
      %p83 = scmp.ne.s32.totalorder %s71, %s72
      %p84 = scmp.eq.s32.totalorder %s20, 1
      %p85 = por %p83, %p84
      %p87 = scmp.ne.s32.totalorder %s72, %s86
      %p88 = scmp.eq.s32.totalorder %s20, 0
      %p89 = por %p87, %p88
      %s91 = sadd.s32 %s90, 1
      %p94 = scmp.eq.s32.totalorder %s14, 1
      %p95 = scmp.ne.s32.totalorder %s90, %s92
      %p96 = scmp.eq.s32.totalorder %s14, 0
      %p97 = por %p95, %p96
      %p98 = scmp.ne.s32.totalorder %s90, %s92
      %p99 = scmp.eq.s32.totalorder %s19, 1
      %p100 = por %p98, %p99
      %p101 = scmp.ne.s32.totalorder %s92, %s93
      %p102 = scmp.eq.s32.totalorder %s19, 0
      %p103 = por %p101, %p102
      %p104 = scmp.ne.s32.totalorder %s92, %s93
      %p105 = scmp.eq.s32.totalorder %s20, 1
      %p106 = por %p104, %p105
      %p108 = scmp.ne.s32.totalorder %s93, %s107
      %p109 = scmp.eq.s32.totalorder %s20, 0
      %p110 = por %p108, %p109
      %s112 = sadd.s32 %s111, 1
      %p115 = scmp.eq.s32.totalorder %s14, 1
      %p116 = scmp.ne.s32.totalorder %s111, %s113
      %p117 = scmp.eq.s32.totalorder %s14, 0
      %p118 = por %p116, %p117
      %p119 = scmp.ne.s32.totalorder %s111, %s113
      %p120 = scmp.eq.s32.totalorder %s19, 1
      %p121 = por %p119, %p120
      %p122 = scmp.ne.s32.totalorder %s113, %s114
      %p123 = scmp.eq.s32.totalorder %s19, 0
      %p124 = por %p122, %p123
      %p125 = scmp.ne.s32.totalorder %s113, %s114
      %p126 = scmp.eq.s32.totalorder %s20, 1
      %p127 = por %p125, %p126
      %p129 = scmp.ne.s32.totalorder %s114, %s128
      %p130 = scmp.eq.s32.totalorder %s20, 0
      %p131 = por %p129, %p130
      %s132 = ssub.s32 %s14, %s21
      %p133 = scmp.eq.s32.totalorder %s132, 0
      %s135 = sadd.s32 %s134, 1
      %s136 = scalar_select %p133, %s134, %s135
      %p139 = pneg %p133
      %p140 = scmp.eq.s32.totalorder %s14, 1
      %p141 = por %p139, %p140
      %p142 = scmp.ne.s32.totalorder %s134, %s137
      %p143 = scmp.eq.s32.totalorder %s14, 0
      %p144 = por %p142, %p143
      %p145 = scmp.ne.s32.totalorder %s134, %s137
      %p146 = scmp.eq.s32.totalorder %s19, 1
      %p147 = por %p145, %p146
      %p148 = scmp.ne.s32.totalorder %s137, %s138
      %p149 = scmp.eq.s32.totalorder %s19, 0
      %p150 = por %p148, %p149
      %p151 = scmp.ne.s32.totalorder %s137, %s138
      %p152 = scmp.eq.s32.totalorder %s20, 1
      %p153 = por %p151, %p152
      %p155 = scmp.ne.s32.totalorder %s138, %s154
      %p156 = scmp.eq.s32.totalorder %s20, 0
      %p157 = por %p155, %p156
      %p158 = scmp.le.s32.totalorder 1, %s14
      %p159 = scmp.lt.s32.totalorder %s14, 3
      %p160 = pnand %p158, %p159
      %p161 = pneg %p160
      // Predicated region
      $region9: #{resblock_forward.2} parent=5 // pred_check
        _
      $region10: #{resblock_forward.2} parent=5 // pred_check_branch
        %163 = sbr.rel (%p160) target = $region12
      $region11: #{resblock_forward.2} parent=5 // pred_region
        %s164 = ssub.s32 %s14, 1
        // Predicated region
        $region13: #{resblock_forward.2} parent=11 // pred_check
          %p165 = pneg %p61
        $region14: #{resblock_forward.2} parent=11 // pred_check_branch
          %167 = sbr.rel (%p165) target = $region16
        $region15: #{resblock_forward.2} parent=11 // pred_region
          _
        $region16: #{resblock_forward.2} parent=11 // pred_fallthru
          _
        // Predicated region
        $region17: #{resblock_forward.2} parent=11 // pred_check
          %p168 = pneg %p82
        $region18: #{resblock_forward.2} parent=11 // pred_check_branch
          %170 = sbr.rel (%p168) target = $region20
        $region19: #{resblock_forward.2} parent=11 // pred_region
          _
        $region20: #{resblock_forward.2} parent=11 // pred_fallthru
          _
        // Predicated region
        $region21: #{resblock_forward.2} parent=11 // pred_check
          %p171 = pneg %p103
        $region22: #{resblock_forward.2} parent=11 // pred_check_branch
          %173 = sbr.rel (%p171) target = $region24
        $region23: #{resblock_forward.2} parent=11 // pred_region
          _
        $region24: #{resblock_forward.2} parent=11 // pred_fallthru
          _
        // Predicated region
        $region25: #{resblock_forward.2} parent=11 // pred_check
          %p174 = pneg %p124
        $region26: #{resblock_forward.2} parent=11 // pred_check_branch
          %176 = sbr.rel (%p174) target = $region28
        $region27: #{resblock_forward.2} parent=11 // pred_region
          _
        $region28: #{resblock_forward.2} parent=11 // pred_fallthru
          _
      $region12: #{resblock_forward.2} parent=5 // pred_fallthru
        _
      %p177 = scmp.lt.s32.totalorder %s14, 2
      // Predicated region
      $region29: #{resblock_forward.2} parent=5 // pred_check
        %p178 = pneg %p177
      $region30: #{resblock_forward.2} parent=5 // pred_check_branch
        %180 = sbr.rel (%p178) target = $region32
      $region31: #{resblock_forward.2} parent=5 // pred_region
        // Predicated region
        $region33: #{resblock_forward.2} parent=31 // pred_check
          %p181 = pneg %p34
        $region34: #{resblock_forward.2} parent=31 // pred_check_branch
          %183 = sbr.rel (%p181) target = $region36
        $region35: #{resblock_forward.2} parent=31 // pred_region
          %s184 = sand.u32 %s24, 1
          %s185 = scalar_lea.sflag [#allocation4], %s184
          %s186 = sand.u32 %s24, 1
          %s187 = smul.addr %s186, 256
          %s188 = scalar_lea.vmem [#allocation3], %s187
          %190 = vsyncadd %s185, 0
          %s191 = smul.addr %s14, 32
          %s192 = smul.addr %s191, 8
          %s193 = scalar_lea.hbm %s0, %s192
          %s194 = sshll.u32 %s193, 4
          %s195 = int_to_ptr.hbm [resolvable:$true] %s194
          %s196 = sshll.u32 %s188, 4
          %s197 = int_to_ptr.vmem [resolvable:$true] %s196
          %202 = dma.hbm_to_vmem [thread:$0]  %s195, 4096, %s197, %s185, 128, 128, 8
        $region36: #{resblock_forward.2} parent=31 // pred_fallthru
          _
      $region32: #{resblock_forward.2} parent=5 // pred_fallthru
        _
      %p203 = scmp.le.s32.totalorder 1, %s14
      %p204 = scmp.lt.s32.totalorder %s14, 3
      %p205 = pnand %p203, %p204
      %p206 = pneg %p205
      // Predicated region
      $region37: #{resblock_forward.2} parent=5 // pred_check
        _
      $region38: #{resblock_forward.2} parent=5 // pred_check_branch
        %208 = sbr.rel (%p205) target = $region40
      $region39: #{resblock_forward.2} parent=5 // pred_region
        %s209 = ssub.s32 %s14, 1
        %s210 = sand.u32 %s27, 1
        %s211 = scalar_lea.sflag [#allocation4], %s210
        %s212 = sand.u32 %s27, 1
        %s213 = smul.addr %s212, 256
        %s214 = scalar_lea.vmem [#allocation3], %s213
        // Predicated region
        $region41: #{resblock_forward.2} parent=39 // pred_check
          %p215 = pneg %p40
        $region42: #{resblock_forward.2} parent=39 // pred_check_branch
          %217 = sbr.rel (%p215) target = $region44
        $region43: #{resblock_forward.2} parent=39 // pred_region
          %219 = dma.done %s211, 4096
        $region44: #{resblock_forward.2} parent=39 // pred_fallthru
          _
        %s220 = sand.u32 %s27, 1
        %s221 = scalar_lea.sflag [#allocation4], %s220
        %s222 = sand.u32 %s27, 1
        %s223 = smul.addr %s222, 256
        %s224 = scalar_lea.vmem [#allocation3], %s223
        %p225 = pneg %p40
        %p226 = pneg %p37
        %p227 = pneg %p61
        %p228 = pneg %p58
        %p229 = pneg %p82
        %p230 = pneg %p79
        %p231 = pneg %p103
        %p232 = pneg %p100
        %p233 = pneg %p124
        %p234 = pneg %p121
        %p235 = pneg %p150
        %p236 = pneg %p147
        %p237 = scmp.lt.s32.totalorder %s19, 1
        %s238 = scalar_select %p237, %s19, 1
        %s239 = smul.addr %s238, 32
        %s240 = smul.addr %s239, 8
        %s241 = scalar_lea.vmem %s5, %s240
        %p242 = scmp.lt.s32.totalorder %s19, 1
        %s243 = scalar_select %p242, %s19, 1
        %s244 = smul.addr %s243, 32
        %s245 = smul.addr %s244, 8
        %s246 = scalar_lea.vmem %s5, %s245
        %v248 = vld [vmem:[%s214] sm:$0xff]
        %v249 = vld [vmem:[%s214 + $0x8] sm:$0xff]
        %v250 = vld [vmem:[%s214 + $0x10] sm:$0xff]
        %v251 = vld [vmem:[%s214 + $0x18] sm:$0xff]
        %v252 = vld [vmem:[%s214 + $0x20] sm:$0xff]
        %v253 = vld [vmem:[%s214 + $0x28] sm:$0xff]
        %v254 = vld [vmem:[%s214 + $0x30] sm:$0xff]
        %v255 = vld [vmem:[%s214 + $0x38] sm:$0xff]
        %v256 = vld [vmem:[%s214 + $0x40] sm:$0xff]
        %v257 = vld [vmem:[%s214 + $0x48] sm:$0xff]
        %v258 = vld [vmem:[%s214 + $0x50] sm:$0xff]
        %v259 = vld [vmem:[%s214 + $0x58] sm:$0xff]
        %v260 = vld [vmem:[%s214 + $0x60] sm:$0xff]
        %v261 = vld [vmem:[%s214 + $0x68] sm:$0xff]
        %v262 = vld [vmem:[%s214 + $0x70] sm:$0xff]
        %v263 = vld [vmem:[%s214 + $0x78] sm:$0xff]
        %v264 = vld [vmem:[%s214 + $0x80] sm:$0xff]
        %v265 = vld [vmem:[%s214 + $0x88] sm:$0xff]
        %v266 = vld [vmem:[%s214 + $0x90] sm:$0xff]
        %v267 = vld [vmem:[%s214 + $0x98] sm:$0xff]
        %v268 = vld [vmem:[%s214 + $0xa0] sm:$0xff]
        %v269 = vld [vmem:[%s214 + $0xa8] sm:$0xff]
        %v270 = vld [vmem:[%s214 + $0xb0] sm:$0xff]
        %v271 = vld [vmem:[%s214 + $0xb8] sm:$0xff]
        %v272 = vld [vmem:[%s214 + $0xc0] sm:$0xff]
        %v273 = vld [vmem:[%s214 + $0xc8] sm:$0xff]
        %v274 = vld [vmem:[%s214 + $0xd0] sm:$0xff]
        %v275 = vld [vmem:[%s214 + $0xd8] sm:$0xff]
        %v276 = vld [vmem:[%s214 + $0xe0] sm:$0xff]
        %v277 = vld [vmem:[%s214 + $0xe8] sm:$0xff]
        %v278 = vld [vmem:[%s214 + $0xf0] sm:$0xff]
        %v279 = vld [vmem:[%s214 + $0xf8] sm:$0xff]
        %v280 = vpack.c.bf16 %v249, %v248
        %v281 = vpack.c.bf16 %v251, %v250
        %v282 = vpack.c.bf16 %v253, %v252
        %v283 = vpack.c.bf16 %v255, %v254
        %v284 = vpack.c.bf16 %v257, %v256
        %v285 = vpack.c.bf16 %v259, %v258
        %v286 = vpack.c.bf16 %v261, %v260
        %v287 = vpack.c.bf16 %v263, %v262
        %v288 = vpack.c.bf16 %v265, %v264
        %v289 = vpack.c.bf16 %v267, %v266
        %v290 = vpack.c.bf16 %v269, %v268
        %v291 = vpack.c.bf16 %v271, %v270
        %v292 = vpack.c.bf16 %v273, %v272
        %v293 = vpack.c.bf16 %v275, %v274
        %v294 = vpack.c.bf16 %v277, %v276
        %v295 = vpack.c.bf16 %v279, %v278
        %v296 = vld [vmem:[%s1] sm:$0xf]
        %v297 = vld [vmem:[%s1 + $0x4] sm:$0xf]
        %v298 = vld [vmem:[%s1 + $0x8] sm:$0xf]
        %v299 = vld [vmem:[%s1 + $0xc] sm:$0xf]
        %v300 = vld [vmem:[%s1 + $0x10] sm:$0xf]
        %v301 = vld [vmem:[%s1 + $0x14] sm:$0xf]
        %v302 = vld [vmem:[%s1 + $0x18] sm:$0xf]
        %v303 = vld [vmem:[%s1 + $0x1c] sm:$0xf]
        %v304 = vld [vmem:[%s2] sm:$0x1]
        %v306 = vperm.slane %v304, 0
        %v316 = vunpack.c.l.b16 %v296
        %v317 = vunpack.c.l.b16 %v297
        %v318 = vunpack.c.l.b16 %v298
        %v319 = vunpack.c.l.b16 %v299
        %v320 = vunpack.c.l.b16 %v300
        %v321 = vunpack.c.l.b16 %v301
        %v322 = vunpack.c.l.b16 %v302
        %v323 = vunpack.c.l.b16 %v303
        %v324 = vpack.c.b16 %v317, %v316
        %v325 = vpack.c.b16 %v319, %v318
        %v326 = vpack.c.b16 %v321, %v320
        %v327 = vpack.c.b16 %v323, %v322
        %vm332 = vcmask 523264
        %v334 = vsel %vm332, %v280, 0
        %v337 = vsel %vm332, %v281, 0
        %v340 = vsel %vm332, %v282, 0
        %v343 = vsel %vm332, %v283, 0
        %v346 = vsel %vm332, %v284, 0
        %v349 = vsel %vm332, %v285, 0
        %v352 = vsel %vm332, %v286, 0
        %v355 = vsel %vm332, %v287, 0
        %v358 = vsel %vm332, %v288, 0
        %v361 = vsel %vm332, %v289, 0
        %v364 = vsel %vm332, %v290, 0
        %v367 = vsel %vm332, %v291, 0
        %v370 = vsel %vm332, %v292, 0
        %v373 = vsel %vm332, %v293, 0
        %v376 = vsel %vm332, %v294, 0
        %v379 = vsel %vm332, %v295, 0
        %381 = vmatpush.bf16.msra.mxu0 0
        %382 = vmatpush.bf16.msra.mxu0 0
        %383 = vmatpush.bf16.msra.mxu0 0
        %384 = vmatpush.bf16.msra.mxu0 0
        %385 = vmatpush.bf16.msra.mxu0 %v327
        %386 = vmatpush.bf16.msra.mxu0 %v326
        %387 = vmatpush.bf16.msra.mxu0 %v325
        %388 = vmatpush.bf16.msra.mxu0 %v324
        %389 = vmatmul.bf16.gmra.mxu0 %v334
        %v390 = vpop.f32.mrf.mxu0
        %v391 = vadd.f32 %v306, %v390
        %v392 = vpop.f32.mrf.mxu0
        %v393 = vadd.f32 %v306, %v392
        %394 = vmatmul.bf16.gmra.mxu0 %v337
        %v395 = vpop.f32.mrf.mxu0
        %v396 = vadd.f32 %v306, %v395
        %v397 = vpop.f32.mrf.mxu0
        %v398 = vadd.f32 %v306, %v397
        %399 = vmatmul.bf16.gmra.mxu0 %v340
        %v400 = vpop.f32.mrf.mxu0
        %v401 = vadd.f32 %v306, %v400
        %v402 = vpop.f32.mrf.mxu0
        %v403 = vadd.f32 %v306, %v402
        %404 = vmatmul.bf16.gmra.mxu0 %v343
        %v405 = vpop.f32.mrf.mxu0
        %v406 = vadd.f32 %v306, %v405
        %v407 = vpop.f32.mrf.mxu0
        %v408 = vadd.f32 %v306, %v407
        %409 = vmatmul.bf16.gmra.mxu0 %v346
        %v410 = vpop.f32.mrf.mxu0
        %v411 = vadd.f32 %v306, %v410
        %v412 = vpop.f32.mrf.mxu0
        %v413 = vadd.f32 %v306, %v412
        %414 = vmatmul.bf16.gmra.mxu0 %v349
        %v415 = vpop.f32.mrf.mxu0
        %v416 = vadd.f32 %v306, %v415
        %v417 = vpop.f32.mrf.mxu0
        %v418 = vadd.f32 %v306, %v417
        %419 = vmatmul.bf16.gmra.mxu0 %v352
        %v420 = vpop.f32.mrf.mxu0
        %v421 = vadd.f32 %v306, %v420
        %v422 = vpop.f32.mrf.mxu0
        %v423 = vadd.f32 %v306, %v422
        %424 = vmatmul.bf16.gmra.mxu0 %v355
        %v425 = vpop.f32.mrf.mxu0
        %v426 = vadd.f32 %v306, %v425
        %v427 = vpop.f32.mrf.mxu0
        %v428 = vadd.f32 %v306, %v427
        %429 = vmatmul.bf16.gmra.mxu0 %v358
        %v430 = vpop.f32.mrf.mxu0
        %v431 = vadd.f32 %v306, %v430
        %v432 = vpop.f32.mrf.mxu0
        %v433 = vadd.f32 %v306, %v432
        %434 = vmatmul.bf16.gmra.mxu0 %v361
        %v435 = vpop.f32.mrf.mxu0
        %v436 = vadd.f32 %v306, %v435
        %v437 = vpop.f32.mrf.mxu0
        %v438 = vadd.f32 %v306, %v437
        %439 = vmatmul.bf16.gmra.mxu0 %v364
        %v440 = vpop.f32.mrf.mxu0
        %v441 = vadd.f32 %v306, %v440
        %v442 = vpop.f32.mrf.mxu0
        %v443 = vadd.f32 %v306, %v442
        %444 = vmatmul.bf16.gmra.mxu0 %v367
        %v445 = vpop.f32.mrf.mxu0
        %v446 = vadd.f32 %v306, %v445
        %v447 = vpop.f32.mrf.mxu0
        %v448 = vadd.f32 %v306, %v447
        %449 = vmatmul.bf16.gmra.mxu0 %v370
        %v450 = vpop.f32.mrf.mxu0
        %v451 = vadd.f32 %v306, %v450
        %v452 = vpop.f32.mrf.mxu0
        %v453 = vadd.f32 %v306, %v452
        %454 = vmatmul.bf16.gmra.mxu0 %v373
        %v455 = vpop.f32.mrf.mxu0
        %v456 = vadd.f32 %v306, %v455
        %v457 = vpop.f32.mrf.mxu0
        %v458 = vadd.f32 %v306, %v457
        %459 = vmatmul.bf16.gmra.mxu0 %v376
        %v460 = vpop.f32.mrf.mxu0
        %v461 = vadd.f32 %v306, %v460
        %v462 = vpop.f32.mrf.mxu0
        %v463 = vadd.f32 %v306, %v462
        %464 = vmatmul.bf16.gmra.mxu0 %v379
        %v465 = vpop.f32.mrf.mxu0
        %v466 = vadd.f32 %v306, %v465
        %v467 = vpop.f32.mrf.mxu0
        %v468 = vadd.f32 %v306, %v467
        %469 = vdwg.mxu0
        %v470 = vmul.f32 %v391, 0.1
        %v471 = vmul.f32 %v393, 0.1
        %v472 = vmul.f32 %v396, 0.1
        %v473 = vmul.f32 %v398, 0.1
        %v474 = vmul.f32 %v401, 0.1
        %v475 = vmul.f32 %v403, 0.1
        %v476 = vmul.f32 %v406, 0.1
        %v477 = vmul.f32 %v408, 0.1
        %v478 = vmul.f32 %v411, 0.1
        %v479 = vmul.f32 %v413, 0.1
        %v480 = vmul.f32 %v416, 0.1
        %v481 = vmul.f32 %v418, 0.1
        %v482 = vmul.f32 %v421, 0.1
        %v483 = vmul.f32 %v423, 0.1
        %v484 = vmul.f32 %v426, 0.1
        %v485 = vmul.f32 %v428, 0.1
        %v486 = vmul.f32 %v431, 0.1
        %v487 = vmul.f32 %v433, 0.1
        %v488 = vmul.f32 %v436, 0.1
        %v489 = vmul.f32 %v438, 0.1
        %v490 = vmul.f32 %v441, 0.1
        %v491 = vmul.f32 %v443, 0.1
        %v492 = vmul.f32 %v446, 0.1
        %v493 = vmul.f32 %v448, 0.1
        %v494 = vmul.f32 %v451, 0.1
        %v495 = vmul.f32 %v453, 0.1
        %v496 = vmul.f32 %v456, 0.1
        %v497 = vmul.f32 %v458, 0.1
        %v498 = vmul.f32 %v461, 0.1
        %v499 = vmul.f32 %v463, 0.1
        %v500 = vmul.f32 %v466, 0.1
        %v501 = vmul.f32 %v468, 0.1
        %v502 = vmax.f32 %v391, %v470
        %v503 = vmax.f32 %v393, %v471
        %v504 = vmax.f32 %v396, %v472
        %v505 = vmax.f32 %v398, %v473
        %v506 = vmax.f32 %v401, %v474
        %v507 = vmax.f32 %v403, %v475
        %v508 = vmax.f32 %v406, %v476
        %v509 = vmax.f32 %v408, %v477
        %v510 = vmax.f32 %v411, %v478
        %v511 = vmax.f32 %v413, %v479
        %v512 = vmax.f32 %v416, %v480
        %v513 = vmax.f32 %v418, %v481
        %v514 = vmax.f32 %v421, %v482
        %v515 = vmax.f32 %v423, %v483
        %v516 = vmax.f32 %v426, %v484
        %v517 = vmax.f32 %v428, %v485
        %v518 = vmax.f32 %v431, %v486
        %v519 = vmax.f32 %v433, %v487
        %v520 = vmax.f32 %v436, %v488
        %v521 = vmax.f32 %v438, %v489
        %v522 = vmax.f32 %v441, %v490
        %v523 = vmax.f32 %v443, %v491
        %v524 = vmax.f32 %v446, %v492
        %v525 = vmax.f32 %v448, %v493
        %v526 = vmax.f32 %v451, %v494
        %v527 = vmax.f32 %v453, %v495
        %v528 = vmax.f32 %v456, %v496
        %v529 = vmax.f32 %v458, %v497
        %v530 = vmax.f32 %v461, %v498
        %v531 = vmax.f32 %v463, %v499
        %v532 = vmax.f32 %v466, %v500
        %v533 = vmax.f32 %v468, %v501
        %vm534 = vcmask 261120
        %535 = vst.msk [vmem:[#allocation2] sm:$0xff] %vm534, 0.0
        %536 = vst.msk [vmem:[#allocation2 + $0x8] sm:$0xff] %vm534, 0.0
        %537 = vst.msk [vmem:[#allocation2 + $0x10] sm:$0xff] %vm534, 0.0
        %538 = vst.msk [vmem:[#allocation2 + $0x18] sm:$0xff] %vm534, 0.0
        %539 = vst.msk [vmem:[#allocation2 + $0x20] sm:$0xff] %vm534, 0.0
        %540 = vst.msk [vmem:[#allocation2 + $0x28] sm:$0xff] %vm534, 0.0
        %541 = vst.msk [vmem:[#allocation2 + $0x30] sm:$0xff] %vm534, 0.0
        %542 = vst.msk [vmem:[#allocation2 + $0x38] sm:$0xff] %vm534, 0.0
        %543 = vst.msk [vmem:[#allocation2 + $0x40] sm:$0xff] %vm534, 0.0
        %544 = vst.msk [vmem:[#allocation2 + $0x48] sm:$0xff] %vm534, 0.0
        %545 = vst.msk [vmem:[#allocation2 + $0x50] sm:$0xff] %vm534, 0.0
        %546 = vst.msk [vmem:[#allocation2 + $0x58] sm:$0xff] %vm534, 0.0
        %547 = vst.msk [vmem:[#allocation2 + $0x60] sm:$0xff] %vm534, 0.0
        %548 = vst.msk [vmem:[#allocation2 + $0x68] sm:$0xff] %vm534, 0.0
        %549 = vst.msk [vmem:[#allocation2 + $0x70] sm:$0xff] %vm534, 0.0
        %550 = vst.msk [vmem:[#allocation2 + $0x78] sm:$0xff] %vm534, 0.0
        %551 = vst.msk [vmem:[#allocation2 + $0x80] sm:$0xff] %vm534, 0.0
        %552 = vst.msk [vmem:[#allocation2 + $0x88] sm:$0xff] %vm534, 0.0
        %553 = vst.msk [vmem:[#allocation2 + $0x90] sm:$0xff] %vm534, 0.0
        %554 = vst.msk [vmem:[#allocation2 + $0x98] sm:$0xff] %vm534, 0.0
        %555 = vst.msk [vmem:[#allocation2 + $0xa0] sm:$0xff] %vm534, 0.0
        %556 = vst.msk [vmem:[#allocation2 + $0xa8] sm:$0xff] %vm534, 0.0
        %557 = vst.msk [vmem:[#allocation2 + $0xb0] sm:$0xff] %vm534, 0.0
        %558 = vst.msk [vmem:[#allocation2 + $0xb8] sm:$0xff] %vm534, 0.0
        %559 = vst.msk [vmem:[#allocation2 + $0xc0] sm:$0xff] %vm534, 0.0
        %560 = vst.msk [vmem:[#allocation2 + $0xc8] sm:$0xff] %vm534, 0.0
        %561 = vst.msk [vmem:[#allocation2 + $0xd0] sm:$0xff] %vm534, 0.0
        %562 = vst.msk [vmem:[#allocation2 + $0xd8] sm:$0xff] %vm534, 0.0
        %563 = vst.msk [vmem:[#allocation2 + $0xe0] sm:$0xff] %vm534, 0.0
        %564 = vst.msk [vmem:[#allocation2 + $0xe8] sm:$0xff] %vm534, 0.0
        %565 = vst.msk [vmem:[#allocation2 + $0xf0] sm:$0xff] %vm534, 0.0
        %566 = vst.msk [vmem:[#allocation2 + $0xf8] sm:$0xff] %vm534, 0.0
        %567 = vst.msk [vmem:[#allocation2 + $0x100] sm:$0xff] %vm534, 0.0
        %568 = vst.msk [vmem:[#allocation2 + $0x108] sm:$0xff] %vm534, 0.0
        %569 = vst.msk [vmem:[#allocation2 + $0x110] sm:$0xff] %vm534, 0.0
        %570 = vst.msk [vmem:[#allocation2 + $0x118] sm:$0xff] %vm534, 0.0
        %571 = vst.msk [vmem:[#allocation2 + $0x120] sm:$0xff] %vm534, 0.0
        %572 = vst.msk [vmem:[#allocation2 + $0x128] sm:$0xff] %vm534, 0.0
        %573 = vst.msk [vmem:[#allocation2 + $0x18] sm:$0xff] %vm534, %v502
        %574 = vst.msk [vmem:[#allocation2 + $0x20] sm:$0xff] %vm534, %v503
        %575 = vst.msk [vmem:[#allocation2 + $0x28] sm:$0xff] %vm534, %v504
        %576 = vst.msk [vmem:[#allocation2 + $0x30] sm:$0xff] %vm534, %v505
        %577 = vst.msk [vmem:[#allocation2 + $0x38] sm:$0xff] %vm534, %v506
        %578 = vst.msk [vmem:[#allocation2 + $0x40] sm:$0xff] %vm534, %v507
        %579 = vst.msk [vmem:[#allocation2 + $0x48] sm:$0xff] %vm534, %v508
        %580 = vst.msk [vmem:[#allocation2 + $0x50] sm:$0xff] %vm534, %v509
        %581 = vst.msk [vmem:[#allocation2 + $0x58] sm:$0xff] %vm534, %v510
        %582 = vst.msk [vmem:[#allocation2 + $0x60] sm:$0xff] %vm534, %v511
        %583 = vst.msk [vmem:[#allocation2 + $0x68] sm:$0xff] %vm534, %v512
        %584 = vst.msk [vmem:[#allocation2 + $0x70] sm:$0xff] %vm534, %v513
        %585 = vst.msk [vmem:[#allocation2 + $0x78] sm:$0xff] %vm534, %v514
        %586 = vst.msk [vmem:[#allocation2 + $0x80] sm:$0xff] %vm534, %v515
        %587 = vst.msk [vmem:[#allocation2 + $0x88] sm:$0xff] %vm534, %v516
        %588 = vst.msk [vmem:[#allocation2 + $0x90] sm:$0xff] %vm534, %v517
        %589 = vst.msk [vmem:[#allocation2 + $0x98] sm:$0xff] %vm534, %v518
        %590 = vst.msk [vmem:[#allocation2 + $0xa0] sm:$0xff] %vm534, %v519
        %591 = vst.msk [vmem:[#allocation2 + $0xa8] sm:$0xff] %vm534, %v520
        %592 = vst.msk [vmem:[#allocation2 + $0xb0] sm:$0xff] %vm534, %v521
        %593 = vst.msk [vmem:[#allocation2 + $0xb8] sm:$0xff] %vm534, %v522
        %594 = vst.msk [vmem:[#allocation2 + $0xc0] sm:$0xff] %vm534, %v523
        %595 = vst.msk [vmem:[#allocation2 + $0xc8] sm:$0xff] %vm534, %v524
        %596 = vst.msk [vmem:[#allocation2 + $0xd0] sm:$0xff] %vm534, %v525
        %597 = vst.msk [vmem:[#allocation2 + $0xd8] sm:$0xff] %vm534, %v526
        %598 = vst.msk [vmem:[#allocation2 + $0xe0] sm:$0xff] %vm534, %v527
        %599 = vst.msk [vmem:[#allocation2 + $0xe8] sm:$0xff] %vm534, %v528
        %600 = vst.msk [vmem:[#allocation2 + $0xf0] sm:$0xff] %vm534, %v529
        %601 = vst.msk [vmem:[#allocation2 + $0xf8] sm:$0xff] %vm534, %v530
        %602 = vst.msk [vmem:[#allocation2 + $0x100] sm:$0xff] %vm534, %v531
        %603 = vst.msk [vmem:[#allocation2 + $0x108] sm:$0xff] %vm534, %v532
        %604 = vst.msk [vmem:[#allocation2 + $0x110] sm:$0xff] %vm534, %v533
        %v605 = vlaneseq
        %v606 = vshrl.u32 %v605, 7
        %v607 = vadd.s32 %v606, 8
        %v608 = vadd.s32 %v606, 16
        %v609 = vadd.s32 %v606, 24
        %v610 = vadd.s32 %v606, 32
        %v611 = vadd.s32 %v606, 40
        %v612 = vadd.s32 %v606, 48
        %v613 = vadd.s32 %v606, 56
        %v614 = vadd.s32 %v606, 64
        %v615 = vadd.s32 %v606, 72
        %v616 = vadd.s32 %v606, 80
        %v617 = vadd.s32 %v606, 88
        %v618 = vadd.s32 %v606, 96
        %v619 = vadd.s32 %v606, 104
        %v620 = vadd.s32 %v606, 112
        %v621 = vadd.s32 %v606, 120
        %v622 = vadd.s32 %v606, 128
        %v623 = vadd.s32 %v606, 136
        %v624 = vadd.s32 %v606, 144
        %v625 = vadd.s32 %v606, 152
        %v626 = vadd.s32 %v606, 160
        %v627 = vadd.s32 %v606, 168
        %v628 = vadd.s32 %v606, 176
        %v629 = vadd.s32 %v606, 184
        %v630 = vadd.s32 %v606, 192
        %v631 = vadd.s32 %v606, 200
        %v632 = vadd.s32 %v606, 208
        %v633 = vadd.s32 %v606, 216
        %v634 = vadd.s32 %v606, 224
        %v635 = vadd.s32 %v606, 232
        %v636 = vadd.s32 %v606, 240
        %v637 = vadd.s32 %v606, 248
        %vm638 = vcmp.lt.s32.totalorder %v606, 0
        %v639 = vsub.s32 0, %v606
        %v640 = vsel %vm638, %v639, %v606
        %v641 = vshrl.u32 %v640, 4
        %v642 = vand.u32 %v640, 15
        %v643 = vsub.s32 0, %v642
        %v644 = vsel %vm638, %v643, %v642
        %vm645 = vcmp.lt.s32.totalorder %v607, 0
        %v646 = vsub.s32 0, %v607
        %v647 = vsel %vm645, %v646, %v607
        %v648 = vshrl.u32 %v647, 4
        %v649 = vand.u32 %v647, 15
        %v650 = vsub.s32 0, %v649
        %v651 = vsel %vm645, %v650, %v649
        %vm652 = vcmp.lt.s32.totalorder %v608, 0
        %v653 = vsub.s32 0, %v608
        %v654 = vsel %vm652, %v653, %v608
        %v655 = vshrl.u32 %v654, 4
        %v656 = vand.u32 %v654, 15
        %v657 = vsub.s32 0, %v656
        %v658 = vsel %vm652, %v657, %v656
        %vm659 = vcmp.lt.s32.totalorder %v609, 0
        %v660 = vsub.s32 0, %v609
        %v661 = vsel %vm659, %v660, %v609
        %v662 = vshrl.u32 %v661, 4
        %v663 = vand.u32 %v661, 15
        %v664 = vsub.s32 0, %v663
        %v665 = vsel %vm659, %v664, %v663
        %vm666 = vcmp.lt.s32.totalorder %v610, 0
        %v667 = vsub.s32 0, %v610
        %v668 = vsel %vm666, %v667, %v610
        %v669 = vshrl.u32 %v668, 4
        %v670 = vand.u32 %v668, 15
        %v671 = vsub.s32 0, %v670
        %v672 = vsel %vm666, %v671, %v670
        %vm673 = vcmp.lt.s32.totalorder %v611, 0
        %v674 = vsub.s32 0, %v611
        %v675 = vsel %vm673, %v674, %v611
        %v676 = vshrl.u32 %v675, 4
        %v677 = vand.u32 %v675, 15
        %v678 = vsub.s32 0, %v677
        %v679 = vsel %vm673, %v678, %v677
        %vm680 = vcmp.lt.s32.totalorder %v612, 0
        %v681 = vsub.s32 0, %v612
        %v682 = vsel %vm680, %v681, %v612
        %v683 = vshrl.u32 %v682, 4
        %v684 = vand.u32 %v682, 15
        %v685 = vsub.s32 0, %v684
        %v686 = vsel %vm680, %v685, %v684
        %vm687 = vcmp.lt.s32.totalorder %v613, 0
        %v688 = vsub.s32 0, %v613
        %v689 = vsel %vm687, %v688, %v613
        %v690 = vshrl.u32 %v689, 4
        %v691 = vand.u32 %v689, 15
        %v692 = vsub.s32 0, %v691
        %v693 = vsel %vm687, %v692, %v691
        %vm694 = vcmp.lt.s32.totalorder %v614, 0
        %v695 = vsub.s32 0, %v614
        %v696 = vsel %vm694, %v695, %v614
        %v697 = vshrl.u32 %v696, 4
        %v698 = vand.u32 %v696, 15
        %v699 = vsub.s32 0, %v698
        %v700 = vsel %vm694, %v699, %v698
        %vm701 = vcmp.lt.s32.totalorder %v615, 0
        %v702 = vsub.s32 0, %v615
        %v703 = vsel %vm701, %v702, %v615
        %v704 = vshrl.u32 %v703, 4
        %v705 = vand.u32 %v703, 15
        %v706 = vsub.s32 0, %v705
        %v707 = vsel %vm701, %v706, %v705
        %vm708 = vcmp.lt.s32.totalorder %v616, 0
        %v709 = vsub.s32 0, %v616
        %v710 = vsel %vm708, %v709, %v616
        %v711 = vshrl.u32 %v710, 4
        %v712 = vand.u32 %v710, 15
        %v713 = vsub.s32 0, %v712
        %v714 = vsel %vm708, %v713, %v712
        %vm715 = vcmp.lt.s32.totalorder %v617, 0
        %v716 = vsub.s32 0, %v617
        %v717 = vsel %vm715, %v716, %v617
        %v718 = vshrl.u32 %v717, 4
        %v719 = vand.u32 %v717, 15
        %v720 = vsub.s32 0, %v719
        %v721 = vsel %vm715, %v720, %v719
        %vm722 = vcmp.lt.s32.totalorder %v618, 0
        %v723 = vsub.s32 0, %v618
        %v724 = vsel %vm722, %v723, %v618
        %v725 = vshrl.u32 %v724, 4
        %v726 = vand.u32 %v724, 15
        %v727 = vsub.s32 0, %v726
        %v728 = vsel %vm722, %v727, %v726
        %vm729 = vcmp.lt.s32.totalorder %v619, 0
        %v730 = vsub.s32 0, %v619
        %v731 = vsel %vm729, %v730, %v619
        %v732 = vshrl.u32 %v731, 4
        %v733 = vand.u32 %v731, 15
        %v734 = vsub.s32 0, %v733
        %v735 = vsel %vm729, %v734, %v733
        %vm736 = vcmp.lt.s32.totalorder %v620, 0
        %v737 = vsub.s32 0, %v620
        %v738 = vsel %vm736, %v737, %v620
        %v739 = vshrl.u32 %v738, 4
        %v740 = vand.u32 %v738, 15
        %v741 = vsub.s32 0, %v740
        %v742 = vsel %vm736, %v741, %v740
        %vm743 = vcmp.lt.s32.totalorder %v621, 0
        %v744 = vsub.s32 0, %v621
        %v745 = vsel %vm743, %v744, %v621
        %v746 = vshrl.u32 %v745, 4
        %v747 = vand.u32 %v745, 15
        %v748 = vsub.s32 0, %v747
        %v749 = vsel %vm743, %v748, %v747
        %vm750 = vcmp.lt.s32.totalorder %v622, 0
        %v751 = vsub.s32 0, %v622
        %v752 = vsel %vm750, %v751, %v622
        %v753 = vshrl.u32 %v752, 4
        %v754 = vand.u32 %v752, 15
        %v755 = vsub.s32 0, %v754
        %v756 = vsel %vm750, %v755, %v754
        %vm757 = vcmp.lt.s32.totalorder %v623, 0
        %v758 = vsub.s32 0, %v623
        %v759 = vsel %vm757, %v758, %v623
        %v760 = vshrl.u32 %v759, 4
        %v761 = vand.u32 %v759, 15
        %v762 = vsub.s32 0, %v761
        %v763 = vsel %vm757, %v762, %v761
        %vm764 = vcmp.lt.s32.totalorder %v624, 0
        %v765 = vsub.s32 0, %v624
        %v766 = vsel %vm764, %v765, %v624
        %v767 = vshrl.u32 %v766, 4
        %v768 = vand.u32 %v766, 15
        %v769 = vsub.s32 0, %v768
        %v770 = vsel %vm764, %v769, %v768
        %vm771 = vcmp.lt.s32.totalorder %v625, 0
        %v772 = vsub.s32 0, %v625
        %v773 = vsel %vm771, %v772, %v625
        %v774 = vshrl.u32 %v773, 4
        %v775 = vand.u32 %v773, 15
        %v776 = vsub.s32 0, %v775
        %v777 = vsel %vm771, %v776, %v775
        %vm778 = vcmp.lt.s32.totalorder %v626, 0
        %v779 = vsub.s32 0, %v626
        %v780 = vsel %vm778, %v779, %v626
        %v781 = vshrl.u32 %v780, 4
        %v782 = vand.u32 %v780, 15
        %v783 = vsub.s32 0, %v782
        %v784 = vsel %vm778, %v783, %v782
        %vm785 = vcmp.lt.s32.totalorder %v627, 0
        %v786 = vsub.s32 0, %v627
        %v787 = vsel %vm785, %v786, %v627
        %v788 = vshrl.u32 %v787, 4
        %v789 = vand.u32 %v787, 15
        %v790 = vsub.s32 0, %v789
        %v791 = vsel %vm785, %v790, %v789
        %vm792 = vcmp.lt.s32.totalorder %v628, 0
        %v793 = vsub.s32 0, %v628
        %v794 = vsel %vm792, %v793, %v628
        %v795 = vshrl.u32 %v794, 4
        %v796 = vand.u32 %v794, 15
        %v797 = vsub.s32 0, %v796
        %v798 = vsel %vm792, %v797, %v796
        %vm799 = vcmp.lt.s32.totalorder %v629, 0
        %v800 = vsub.s32 0, %v629
        %v801 = vsel %vm799, %v800, %v629
        %v802 = vshrl.u32 %v801, 4
        %v803 = vand.u32 %v801, 15
        %v804 = vsub.s32 0, %v803
        %v805 = vsel %vm799, %v804, %v803
        %vm806 = vcmp.lt.s32.totalorder %v630, 0
        %v807 = vsub.s32 0, %v630
        %v808 = vsel %vm806, %v807, %v630
        %v809 = vshrl.u32 %v808, 4
        %v810 = vand.u32 %v808, 15
        %v811 = vsub.s32 0, %v810
        %v812 = vsel %vm806, %v811, %v810
        %vm813 = vcmp.lt.s32.totalorder %v631, 0
        %v814 = vsub.s32 0, %v631
        %v815 = vsel %vm813, %v814, %v631
        %v816 = vshrl.u32 %v815, 4
        %v817 = vand.u32 %v815, 15
        %v818 = vsub.s32 0, %v817
        %v819 = vsel %vm813, %v818, %v817
        %vm820 = vcmp.lt.s32.totalorder %v632, 0
        %v821 = vsub.s32 0, %v632
        %v822 = vsel %vm820, %v821, %v632
        %v823 = vshrl.u32 %v822, 4
        %v824 = vand.u32 %v822, 15
        %v825 = vsub.s32 0, %v824
        %v826 = vsel %vm820, %v825, %v824
        %vm827 = vcmp.lt.s32.totalorder %v633, 0
        %v828 = vsub.s32 0, %v633
        %v829 = vsel %vm827, %v828, %v633
        %v830 = vshrl.u32 %v829, 4
        %v831 = vand.u32 %v829, 15
        %v832 = vsub.s32 0, %v831
        %v833 = vsel %vm827, %v832, %v831
        %vm834 = vcmp.lt.s32.totalorder %v634, 0
        %v835 = vsub.s32 0, %v634
        %v836 = vsel %vm834, %v835, %v634
        %v837 = vshrl.u32 %v836, 4
        %v838 = vand.u32 %v836, 15
        %v839 = vsub.s32 0, %v838
        %v840 = vsel %vm834, %v839, %v838
        %vm841 = vcmp.lt.s32.totalorder %v635, 0
        %v842 = vsub.s32 0, %v635
        %v843 = vsel %vm841, %v842, %v635
        %v844 = vshrl.u32 %v843, 4
        %v845 = vand.u32 %v843, 15
        %v846 = vsub.s32 0, %v845
        %v847 = vsel %vm841, %v846, %v845
        %vm848 = vcmp.lt.s32.totalorder %v636, 0
        %v849 = vsub.s32 0, %v636
        %v850 = vsel %vm848, %v849, %v636
        %v851 = vshrl.u32 %v850, 4
        %v852 = vand.u32 %v850, 15
        %v853 = vsub.s32 0, %v852
        %v854 = vsel %vm848, %v853, %v852
        %vm855 = vcmp.lt.s32.totalorder %v637, 0
        %v856 = vsub.s32 0, %v637
        %v857 = vsel %vm855, %v856, %v637
        %v858 = vshrl.u32 %v857, 4
        %v859 = vand.u32 %v857, 15
        %v860 = vsub.s32 0, %v859
        %v861 = vsel %vm855, %v860, %v859
        %vm862 = vcmp.ne.s32.totalorder %v644, 0
        %vm863 = vcmp.ne.s32.totalorder %v651, 0
        %vm864 = vcmp.ne.s32.totalorder %v658, 0
        %vm865 = vcmp.ne.s32.totalorder %v665, 0
        %vm866 = vcmp.ne.s32.totalorder %v672, 0
        %vm867 = vcmp.ne.s32.totalorder %v679, 0
        %vm868 = vcmp.ne.s32.totalorder %v686, 0
        %vm869 = vcmp.ne.s32.totalorder %v693, 0
        %vm870 = vcmp.ne.s32.totalorder %v700, 0
        %vm871 = vcmp.ne.s32.totalorder %v707, 0
        %vm872 = vcmp.ne.s32.totalorder %v714, 0
        %vm873 = vcmp.ne.s32.totalorder %v721, 0
        %vm874 = vcmp.ne.s32.totalorder %v728, 0
        %vm875 = vcmp.ne.s32.totalorder %v735, 0
        %vm876 = vcmp.ne.s32.totalorder %v742, 0
        %vm877 = vcmp.ne.s32.totalorder %v749, 0
        %vm878 = vcmp.ne.s32.totalorder %v756, 0
        %vm879 = vcmp.ne.s32.totalorder %v763, 0
        %vm880 = vcmp.ne.s32.totalorder %v770, 0
        %vm881 = vcmp.ne.s32.totalorder %v777, 0
        %vm882 = vcmp.ne.s32.totalorder %v784, 0
        %vm883 = vcmp.ne.s32.totalorder %v791, 0
        %vm884 = vcmp.ne.s32.totalorder %v798, 0
        %vm885 = vcmp.ne.s32.totalorder %v805, 0
        %vm886 = vcmp.ne.s32.totalorder %v812, 0
        %vm887 = vcmp.ne.s32.totalorder %v819, 0
        %vm888 = vcmp.ne.s32.totalorder %v826, 0
        %vm889 = vcmp.ne.s32.totalorder %v833, 0
        %vm890 = vcmp.ne.s32.totalorder %v840, 0
        %vm891 = vcmp.ne.s32.totalorder %v847, 0
        %vm892 = vcmp.ne.s32.totalorder %v854, 0
        %vm893 = vcmp.ne.s32.totalorder %v861, 0
        %vm894 = vcmp.lt.s32.totalorder %v644, 0
        %vm895 = vcmp.lt.s32.totalorder %v651, 0
        %vm896 = vcmp.lt.s32.totalorder %v658, 0
        %vm897 = vcmp.lt.s32.totalorder %v665, 0
        %vm898 = vcmp.lt.s32.totalorder %v672, 0
        %vm899 = vcmp.lt.s32.totalorder %v679, 0
        %vm900 = vcmp.lt.s32.totalorder %v686, 0
        %vm901 = vcmp.lt.s32.totalorder %v693, 0
        %vm902 = vcmp.lt.s32.totalorder %v700, 0
        %vm903 = vcmp.lt.s32.totalorder %v707, 0
        %vm904 = vcmp.lt.s32.totalorder %v714, 0
        %vm905 = vcmp.lt.s32.totalorder %v721, 0
        %vm906 = vcmp.lt.s32.totalorder %v728, 0
        %vm907 = vcmp.lt.s32.totalorder %v735, 0
        %vm908 = vcmp.lt.s32.totalorder %v742, 0
        %vm909 = vcmp.lt.s32.totalorder %v749, 0
        %vm910 = vcmp.lt.s32.totalorder %v756, 0
        %vm911 = vcmp.lt.s32.totalorder %v763, 0
        %vm912 = vcmp.lt.s32.totalorder %v770, 0
        %vm913 = vcmp.lt.s32.totalorder %v777, 0
        %vm914 = vcmp.lt.s32.totalorder %v784, 0
        %vm915 = vcmp.lt.s32.totalorder %v791, 0
        %vm916 = vcmp.lt.s32.totalorder %v798, 0
        %vm917 = vcmp.lt.s32.totalorder %v805, 0
        %vm918 = vcmp.lt.s32.totalorder %v812, 0
        %vm919 = vcmp.lt.s32.totalorder %v819, 0
        %vm920 = vcmp.lt.s32.totalorder %v826, 0
        %vm921 = vcmp.lt.s32.totalorder %v833, 0
        %vm922 = vcmp.lt.s32.totalorder %v840, 0
        %vm923 = vcmp.lt.s32.totalorder %v847, 0
        %vm924 = vcmp.lt.s32.totalorder %v854, 0
        %vm925 = vcmp.lt.s32.totalorder %v861, 0
        %vm926 = vmand %vm894, %vm862
        %vm927 = vmand %vm895, %vm863
        %vm928 = vmand %vm896, %vm864
        %vm929 = vmand %vm897, %vm865
        %vm930 = vmand %vm898, %vm866
        %vm931 = vmand %vm899, %vm867
        %vm932 = vmand %vm900, %vm868
        %vm933 = vmand %vm901, %vm869
        %vm934 = vmand %vm902, %vm870
        %vm935 = vmand %vm903, %vm871
        %vm936 = vmand %vm904, %vm872
        %vm937 = vmand %vm905, %vm873
        %vm938 = vmand %vm906, %vm874
        %vm939 = vmand %vm907, %vm875
        %vm940 = vmand %vm908, %vm876
        %vm941 = vmand %vm909, %vm877
        %vm942 = vmand %vm910, %vm878
        %vm943 = vmand %vm911, %vm879
        %vm944 = vmand %vm912, %vm880
        %vm945 = vmand %vm913, %vm881
        %vm946 = vmand %vm914, %vm882
        %vm947 = vmand %vm915, %vm883
        %vm948 = vmand %vm916, %vm884
        %vm949 = vmand %vm917, %vm885
        %vm950 = vmand %vm918, %vm886
        %vm951 = vmand %vm919, %vm887
        %vm952 = vmand %vm920, %vm888
        %vm953 = vmand %vm921, %vm889
        %vm954 = vmand %vm922, %vm890
        %vm955 = vmand %vm923, %vm891
        %vm956 = vmand %vm924, %vm892
        %vm957 = vmand %vm925, %vm893
        %v958 = vadd.s32 %v644, 16
        %v959 = vadd.s32 %v651, 16
        %v960 = vadd.s32 %v658, 16
        %v961 = vadd.s32 %v665, 16
        %v962 = vadd.s32 %v672, 16
        %v963 = vadd.s32 %v679, 16
        %v964 = vadd.s32 %v686, 16
        %v965 = vadd.s32 %v693, 16
        %v966 = vadd.s32 %v700, 16
        %v967 = vadd.s32 %v707, 16
        %v968 = vadd.s32 %v714, 16
        %v969 = vadd.s32 %v721, 16
        %v970 = vadd.s32 %v728, 16
        %v971 = vadd.s32 %v735, 16
        %v972 = vadd.s32 %v742, 16
        %v973 = vadd.s32 %v749, 16
        %v974 = vadd.s32 %v756, 16
        %v975 = vadd.s32 %v763, 16
        %v976 = vadd.s32 %v770, 16
        %v977 = vadd.s32 %v777, 16
        %v978 = vadd.s32 %v784, 16
        %v979 = vadd.s32 %v791, 16
        %v980 = vadd.s32 %v798, 16
        %v981 = vadd.s32 %v805, 16
        %v982 = vadd.s32 %v812, 16
        %v983 = vadd.s32 %v819, 16
        %v984 = vadd.s32 %v826, 16
        %v985 = vadd.s32 %v833, 16
        %v986 = vadd.s32 %v840, 16
        %v987 = vadd.s32 %v847, 16
        %v988 = vadd.s32 %v854, 16
        %v989 = vadd.s32 %v861, 16
        %v990 = vsel %vm926, %v958, %v644
        %v991 = vsel %vm927, %v959, %v651
        %v992 = vsel %vm928, %v960, %v658
        %v993 = vsel %vm929, %v961, %v665
        %v994 = vsel %vm930, %v962, %v672
        %v995 = vsel %vm931, %v963, %v679
        %v996 = vsel %vm932, %v964, %v686
        %v997 = vsel %vm933, %v965, %v693
        %v998 = vsel %vm934, %v966, %v700
        %v999 = vsel %vm935, %v967, %v707
        %v1000 = vsel %vm936, %v968, %v714
        %v1001 = vsel %vm937, %v969, %v721
        %v1002 = vsel %vm938, %v970, %v728
        %v1003 = vsel %vm939, %v971, %v735
        %v1004 = vsel %vm940, %v972, %v742
        %v1005 = vsel %vm941, %v973, %v749
        %v1006 = vsel %vm942, %v974, %v756
        %v1007 = vsel %vm943, %v975, %v763
        %v1008 = vsel %vm944, %v976, %v770
        %v1009 = vsel %vm945, %v977, %v777
        %v1010 = vsel %vm946, %v978, %v784
        %v1011 = vsel %vm947, %v979, %v791
        %v1012 = vsel %vm948, %v980, %v798
        %v1013 = vsel %vm949, %v981, %v805
        %v1014 = vsel %vm950, %v982, %v812
        %v1015 = vsel %vm951, %v983, %v819
        %v1016 = vsel %vm952, %v984, %v826
        %v1017 = vsel %vm953, %v985, %v833
        %v1018 = vsel %vm954, %v986, %v840
        %v1019 = vsel %vm955, %v987, %v847
        %v1020 = vsel %vm956, %v988, %v854
        %v1021 = vsel %vm957, %v989, %v861
        %v1022 = vld [vmem:[#allocation2 + $0x7] sm:$0xff]
        %v1023 = vld [vmem:[#allocation2 + $0xf] sm:$0xff]
        %v1024 = vld [vmem:[#allocation2 + $0x17] sm:$0xff]
        %v1025 = vld [vmem:[#allocation2 + $0x1f] sm:$0xff]
        %v1026 = vld [vmem:[#allocation2 + $0x27] sm:$0xff]
        %v1027 = vld [vmem:[#allocation2 + $0x2f] sm:$0xff]
        %v1028 = vld [vmem:[#allocation2 + $0x37] sm:$0xff]
        %v1029 = vld [vmem:[#allocation2 + $0x3f] sm:$0xff]
        %v1030 = vld [vmem:[#allocation2 + $0x47] sm:$0xff]
        %v1031 = vld [vmem:[#allocation2 + $0x4f] sm:$0xff]
        %v1032 = vld [vmem:[#allocation2 + $0x57] sm:$0xff]
        %v1033 = vld [vmem:[#allocation2 + $0x5f] sm:$0xff]
        %v1034 = vld [vmem:[#allocation2 + $0x67] sm:$0xff]
        %v1035 = vld [vmem:[#allocation2 + $0x6f] sm:$0xff]
        %v1036 = vld [vmem:[#allocation2 + $0x77] sm:$0xff]
        %v1037 = vld [vmem:[#allocation2 + $0x7f] sm:$0xff]
        %v1038 = vld [vmem:[#allocation2 + $0x87] sm:$0xff]
        %v1039 = vld [vmem:[#allocation2 + $0x8f] sm:$0xff]
        %v1040 = vld [vmem:[#allocation2 + $0x97] sm:$0xff]
        %v1041 = vld [vmem:[#allocation2 + $0x9f] sm:$0xff]
        %v1042 = vld [vmem:[#allocation2 + $0xa7] sm:$0xff]
        %v1043 = vld [vmem:[#allocation2 + $0xaf] sm:$0xff]
        %v1044 = vld [vmem:[#allocation2 + $0xb7] sm:$0xff]
        %v1045 = vld [vmem:[#allocation2 + $0xbf] sm:$0xff]
        %v1046 = vld [vmem:[#allocation2 + $0xc7] sm:$0xff]
        %v1047 = vld [vmem:[#allocation2 + $0xcf] sm:$0xff]
        %v1048 = vld [vmem:[#allocation2 + $0xd7] sm:$0xff]
        %v1049 = vld [vmem:[#allocation2 + $0xdf] sm:$0xff]
        %v1050 = vld [vmem:[#allocation2 + $0xe7] sm:$0xff]
        %v1051 = vld [vmem:[#allocation2 + $0xef] sm:$0xff]
        %v1052 = vld [vmem:[#allocation2 + $0xf7] sm:$0xff]
        %v1053 = vld [vmem:[#allocation2 + $0xff] sm:$0xff]
        %v1054 = vld [vmem:[#allocation2 + $0x107] sm:$0xff]
        %v1055 = vld [vmem:[#allocation2 + $0x10f] sm:$0xff]
        %v1056 = vld [vmem:[#allocation2 + $0x117] sm:$0xff]
        %v1057 = vld [vmem:[#allocation2 + $0x11f] sm:$0xff]
        %1090 = vrot.lane.b32.xlu0 %v1024, 32
        %v1091 = vpop.permute.xlu0 %1090
        %1092 = vrot.lane.b32.xlu0 %v1025, 32
        %v1093 = vpop.permute.xlu0 %1092
        %1094 = vrot.lane.b32.xlu0 %v1026, 32
        %v1095 = vpop.permute.xlu0 %1094
        %1096 = vrot.lane.b32.xlu0 %v1027, 32
        %v1097 = vpop.permute.xlu0 %1096
        %1098 = vrot.lane.b32.xlu0 %v1028, 32
        %v1099 = vpop.permute.xlu0 %1098
        %1100 = vrot.lane.b32.xlu0 %v1029, 32
        %v1101 = vpop.permute.xlu0 %1100
        %1102 = vrot.lane.b32.xlu0 %v1030, 32
        %v1103 = vpop.permute.xlu0 %1102
        %1104 = vrot.lane.b32.xlu0 %v1031, 32
        %v1105 = vpop.permute.xlu0 %1104
        %1106 = vrot.lane.b32.xlu0 %v1032, 32
        %v1107 = vpop.permute.xlu0 %1106
        %1108 = vrot.lane.b32.xlu0 %v1033, 32
        %v1109 = vpop.permute.xlu0 %1108
        %1110 = vrot.lane.b32.xlu0 %v1034, 32
        %v1111 = vpop.permute.xlu0 %1110
        %1112 = vrot.lane.b32.xlu0 %v1035, 32
        %v1113 = vpop.permute.xlu0 %1112
        %1114 = vrot.lane.b32.xlu0 %v1036, 32
        %v1115 = vpop.permute.xlu0 %1114
        %1116 = vrot.lane.b32.xlu0 %v1037, 32
        %v1117 = vpop.permute.xlu0 %1116
        %1118 = vrot.lane.b32.xlu0 %v1038, 32
        %v1119 = vpop.permute.xlu0 %1118
        %1120 = vrot.lane.b32.xlu0 %v1039, 32
        %v1121 = vpop.permute.xlu0 %1120
        %1122 = vrot.lane.b32.xlu0 %v1040, 32
        %v1123 = vpop.permute.xlu0 %1122
        %1124 = vrot.lane.b32.xlu0 %v1041, 32
        %v1125 = vpop.permute.xlu0 %1124
        %1126 = vrot.lane.b32.xlu0 %v1042, 32
        %v1127 = vpop.permute.xlu0 %1126
        %1128 = vrot.lane.b32.xlu0 %v1043, 32
        %v1129 = vpop.permute.xlu0 %1128
        %1130 = vrot.lane.b32.xlu0 %v1044, 32
        %v1131 = vpop.permute.xlu0 %1130
        %1132 = vrot.lane.b32.xlu0 %v1045, 32
        %v1133 = vpop.permute.xlu0 %1132
        %1134 = vrot.lane.b32.xlu0 %v1046, 32
        %v1135 = vpop.permute.xlu0 %1134
        %1136 = vrot.lane.b32.xlu0 %v1047, 32
        %v1137 = vpop.permute.xlu0 %1136
        %1138 = vrot.lane.b32.xlu0 %v1048, 32
        %v1139 = vpop.permute.xlu0 %1138
        %1140 = vrot.lane.b32.xlu0 %v1049, 32
        %v1141 = vpop.permute.xlu0 %1140
        %1142 = vrot.lane.b32.xlu0 %v1050, 32
        %v1143 = vpop.permute.xlu0 %1142
        %1144 = vrot.lane.b32.xlu0 %v1051, 32
        %v1145 = vpop.permute.xlu0 %1144
        %1146 = vrot.lane.b32.xlu0 %v1052, 32
        %v1147 = vpop.permute.xlu0 %1146
        %1148 = vrot.lane.b32.xlu0 %v1053, 32
        %v1149 = vpop.permute.xlu0 %1148
        %1150 = vrot.lane.b32.xlu0 %v1054, 32
        %v1151 = vpop.permute.xlu0 %1150
        %1152 = vrot.lane.b32.xlu0 %v1055, 32
        %v1153 = vpop.permute.xlu0 %1152
        %1188 = vrot.lane.b32.xlu0 %v1026, 64
        %v1189 = vpop.permute.xlu0 %1188
        %1190 = vrot.lane.b32.xlu0 %v1027, 64
        %v1191 = vpop.permute.xlu0 %1190
        %1192 = vrot.lane.b32.xlu0 %v1028, 64
        %v1193 = vpop.permute.xlu0 %1192
        %1194 = vrot.lane.b32.xlu0 %v1029, 64
        %v1195 = vpop.permute.xlu0 %1194
        %1196 = vrot.lane.b32.xlu0 %v1030, 64
        %v1197 = vpop.permute.xlu0 %1196
        %1198 = vrot.lane.b32.xlu0 %v1031, 64
        %v1199 = vpop.permute.xlu0 %1198
        %1200 = vrot.lane.b32.xlu0 %v1032, 64
        %v1201 = vpop.permute.xlu0 %1200
        %1202 = vrot.lane.b32.xlu0 %v1033, 64
        %v1203 = vpop.permute.xlu0 %1202
        %1204 = vrot.lane.b32.xlu0 %v1034, 64
        %v1205 = vpop.permute.xlu0 %1204
        %1206 = vrot.lane.b32.xlu0 %v1035, 64
        %v1207 = vpop.permute.xlu0 %1206
        %1208 = vrot.lane.b32.xlu0 %v1036, 64
        %v1209 = vpop.permute.xlu0 %1208
        %1210 = vrot.lane.b32.xlu0 %v1037, 64
        %v1211 = vpop.permute.xlu0 %1210
        %1212 = vrot.lane.b32.xlu0 %v1038, 64
        %v1213 = vpop.permute.xlu0 %1212
        %1214 = vrot.lane.b32.xlu0 %v1039, 64
        %v1215 = vpop.permute.xlu0 %1214
        %1216 = vrot.lane.b32.xlu0 %v1040, 64
        %v1217 = vpop.permute.xlu0 %1216
        %1218 = vrot.lane.b32.xlu0 %v1041, 64
        %v1219 = vpop.permute.xlu0 %1218
        %1220 = vrot.lane.b32.xlu0 %v1042, 64
        %v1221 = vpop.permute.xlu0 %1220
        %1222 = vrot.lane.b32.xlu0 %v1043, 64
        %v1223 = vpop.permute.xlu0 %1222
        %1224 = vrot.lane.b32.xlu0 %v1044, 64
        %v1225 = vpop.permute.xlu0 %1224
        %1226 = vrot.lane.b32.xlu0 %v1045, 64
        %v1227 = vpop.permute.xlu0 %1226
        %1228 = vrot.lane.b32.xlu0 %v1046, 64
        %v1229 = vpop.permute.xlu0 %1228
        %1230 = vrot.lane.b32.xlu0 %v1047, 64
        %v1231 = vpop.permute.xlu0 %1230
        %1232 = vrot.lane.b32.xlu0 %v1048, 64
        %v1233 = vpop.permute.xlu0 %1232
        %1234 = vrot.lane.b32.xlu0 %v1049, 64
        %v1235 = vpop.permute.xlu0 %1234
        %1236 = vrot.lane.b32.xlu0 %v1050, 64
        %v1237 = vpop.permute.xlu0 %1236
        %1238 = vrot.lane.b32.xlu0 %v1051, 64
        %v1239 = vpop.permute.xlu0 %1238
        %1240 = vrot.lane.b32.xlu0 %v1052, 64
        %v1241 = vpop.permute.xlu0 %1240
        %1242 = vrot.lane.b32.xlu0 %v1053, 64
        %v1243 = vpop.permute.xlu0 %1242
        %1244 = vrot.lane.b32.xlu0 %v1054, 64
        %v1245 = vpop.permute.xlu0 %1244
        %1246 = vrot.lane.b32.xlu0 %v1055, 64
        %v1247 = vpop.permute.xlu0 %1246
        %1248 = vrot.lane.b32.xlu0 %v1056, 64
        %v1249 = vpop.permute.xlu0 %1248
        %1250 = vrot.lane.b32.xlu0 %v1057, 64
        %v1251 = vpop.permute.xlu0 %1250
        %v1284 = vsel %vm534, %v1022, %v1091
        %v1285 = vsel %vm534, %v1023, %v1093
        %v1286 = vsel %vm534, %v1024, %v1095
        %v1287 = vsel %vm534, %v1025, %v1097
        %v1288 = vsel %vm534, %v1026, %v1099
        %v1289 = vsel %vm534, %v1027, %v1101
        %v1290 = vsel %vm534, %v1028, %v1103
        %v1291 = vsel %vm534, %v1029, %v1105
        %v1292 = vsel %vm534, %v1030, %v1107
        %v1293 = vsel %vm534, %v1031, %v1109
        %v1294 = vsel %vm534, %v1032, %v1111
        %v1295 = vsel %vm534, %v1033, %v1113
        %v1296 = vsel %vm534, %v1034, %v1115
        %v1297 = vsel %vm534, %v1035, %v1117
        %v1298 = vsel %vm534, %v1036, %v1119
        %v1299 = vsel %vm534, %v1037, %v1121
        %v1300 = vsel %vm534, %v1038, %v1123
        %v1301 = vsel %vm534, %v1039, %v1125
        %v1302 = vsel %vm534, %v1040, %v1127
        %v1303 = vsel %vm534, %v1041, %v1129
        %v1304 = vsel %vm534, %v1042, %v1131
        %v1305 = vsel %vm534, %v1043, %v1133
        %v1306 = vsel %vm534, %v1044, %v1135
        %v1307 = vsel %vm534, %v1045, %v1137
        %v1308 = vsel %vm534, %v1046, %v1139
        %v1309 = vsel %vm534, %v1047, %v1141
        %v1310 = vsel %vm534, %v1048, %v1143
        %v1311 = vsel %vm534, %v1049, %v1145
        %v1312 = vsel %vm534, %v1050, %v1147
        %v1313 = vsel %vm534, %v1051, %v1149
        %v1314 = vsel %vm534, %v1052, %v1151
        %v1315 = vsel %vm534, %v1053, %v1153
        %v1316 = vsel %vm332, %v1284, %v1189
        %v1317 = vsel %vm332, %v1285, %v1191
        %v1318 = vsel %vm332, %v1286, %v1193
        %v1319 = vsel %vm332, %v1287, %v1195
        %v1320 = vsel %vm332, %v1288, %v1197
        %v1321 = vsel %vm332, %v1289, %v1199
        %v1322 = vsel %vm332, %v1290, %v1201
        %v1323 = vsel %vm332, %v1291, %v1203
        %v1324 = vsel %vm332, %v1292, %v1205
        %v1325 = vsel %vm332, %v1293, %v1207
        %v1326 = vsel %vm332, %v1294, %v1209
        %v1327 = vsel %vm332, %v1295, %v1211
        %v1328 = vsel %vm332, %v1296, %v1213
        %v1329 = vsel %vm332, %v1297, %v1215
        %v1330 = vsel %vm332, %v1298, %v1217
        %v1331 = vsel %vm332, %v1299, %v1219
        %v1332 = vsel %vm332, %v1300, %v1221
        %v1333 = vsel %vm332, %v1301, %v1223
        %v1334 = vsel %vm332, %v1302, %v1225
        %v1335 = vsel %vm332, %v1303, %v1227
        %v1336 = vsel %vm332, %v1304, %v1229
        %v1337 = vsel %vm332, %v1305, %v1231
        %v1338 = vsel %vm332, %v1306, %v1233
        %v1339 = vsel %vm332, %v1307, %v1235
        %v1340 = vsel %vm332, %v1308, %v1237
        %v1341 = vsel %vm332, %v1309, %v1239
        %v1342 = vsel %vm332, %v1310, %v1241
        %v1343 = vsel %vm332, %v1311, %v1243
        %v1344 = vsel %vm332, %v1312, %v1245
        %v1345 = vsel %vm332, %v1313, %v1247
        %v1346 = vsel %vm332, %v1314, %v1249
        %v1347 = vsel %vm332, %v1315, %v1251
        %v1348 = vpack.c.bf16 %v1316, %v1316
        %v1349 = vpack.c.bf16 %v1317, %v1317
        %v1350 = vpack.c.bf16 %v1318, %v1318
        %v1351 = vpack.c.bf16 %v1319, %v1319
        %v1352 = vpack.c.bf16 %v1320, %v1320
        %v1353 = vpack.c.bf16 %v1321, %v1321
        %v1354 = vpack.c.bf16 %v1322, %v1322
        %v1355 = vpack.c.bf16 %v1323, %v1323
        %v1356 = vpack.c.bf16 %v1324, %v1324
        %v1357 = vpack.c.bf16 %v1325, %v1325
        %v1358 = vpack.c.bf16 %v1326, %v1326
        %v1359 = vpack.c.bf16 %v1327, %v1327
        %v1360 = vpack.c.bf16 %v1328, %v1328
        %v1361 = vpack.c.bf16 %v1329, %v1329
        %v1362 = vpack.c.bf16 %v1330, %v1330
        %v1363 = vpack.c.bf16 %v1331, %v1331
        %v1364 = vpack.c.bf16 %v1332, %v1332
        %v1365 = vpack.c.bf16 %v1333, %v1333
        %v1366 = vpack.c.bf16 %v1334, %v1334
        %v1367 = vpack.c.bf16 %v1335, %v1335
        %v1368 = vpack.c.bf16 %v1336, %v1336
        %v1369 = vpack.c.bf16 %v1337, %v1337
        %v1370 = vpack.c.bf16 %v1338, %v1338
        %v1371 = vpack.c.bf16 %v1339, %v1339
        %v1372 = vpack.c.bf16 %v1340, %v1340
        %v1373 = vpack.c.bf16 %v1341, %v1341
        %v1374 = vpack.c.bf16 %v1342, %v1342
        %v1375 = vpack.c.bf16 %v1343, %v1343
        %v1376 = vpack.c.bf16 %v1344, %v1344
        %v1377 = vpack.c.bf16 %v1345, %v1345
        %v1378 = vpack.c.bf16 %v1346, %v1346
        %v1379 = vpack.c.bf16 %v1347, %v1347
        %vm1380 = vcmp.ge.s32.totalorder %v990, 1
        %vm1381 = vcmp.ge.s32.totalorder %v991, 1
        %vm1382 = vcmp.ge.s32.totalorder %v992, 1
        %vm1383 = vcmp.ge.s32.totalorder %v993, 1
        %vm1384 = vcmp.ge.s32.totalorder %v994, 1
        %vm1385 = vcmp.ge.s32.totalorder %v995, 1
        %vm1386 = vcmp.ge.s32.totalorder %v996, 1
        %vm1387 = vcmp.ge.s32.totalorder %v997, 1
        %vm1388 = vcmp.ge.s32.totalorder %v998, 1
        %vm1389 = vcmp.ge.s32.totalorder %v999, 1
        %vm1390 = vcmp.ge.s32.totalorder %v1000, 1
        %vm1391 = vcmp.ge.s32.totalorder %v1001, 1
        %vm1392 = vcmp.ge.s32.totalorder %v1002, 1
        %vm1393 = vcmp.ge.s32.totalorder %v1003, 1
        %vm1394 = vcmp.ge.s32.totalorder %v1004, 1
        %vm1395 = vcmp.ge.s32.totalorder %v1005, 1
        %vm1396 = vcmp.ge.s32.totalorder %v1006, 1
        %vm1397 = vcmp.ge.s32.totalorder %v1007, 1
        %vm1398 = vcmp.ge.s32.totalorder %v1008, 1
        %vm1399 = vcmp.ge.s32.totalorder %v1009, 1
        %vm1400 = vcmp.ge.s32.totalorder %v1010, 1
        %vm1401 = vcmp.ge.s32.totalorder %v1011, 1
        %vm1402 = vcmp.ge.s32.totalorder %v1012, 1
        %vm1403 = vcmp.ge.s32.totalorder %v1013, 1
        %vm1404 = vcmp.ge.s32.totalorder %v1014, 1
        %vm1405 = vcmp.ge.s32.totalorder %v1015, 1
        %vm1406 = vcmp.ge.s32.totalorder %v1016, 1
        %vm1407 = vcmp.ge.s32.totalorder %v1017, 1
        %vm1408 = vcmp.ge.s32.totalorder %v1018, 1
        %vm1409 = vcmp.ge.s32.totalorder %v1019, 1
        %vm1410 = vcmp.ge.s32.totalorder %v1020, 1
        %vm1411 = vcmp.ge.s32.totalorder %v1021, 1
        %vm1412 = vmpackc.low %vm1380, %vm1380
        %vm1413 = vmpackc.low %vm1381, %vm1381
        %vm1414 = vmpackc.low %vm1382, %vm1382
        %vm1415 = vmpackc.low %vm1383, %vm1383
        %vm1416 = vmpackc.low %vm1384, %vm1384
        %vm1417 = vmpackc.low %vm1385, %vm1385
        %vm1418 = vmpackc.low %vm1386, %vm1386
        %vm1419 = vmpackc.low %vm1387, %vm1387
        %vm1420 = vmpackc.low %vm1388, %vm1388
        %vm1421 = vmpackc.low %vm1389, %vm1389
        %vm1422 = vmpackc.low %vm1390, %vm1390
        %vm1423 = vmpackc.low %vm1391, %vm1391
        %vm1424 = vmpackc.low %vm1392, %vm1392
        %vm1425 = vmpackc.low %vm1393, %vm1393
        %vm1426 = vmpackc.low %vm1394, %vm1394
        %vm1427 = vmpackc.low %vm1395, %vm1395
        %vm1428 = vmpackc.low %vm1396, %vm1396
        %vm1429 = vmpackc.low %vm1397, %vm1397
        %vm1430 = vmpackc.low %vm1398, %vm1398
        %vm1431 = vmpackc.low %vm1399, %vm1399
        %vm1432 = vmpackc.low %vm1400, %vm1400
        %vm1433 = vmpackc.low %vm1401, %vm1401
        %vm1434 = vmpackc.low %vm1402, %vm1402
        %vm1435 = vmpackc.low %vm1403, %vm1403
        %vm1436 = vmpackc.low %vm1404, %vm1404
        %vm1437 = vmpackc.low %vm1405, %vm1405
        %vm1438 = vmpackc.low %vm1406, %vm1406
        %vm1439 = vmpackc.low %vm1407, %vm1407
        %vm1440 = vmpackc.low %vm1408, %vm1408
        %vm1441 = vmpackc.low %vm1409, %vm1409
        %vm1442 = vmpackc.low %vm1410, %vm1410
        %vm1443 = vmpackc.low %vm1411, %vm1411
        %v1444 = vsel %vm1412, %v1348, 0
        %v1445 = vsel %vm1413, %v1349, 0
        %v1446 = vsel %vm1414, %v1350, 0
        %v1447 = vsel %vm1415, %v1351, 0
        %v1448 = vsel %vm1416, %v1352, 0
        %v1449 = vsel %vm1417, %v1353, 0
        %v1450 = vsel %vm1418, %v1354, 0
        %v1451 = vsel %vm1419, %v1355, 0
        %v1452 = vsel %vm1420, %v1356, 0
        %v1453 = vsel %vm1421, %v1357, 0
        %v1454 = vsel %vm1422, %v1358, 0
        %v1455 = vsel %vm1423, %v1359, 0
        %v1456 = vsel %vm1424, %v1360, 0
        %v1457 = vsel %vm1425, %v1361, 0
        %v1458 = vsel %vm1426, %v1362, 0
        %v1459 = vsel %vm1427, %v1363, 0
        %v1460 = vsel %vm1428, %v1364, 0
        %v1461 = vsel %vm1429, %v1365, 0
        %v1462 = vsel %vm1430, %v1366, 0
        %v1463 = vsel %vm1431, %v1367, 0
        %v1464 = vsel %vm1432, %v1368, 0
        %v1465 = vsel %vm1433, %v1369, 0
        %v1466 = vsel %vm1434, %v1370, 0
        %v1467 = vsel %vm1435, %v1371, 0
        %v1468 = vsel %vm1436, %v1372, 0
        %v1469 = vsel %vm1437, %v1373, 0
        %v1470 = vsel %vm1438, %v1374, 0
        %v1471 = vsel %vm1439, %v1375, 0
        %v1472 = vsel %vm1440, %v1376, 0
        %v1473 = vsel %vm1441, %v1377, 0
        %v1474 = vsel %vm1442, %v1378, 0
        %v1475 = vsel %vm1443, %v1379, 0
        %v1476 = vld [vmem:[%s3] sm:$0xf]
        %v1477 = vld [vmem:[%s3 + $0x4] sm:$0xf]
        %v1478 = vld [vmem:[%s3 + $0x8] sm:$0xf]
        %v1479 = vld [vmem:[%s3 + $0xc] sm:$0xf]
        %v1480 = vld [vmem:[%s3 + $0x10] sm:$0xf]
        %v1481 = vld [vmem:[%s3 + $0x14] sm:$0xf]
        %v1482 = vld [vmem:[%s3 + $0x18] sm:$0xf]
        %v1483 = vld [vmem:[%s3 + $0x1c] sm:$0xf]
        %v1484 = vld [vmem:[%s3 + $0x20] sm:$0xf]
        %v1485 = vld [vmem:[%s3 + $0x24] sm:$0xf]
        %v1486 = vld [vmem:[%s3 + $0x28] sm:$0xf]
        %v1487 = vld [vmem:[%s3 + $0x2c] sm:$0xf]
        %v1488 = vld [vmem:[#allocation2 + $0x8] sm:$0xff]
        %v1489 = vld [vmem:[#allocation2 + $0x10] sm:$0xff]
        %v1490 = vld [vmem:[#allocation2 + $0x18] sm:$0xff]
        %v1491 = vld [vmem:[#allocation2 + $0x20] sm:$0xff]
        %v1492 = vld [vmem:[#allocation2 + $0x28] sm:$0xff]
        %v1493 = vld [vmem:[#allocation2 + $0x30] sm:$0xff]
        %v1494 = vld [vmem:[#allocation2 + $0x38] sm:$0xff]
        %v1495 = vld [vmem:[#allocation2 + $0x40] sm:$0xff]
        %v1496 = vld [vmem:[#allocation2 + $0x48] sm:$0xff]
        %v1497 = vld [vmem:[#allocation2 + $0x50] sm:$0xff]
        %v1498 = vld [vmem:[#allocation2 + $0x58] sm:$0xff]
        %v1499 = vld [vmem:[#allocation2 + $0x60] sm:$0xff]
        %v1500 = vld [vmem:[#allocation2 + $0x68] sm:$0xff]
        %v1501 = vld [vmem:[#allocation2 + $0x70] sm:$0xff]
        %v1502 = vld [vmem:[#allocation2 + $0x78] sm:$0xff]
        %v1503 = vld [vmem:[#allocation2 + $0x80] sm:$0xff]
        %v1504 = vld [vmem:[#allocation2 + $0x88] sm:$0xff]
        %v1505 = vld [vmem:[#allocation2 + $0x90] sm:$0xff]
        %v1506 = vld [vmem:[#allocation2 + $0x98] sm:$0xff]
        %v1507 = vld [vmem:[#allocation2 + $0xa0] sm:$0xff]
        %v1508 = vld [vmem:[#allocation2 + $0xa8] sm:$0xff]
        %v1509 = vld [vmem:[#allocation2 + $0xb0] sm:$0xff]
        %v1510 = vld [vmem:[#allocation2 + $0xb8] sm:$0xff]
        %v1511 = vld [vmem:[#allocation2 + $0xc0] sm:$0xff]
        %v1512 = vld [vmem:[#allocation2 + $0xc8] sm:$0xff]
        %v1513 = vld [vmem:[#allocation2 + $0xd0] sm:$0xff]
        %v1514 = vld [vmem:[#allocation2 + $0xd8] sm:$0xff]
        %v1515 = vld [vmem:[#allocation2 + $0xe0] sm:$0xff]
        %v1516 = vld [vmem:[#allocation2 + $0xe8] sm:$0xff]
        %v1517 = vld [vmem:[#allocation2 + $0xf0] sm:$0xff]
        %v1518 = vld [vmem:[#allocation2 + $0xf8] sm:$0xff]
        %v1519 = vld [vmem:[#allocation2 + $0x100] sm:$0xff]
        %v1520 = vld [vmem:[#allocation2 + $0x108] sm:$0xff]
        %v1521 = vld [vmem:[#allocation2 + $0x110] sm:$0xff]
        %v1522 = vld [vmem:[#allocation2 + $0x118] sm:$0xff]
        %v1523 = vld [vmem:[#allocation2 + $0x120] sm:$0xff]
        %1556 = vrot.lane.b32.xlu0 %v1490, 32
        %v1557 = vpop.permute.xlu0 %1556
        %1558 = vrot.lane.b32.xlu0 %v1491, 32
        %v1559 = vpop.permute.xlu0 %1558
        %1560 = vrot.lane.b32.xlu0 %v1492, 32
        %v1561 = vpop.permute.xlu0 %1560
        %1562 = vrot.lane.b32.xlu0 %v1493, 32
        %v1563 = vpop.permute.xlu0 %1562
        %1564 = vrot.lane.b32.xlu0 %v1494, 32
        %v1565 = vpop.permute.xlu0 %1564
        %1566 = vrot.lane.b32.xlu0 %v1495, 32
        %v1567 = vpop.permute.xlu0 %1566
        %1568 = vrot.lane.b32.xlu0 %v1496, 32
        %v1569 = vpop.permute.xlu0 %1568
        %1570 = vrot.lane.b32.xlu0 %v1497, 32
        %v1571 = vpop.permute.xlu0 %1570
        %1572 = vrot.lane.b32.xlu0 %v1498, 32
        %v1573 = vpop.permute.xlu0 %1572
        %1574 = vrot.lane.b32.xlu0 %v1499, 32
        %v1575 = vpop.permute.xlu0 %1574
        %1576 = vrot.lane.b32.xlu0 %v1500, 32
        %v1577 = vpop.permute.xlu0 %1576
        %1578 = vrot.lane.b32.xlu0 %v1501, 32
        %v1579 = vpop.permute.xlu0 %1578
        %1580 = vrot.lane.b32.xlu0 %v1502, 32
        %v1581 = vpop.permute.xlu0 %1580
        %1582 = vrot.lane.b32.xlu0 %v1503, 32
        %v1583 = vpop.permute.xlu0 %1582
        %1584 = vrot.lane.b32.xlu0 %v1504, 32
        %v1585 = vpop.permute.xlu0 %1584
        %1586 = vrot.lane.b32.xlu0 %v1505, 32
        %v1587 = vpop.permute.xlu0 %1586
        %1588 = vrot.lane.b32.xlu0 %v1506, 32
        %v1589 = vpop.permute.xlu0 %1588
        %1590 = vrot.lane.b32.xlu0 %v1507, 32
        %v1591 = vpop.permute.xlu0 %1590
        %1592 = vrot.lane.b32.xlu0 %v1508, 32
        %v1593 = vpop.permute.xlu0 %1592
        %1594 = vrot.lane.b32.xlu0 %v1509, 32
        %v1595 = vpop.permute.xlu0 %1594
        %1596 = vrot.lane.b32.xlu0 %v1510, 32
        %v1597 = vpop.permute.xlu0 %1596
        %1598 = vrot.lane.b32.xlu0 %v1511, 32
        %v1599 = vpop.permute.xlu0 %1598
        %1600 = vrot.lane.b32.xlu0 %v1512, 32
        %v1601 = vpop.permute.xlu0 %1600
        %1602 = vrot.lane.b32.xlu0 %v1513, 32
        %v1603 = vpop.permute.xlu0 %1602
        %1604 = vrot.lane.b32.xlu0 %v1514, 32
        %v1605 = vpop.permute.xlu0 %1604
        %1606 = vrot.lane.b32.xlu0 %v1515, 32
        %v1607 = vpop.permute.xlu0 %1606
        %1608 = vrot.lane.b32.xlu0 %v1516, 32
        %v1609 = vpop.permute.xlu0 %1608
        %1610 = vrot.lane.b32.xlu0 %v1517, 32
        %v1611 = vpop.permute.xlu0 %1610
        %1612 = vrot.lane.b32.xlu0 %v1518, 32
        %v1613 = vpop.permute.xlu0 %1612
        %1614 = vrot.lane.b32.xlu0 %v1519, 32
        %v1615 = vpop.permute.xlu0 %1614
        %1616 = vrot.lane.b32.xlu0 %v1520, 32
        %v1617 = vpop.permute.xlu0 %1616
        %1618 = vrot.lane.b32.xlu0 %v1521, 32
        %v1619 = vpop.permute.xlu0 %1618
        %1654 = vrot.lane.b32.xlu0 %v1492, 64
        %v1655 = vpop.permute.xlu0 %1654
        %1656 = vrot.lane.b32.xlu0 %v1493, 64
        %v1657 = vpop.permute.xlu0 %1656
        %1658 = vrot.lane.b32.xlu0 %v1494, 64
        %v1659 = vpop.permute.xlu0 %1658
        %1660 = vrot.lane.b32.xlu0 %v1495, 64
        %v1661 = vpop.permute.xlu0 %1660
        %1662 = vrot.lane.b32.xlu0 %v1496, 64
        %v1663 = vpop.permute.xlu0 %1662
        %1664 = vrot.lane.b32.xlu0 %v1497, 64
        %v1665 = vpop.permute.xlu0 %1664
        %1666 = vrot.lane.b32.xlu0 %v1498, 64
        %v1667 = vpop.permute.xlu0 %1666
        %1668 = vrot.lane.b32.xlu0 %v1499, 64
        %v1669 = vpop.permute.xlu0 %1668
        %1670 = vrot.lane.b32.xlu0 %v1500, 64
        %v1671 = vpop.permute.xlu0 %1670
        %1672 = vrot.lane.b32.xlu0 %v1501, 64
        %v1673 = vpop.permute.xlu0 %1672
        %1674 = vrot.lane.b32.xlu0 %v1502, 64
        %v1675 = vpop.permute.xlu0 %1674
        %1676 = vrot.lane.b32.xlu0 %v1503, 64
        %v1677 = vpop.permute.xlu0 %1676
        %1678 = vrot.lane.b32.xlu0 %v1504, 64
        %v1679 = vpop.permute.xlu0 %1678
        %1680 = vrot.lane.b32.xlu0 %v1505, 64
        %v1681 = vpop.permute.xlu0 %1680
        %1682 = vrot.lane.b32.xlu0 %v1506, 64
        %v1683 = vpop.permute.xlu0 %1682
        %1684 = vrot.lane.b32.xlu0 %v1507, 64
        %v1685 = vpop.permute.xlu0 %1684
        %1686 = vrot.lane.b32.xlu0 %v1508, 64
        %v1687 = vpop.permute.xlu0 %1686
        %1688 = vrot.lane.b32.xlu0 %v1509, 64
        %v1689 = vpop.permute.xlu0 %1688
        %1690 = vrot.lane.b32.xlu0 %v1510, 64
        %v1691 = vpop.permute.xlu0 %1690
        %1692 = vrot.lane.b32.xlu0 %v1511, 64
        %v1693 = vpop.permute.xlu0 %1692
        %1694 = vrot.lane.b32.xlu0 %v1512, 64
        %v1695 = vpop.permute.xlu0 %1694
        %1696 = vrot.lane.b32.xlu0 %v1513, 64
        %v1697 = vpop.permute.xlu0 %1696
        %1698 = vrot.lane.b32.xlu0 %v1514, 64
        %v1699 = vpop.permute.xlu0 %1698
        %1700 = vrot.lane.b32.xlu0 %v1515, 64
        %v1701 = vpop.permute.xlu0 %1700
        %1702 = vrot.lane.b32.xlu0 %v1516, 64
        %v1703 = vpop.permute.xlu0 %1702
        %1704 = vrot.lane.b32.xlu0 %v1517, 64
        %v1705 = vpop.permute.xlu0 %1704
        %1706 = vrot.lane.b32.xlu0 %v1518, 64
        %v1707 = vpop.permute.xlu0 %1706
        %1708 = vrot.lane.b32.xlu0 %v1519, 64
        %v1709 = vpop.permute.xlu0 %1708
        %1710 = vrot.lane.b32.xlu0 %v1520, 64
        %v1711 = vpop.permute.xlu0 %1710
        %1712 = vrot.lane.b32.xlu0 %v1521, 64
        %v1713 = vpop.permute.xlu0 %1712
        %1714 = vrot.lane.b32.xlu0 %v1522, 64
        %v1715 = vpop.permute.xlu0 %1714
        %1716 = vrot.lane.b32.xlu0 %v1523, 64
        %v1717 = vpop.permute.xlu0 %1716
        %v1750 = vsel %vm534, %v1488, %v1557
        %v1751 = vsel %vm534, %v1489, %v1559
        %v1752 = vsel %vm534, %v1490, %v1561
        %v1753 = vsel %vm534, %v1491, %v1563
        %v1754 = vsel %vm534, %v1492, %v1565
        %v1755 = vsel %vm534, %v1493, %v1567
        %v1756 = vsel %vm534, %v1494, %v1569
        %v1757 = vsel %vm534, %v1495, %v1571
        %v1758 = vsel %vm534, %v1496, %v1573
        %v1759 = vsel %vm534, %v1497, %v1575
        %v1760 = vsel %vm534, %v1498, %v1577
        %v1761 = vsel %vm534, %v1499, %v1579
        %v1762 = vsel %vm534, %v1500, %v1581
        %v1763 = vsel %vm534, %v1501, %v1583
        %v1764 = vsel %vm534, %v1502, %v1585
        %v1765 = vsel %vm534, %v1503, %v1587
        %v1766 = vsel %vm534, %v1504, %v1589
        %v1767 = vsel %vm534, %v1505, %v1591
        %v1768 = vsel %vm534, %v1506, %v1593
        %v1769 = vsel %vm534, %v1507, %v1595
        %v1770 = vsel %vm534, %v1508, %v1597
        %v1771 = vsel %vm534, %v1509, %v1599
        %v1772 = vsel %vm534, %v1510, %v1601
        %v1773 = vsel %vm534, %v1511, %v1603
        %v1774 = vsel %vm534, %v1512, %v1605
        %v1775 = vsel %vm534, %v1513, %v1607
        %v1776 = vsel %vm534, %v1514, %v1609
        %v1777 = vsel %vm534, %v1515, %v1611
        %v1778 = vsel %vm534, %v1516, %v1613
        %v1779 = vsel %vm534, %v1517, %v1615
        %v1780 = vsel %vm534, %v1518, %v1617
        %v1781 = vsel %vm534, %v1519, %v1619
        %v1782 = vsel %vm332, %v1750, %v1655
        %v1783 = vsel %vm332, %v1751, %v1657
        %v1784 = vsel %vm332, %v1752, %v1659
        %v1785 = vsel %vm332, %v1753, %v1661
        %v1786 = vsel %vm332, %v1754, %v1663
        %v1787 = vsel %vm332, %v1755, %v1665
        %v1788 = vsel %vm332, %v1756, %v1667
        %v1789 = vsel %vm332, %v1757, %v1669
        %v1790 = vsel %vm332, %v1758, %v1671
        %v1791 = vsel %vm332, %v1759, %v1673
        %v1792 = vsel %vm332, %v1760, %v1675
        %v1793 = vsel %vm332, %v1761, %v1677
        %v1794 = vsel %vm332, %v1762, %v1679
        %v1795 = vsel %vm332, %v1763, %v1681
        %v1796 = vsel %vm332, %v1764, %v1683
        %v1797 = vsel %vm332, %v1765, %v1685
        %v1798 = vsel %vm332, %v1766, %v1687
        %v1799 = vsel %vm332, %v1767, %v1689
        %v1800 = vsel %vm332, %v1768, %v1691
        %v1801 = vsel %vm332, %v1769, %v1693
        %v1802 = vsel %vm332, %v1770, %v1695
        %v1803 = vsel %vm332, %v1771, %v1697
        %v1804 = vsel %vm332, %v1772, %v1699
        %v1805 = vsel %vm332, %v1773, %v1701
        %v1806 = vsel %vm332, %v1774, %v1703
        %v1807 = vsel %vm332, %v1775, %v1705
        %v1808 = vsel %vm332, %v1776, %v1707
        %v1809 = vsel %vm332, %v1777, %v1709
        %v1810 = vsel %vm332, %v1778, %v1711
        %v1811 = vsel %vm332, %v1779, %v1713
        %v1812 = vsel %vm332, %v1780, %v1715
        %v1813 = vsel %vm332, %v1781, %v1717
        %v1814 = vpack.c.bf16 %v1783, %v1782
        %v1815 = vpack.c.bf16 %v1785, %v1784
        %v1816 = vpack.c.bf16 %v1787, %v1786
        %v1817 = vpack.c.bf16 %v1789, %v1788
        %v1818 = vpack.c.bf16 %v1791, %v1790
        %v1819 = vpack.c.bf16 %v1793, %v1792
        %v1820 = vpack.c.bf16 %v1795, %v1794
        %v1821 = vpack.c.bf16 %v1797, %v1796
        %v1822 = vpack.c.bf16 %v1799, %v1798
        %v1823 = vpack.c.bf16 %v1801, %v1800
        %v1824 = vpack.c.bf16 %v1803, %v1802
        %v1825 = vpack.c.bf16 %v1805, %v1804
        %v1826 = vpack.c.bf16 %v1807, %v1806
        %v1827 = vpack.c.bf16 %v1809, %v1808
        %v1828 = vpack.c.bf16 %v1811, %v1810
        %v1829 = vpack.c.bf16 %v1813, %v1812
        %s1830 = scalar_lea.vmem %s3, 48
        %v1831 = vld [vmem:[%s1830] sm:$0xf]
        %v1832 = vld [vmem:[%s1830 + $0x4] sm:$0xf]
        %v1833 = vld [vmem:[%s1830 + $0x8] sm:$0xf]
        %v1834 = vld [vmem:[%s1830 + $0xc] sm:$0xf]
        %v1835 = vld [vmem:[%s1830 + $0x10] sm:$0xf]
        %v1836 = vld [vmem:[%s1830 + $0x14] sm:$0xf]
        %v1837 = vld [vmem:[%s1830 + $0x18] sm:$0xf]
        %v1838 = vld [vmem:[%s1830 + $0x1c] sm:$0xf]
        %v1839 = vld [vmem:[%s1830 + $0x20] sm:$0xf]
        %v1840 = vld [vmem:[%s1830 + $0x24] sm:$0xf]
        %v1841 = vld [vmem:[%s1830 + $0x28] sm:$0xf]
        %v1842 = vld [vmem:[%s1830 + $0x2c] sm:$0xf]
        %v1855 = vunpack.c.l.b16 %v1831
        %v1856 = vunpack.c.l.b16 %v1832
        %v1857 = vunpack.c.l.b16 %v1833
        %v1858 = vunpack.c.l.b16 %v1834
        %v1859 = vunpack.c.l.b16 %v1835
        %v1860 = vunpack.c.l.b16 %v1836
        %v1861 = vunpack.c.l.b16 %v1837
        %v1862 = vunpack.c.l.b16 %v1838
        %v1863 = vunpack.c.l.b16 %v1839
        %v1864 = vunpack.c.l.b16 %v1840
        %v1865 = vunpack.c.l.b16 %v1841
        %v1866 = vunpack.c.l.b16 %v1842
        %v1867 = vpack.c.b16 %v1856, %v1855
        %v1868 = vpack.c.b16 %v1858, %v1857
        %v1869 = vpack.c.b16 %v1860, %v1859
        %v1870 = vpack.c.b16 %v1862, %v1861
        %v1871 = vpack.c.b16 %v1864, %v1863
        %v1872 = vpack.c.b16 %v1866, %v1865
        %vm1879 = vcmask 785408
        %v1881 = vsel %vm1879, %v1814, 0
        %v1884 = vsel %vm1879, %v1815, 0
        %v1887 = vsel %vm1879, %v1816, 0
        %v1890 = vsel %vm1879, %v1817, 0
        %v1893 = vsel %vm1879, %v1818, 0
        %v1896 = vsel %vm1879, %v1819, 0
        %v1899 = vsel %vm1879, %v1820, 0
        %v1902 = vsel %vm1879, %v1821, 0
        %v1905 = vsel %vm1879, %v1822, 0
        %v1908 = vsel %vm1879, %v1823, 0
        %v1911 = vsel %vm1879, %v1824, 0
        %v1914 = vsel %vm1879, %v1825, 0
        %v1917 = vsel %vm1879, %v1826, 0
        %v1920 = vsel %vm1879, %v1827, 0
        %v1923 = vsel %vm1879, %v1828, 0
        %v1926 = vsel %vm1879, %v1829, 0
        %1928 = vmatpush.bf16.msra.mxu0 0
        %1929 = vmatpush.bf16.msra.mxu0 0
        %1930 = vmatpush.bf16.msra.mxu0 %v1872
        %1931 = vmatpush.bf16.msra.mxu0 %v1871
        %1932 = vmatpush.bf16.msra.mxu0 %v1870
        %1933 = vmatpush.bf16.msra.mxu0 %v1869
        %1934 = vmatpush.bf16.msra.mxu0 %v1868
        %1935 = vmatpush.bf16.msra.mxu0 %v1867
        %1936 = vmatmul.bf16.gmra.mxu0 %v1881
        %v1937 = vpop.f32.mrf.mxu0
        %v1938 = vadd.f32 0.0, %v1937
        %v1939 = vpop.f32.mrf.mxu0
        %v1940 = vadd.f32 0.0, %v1939
        %1941 = vmatmul.bf16.gmra.mxu0 %v1884
        %v1942 = vpop.f32.mrf.mxu0
        %v1943 = vadd.f32 0.0, %v1942
        %v1944 = vpop.f32.mrf.mxu0
        %v1945 = vadd.f32 0.0, %v1944
        %1946 = vmatmul.bf16.gmra.mxu0 %v1887
        %v1947 = vpop.f32.mrf.mxu0
        %v1948 = vadd.f32 0.0, %v1947
        %v1949 = vpop.f32.mrf.mxu0
        %v1950 = vadd.f32 0.0, %v1949
        %1951 = vmatmul.bf16.gmra.mxu0 %v1890
        %v1952 = vpop.f32.mrf.mxu0
        %v1953 = vadd.f32 0.0, %v1952
        %v1954 = vpop.f32.mrf.mxu0
        %v1955 = vadd.f32 0.0, %v1954
        %1956 = vmatmul.bf16.gmra.mxu0 %v1893
        %v1957 = vpop.f32.mrf.mxu0
        %v1958 = vadd.f32 0.0, %v1957
        %v1959 = vpop.f32.mrf.mxu0
        %v1960 = vadd.f32 0.0, %v1959
        %1961 = vmatmul.bf16.gmra.mxu0 %v1896
        %v1962 = vpop.f32.mrf.mxu0
        %v1963 = vadd.f32 0.0, %v1962
        %v1964 = vpop.f32.mrf.mxu0
        %v1965 = vadd.f32 0.0, %v1964
        %1966 = vmatmul.bf16.gmra.mxu0 %v1899
        %v1967 = vpop.f32.mrf.mxu0
        %v1968 = vadd.f32 0.0, %v1967
        %v1969 = vpop.f32.mrf.mxu0
        %v1970 = vadd.f32 0.0, %v1969
        %1971 = vmatmul.bf16.gmra.mxu0 %v1902
        %v1972 = vpop.f32.mrf.mxu0
        %v1973 = vadd.f32 0.0, %v1972
        %v1974 = vpop.f32.mrf.mxu0
        %v1975 = vadd.f32 0.0, %v1974
        %1976 = vmatmul.bf16.gmra.mxu0 %v1905
        %v1977 = vpop.f32.mrf.mxu0
        %v1978 = vadd.f32 0.0, %v1977
        %v1979 = vpop.f32.mrf.mxu0
        %v1980 = vadd.f32 0.0, %v1979
        %1981 = vmatmul.bf16.gmra.mxu0 %v1908
        %v1982 = vpop.f32.mrf.mxu0
        %v1983 = vadd.f32 0.0, %v1982
        %v1984 = vpop.f32.mrf.mxu0
        %v1985 = vadd.f32 0.0, %v1984
        %1986 = vmatmul.bf16.gmra.mxu0 %v1911
        %v1987 = vpop.f32.mrf.mxu0
        %v1988 = vadd.f32 0.0, %v1987
        %v1989 = vpop.f32.mrf.mxu0
        %v1990 = vadd.f32 0.0, %v1989
        %1991 = vmatmul.bf16.gmra.mxu0 %v1914
        %v1992 = vpop.f32.mrf.mxu0
        %v1993 = vadd.f32 0.0, %v1992
        %v1994 = vpop.f32.mrf.mxu0
        %v1995 = vadd.f32 0.0, %v1994
        %1996 = vmatmul.bf16.gmra.mxu0 %v1917
        %v1997 = vpop.f32.mrf.mxu0
        %v1998 = vadd.f32 0.0, %v1997
        %v1999 = vpop.f32.mrf.mxu0
        %v2000 = vadd.f32 0.0, %v1999
        %2001 = vmatmul.bf16.gmra.mxu0 %v1920
        %v2002 = vpop.f32.mrf.mxu0
        %v2003 = vadd.f32 0.0, %v2002
        %v2004 = vpop.f32.mrf.mxu0
        %v2005 = vadd.f32 0.0, %v2004
        %2006 = vmatmul.bf16.gmra.mxu0 %v1923
        %v2007 = vpop.f32.mrf.mxu0
        %v2008 = vadd.f32 0.0, %v2007
        %v2009 = vpop.f32.mrf.mxu0
        %v2010 = vadd.f32 0.0, %v2009
        %2011 = vmatmul.bf16.gmra.mxu0 %v1926
        %v2012 = vpop.f32.mrf.mxu0
        %v2013 = vadd.f32 0.0, %v2012
        %v2014 = vpop.f32.mrf.mxu0
        %v2015 = vadd.f32 0.0, %v2014
        %2016 = vdwg.mxu0
        %v2049 = vunpack.c.l.b16 %v1444
        %v2050 = vunpack.c.l.b16 %v1445
        %v2051 = vunpack.c.l.b16 %v1446
        %v2052 = vunpack.c.l.b16 %v1447
        %v2053 = vunpack.c.l.b16 %v1448
        %v2054 = vunpack.c.l.b16 %v1449
        %v2055 = vunpack.c.l.b16 %v1450
        %v2056 = vunpack.c.l.b16 %v1451
        %v2057 = vunpack.c.l.b16 %v1452
        %v2058 = vunpack.c.l.b16 %v1453
        %v2059 = vunpack.c.l.b16 %v1454
        %v2060 = vunpack.c.l.b16 %v1455
        %v2061 = vunpack.c.l.b16 %v1456
        %v2062 = vunpack.c.l.b16 %v1457
        %v2063 = vunpack.c.l.b16 %v1458
        %v2064 = vunpack.c.l.b16 %v1459
        %v2065 = vunpack.c.l.b16 %v1460
        %v2066 = vunpack.c.l.b16 %v1461
        %v2067 = vunpack.c.l.b16 %v1462
        %v2068 = vunpack.c.l.b16 %v1463
        %v2069 = vunpack.c.l.b16 %v1464
        %v2070 = vunpack.c.l.b16 %v1465
        %v2071 = vunpack.c.l.b16 %v1466
        %v2072 = vunpack.c.l.b16 %v1467
        %v2073 = vunpack.c.l.b16 %v1468
        %v2074 = vunpack.c.l.b16 %v1469
        %v2075 = vunpack.c.l.b16 %v1470
        %v2076 = vunpack.c.l.b16 %v1471
        %v2077 = vunpack.c.l.b16 %v1472
        %v2078 = vunpack.c.l.b16 %v1473
        %v2079 = vunpack.c.l.b16 %v1474
        %v2080 = vunpack.c.l.b16 %v1475
        %v2081 = vpack.c.b16 %v2050, %v2049
        %v2082 = vpack.c.b16 %v2052, %v2051
        %v2083 = vpack.c.b16 %v2054, %v2053
        %v2084 = vpack.c.b16 %v2056, %v2055
        %v2085 = vpack.c.b16 %v2058, %v2057
        %v2086 = vpack.c.b16 %v2060, %v2059
        %v2087 = vpack.c.b16 %v2062, %v2061
        %v2088 = vpack.c.b16 %v2064, %v2063
        %v2089 = vpack.c.b16 %v2066, %v2065
        %v2090 = vpack.c.b16 %v2068, %v2067
        %v2091 = vpack.c.b16 %v2070, %v2069
        %v2092 = vpack.c.b16 %v2072, %v2071
        %v2093 = vpack.c.b16 %v2074, %v2073
        %v2094 = vpack.c.b16 %v2076, %v2075
        %v2095 = vpack.c.b16 %v2078, %v2077
        %v2096 = vpack.c.b16 %v2080, %v2079
        %v2109 = vunpack.c.l.b16 %v1476
        %v2110 = vunpack.c.l.b16 %v1477
        %v2111 = vunpack.c.l.b16 %v1478
        %v2112 = vunpack.c.l.b16 %v1479
        %v2113 = vunpack.c.l.b16 %v1480
        %v2114 = vunpack.c.l.b16 %v1481
        %v2115 = vunpack.c.l.b16 %v1482
        %v2116 = vunpack.c.l.b16 %v1483
        %v2117 = vunpack.c.l.b16 %v1484
        %v2118 = vunpack.c.l.b16 %v1485
        %v2119 = vunpack.c.l.b16 %v1486
        %v2120 = vunpack.c.l.b16 %v1487
        %v2121 = vpack.c.b16 %v2110, %v2109
        %v2122 = vpack.c.b16 %v2112, %v2111
        %v2123 = vpack.c.b16 %v2114, %v2113
        %v2124 = vpack.c.b16 %v2116, %v2115
        %v2125 = vpack.c.b16 %v2118, %v2117
        %v2126 = vpack.c.b16 %v2120, %v2119
        %v2134 = vsel %vm1879, %v2081, 0
        %v2137 = vsel %vm1879, %v2082, 0
        %v2140 = vsel %vm1879, %v2083, 0
        %v2143 = vsel %vm1879, %v2084, 0
        %v2146 = vsel %vm1879, %v2085, 0
        %v2149 = vsel %vm1879, %v2086, 0
        %v2152 = vsel %vm1879, %v2087, 0
        %v2155 = vsel %vm1879, %v2088, 0
        %v2158 = vsel %vm1879, %v2089, 0
        %v2161 = vsel %vm1879, %v2090, 0
        %v2164 = vsel %vm1879, %v2091, 0
        %v2167 = vsel %vm1879, %v2092, 0
        %v2170 = vsel %vm1879, %v2093, 0
        %v2173 = vsel %vm1879, %v2094, 0
        %v2176 = vsel %vm1879, %v2095, 0
        %v2179 = vsel %vm1879, %v2096, 0
        %2181 = vmatpush.bf16.msra.mxu0 0
        %2182 = vmatpush.bf16.msra.mxu0 0
        %2183 = vmatpush.bf16.msra.mxu0 %v2126
        %2184 = vmatpush.bf16.msra.mxu0 %v2125
        %2185 = vmatpush.bf16.msra.mxu0 %v2124
        %2186 = vmatpush.bf16.msra.mxu0 %v2123
        %2187 = vmatpush.bf16.msra.mxu0 %v2122
        %2188 = vmatpush.bf16.msra.mxu0 %v2121
        %2189 = vmatmul.bf16.gmra.mxu0 %v2134
        %v2190 = vpop.f32.mrf.mxu0
        %v2191 = vadd.f32 %v1938, %v2190
        %v2192 = vpop.f32.mrf.mxu0
        %v2193 = vadd.f32 %v1940, %v2192
        %2194 = vmatmul.bf16.gmra.mxu0 %v2137
        %v2195 = vpop.f32.mrf.mxu0
        %v2196 = vadd.f32 %v1943, %v2195
        %v2197 = vpop.f32.mrf.mxu0
        %v2198 = vadd.f32 %v1945, %v2197
        %2199 = vmatmul.bf16.gmra.mxu0 %v2140
        %v2200 = vpop.f32.mrf.mxu0
        %v2201 = vadd.f32 %v1948, %v2200
        %v2202 = vpop.f32.mrf.mxu0
        %v2203 = vadd.f32 %v1950, %v2202
        %2204 = vmatmul.bf16.gmra.mxu0 %v2143
        %v2205 = vpop.f32.mrf.mxu0
        %v2206 = vadd.f32 %v1953, %v2205
        %v2207 = vpop.f32.mrf.mxu0
        %v2208 = vadd.f32 %v1955, %v2207
        %2209 = vmatmul.bf16.gmra.mxu0 %v2146
        %v2210 = vpop.f32.mrf.mxu0
        %v2211 = vadd.f32 %v1958, %v2210
        %v2212 = vpop.f32.mrf.mxu0
        %v2213 = vadd.f32 %v1960, %v2212
        %2214 = vmatmul.bf16.gmra.mxu0 %v2149
        %v2215 = vpop.f32.mrf.mxu0
        %v2216 = vadd.f32 %v1963, %v2215
        %v2217 = vpop.f32.mrf.mxu0
        %v2218 = vadd.f32 %v1965, %v2217
        %2219 = vmatmul.bf16.gmra.mxu0 %v2152
        %v2220 = vpop.f32.mrf.mxu0
        %v2221 = vadd.f32 %v1968, %v2220
        %v2222 = vpop.f32.mrf.mxu0
        %v2223 = vadd.f32 %v1970, %v2222
        %2224 = vmatmul.bf16.gmra.mxu0 %v2155
        %v2225 = vpop.f32.mrf.mxu0
        %v2226 = vadd.f32 %v1973, %v2225
        %v2227 = vpop.f32.mrf.mxu0
        %v2228 = vadd.f32 %v1975, %v2227
        %2229 = vmatmul.bf16.gmra.mxu0 %v2158
        %v2230 = vpop.f32.mrf.mxu0
        %v2231 = vadd.f32 %v1978, %v2230
        %v2232 = vpop.f32.mrf.mxu0
        %v2233 = vadd.f32 %v1980, %v2232
        %2234 = vmatmul.bf16.gmra.mxu0 %v2161
        %v2235 = vpop.f32.mrf.mxu0
        %v2236 = vadd.f32 %v1983, %v2235
        %v2237 = vpop.f32.mrf.mxu0
        %v2238 = vadd.f32 %v1985, %v2237
        %2239 = vmatmul.bf16.gmra.mxu0 %v2164
        %v2240 = vpop.f32.mrf.mxu0
        %v2241 = vadd.f32 %v1988, %v2240
        %v2242 = vpop.f32.mrf.mxu0
        %v2243 = vadd.f32 %v1990, %v2242
        %2244 = vmatmul.bf16.gmra.mxu0 %v2167
        %v2245 = vpop.f32.mrf.mxu0
        %v2246 = vadd.f32 %v1993, %v2245
        %v2247 = vpop.f32.mrf.mxu0
        %v2248 = vadd.f32 %v1995, %v2247
        %2249 = vmatmul.bf16.gmra.mxu0 %v2170
        %v2250 = vpop.f32.mrf.mxu0
        %v2251 = vadd.f32 %v1998, %v2250
        %v2252 = vpop.f32.mrf.mxu0
        %v2253 = vadd.f32 %v2000, %v2252
        %2254 = vmatmul.bf16.gmra.mxu0 %v2173
        %v2255 = vpop.f32.mrf.mxu0
        %v2256 = vadd.f32 %v2003, %v2255
        %v2257 = vpop.f32.mrf.mxu0
        %v2258 = vadd.f32 %v2005, %v2257
        %2259 = vmatmul.bf16.gmra.mxu0 %v2176
        %v2260 = vpop.f32.mrf.mxu0
        %v2261 = vadd.f32 %v2008, %v2260
        %v2262 = vpop.f32.mrf.mxu0
        %v2263 = vadd.f32 %v2010, %v2262
        %2264 = vmatmul.bf16.gmra.mxu0 %v2179
        %v2265 = vpop.f32.mrf.mxu0
        %v2266 = vadd.f32 %v2013, %v2265
        %v2267 = vpop.f32.mrf.mxu0
        %v2268 = vadd.f32 %v2015, %v2267
        %2269 = vdwg.mxu0
        %v2270 = vld [vmem:[#allocation2 + $0x9] sm:$0xff]
        %v2271 = vld [vmem:[#allocation2 + $0x11] sm:$0xff]
        %v2272 = vld [vmem:[#allocation2 + $0x19] sm:$0xff]
        %v2273 = vld [vmem:[#allocation2 + $0x21] sm:$0xff]
        %v2274 = vld [vmem:[#allocation2 + $0x29] sm:$0xff]
        %v2275 = vld [vmem:[#allocation2 + $0x31] sm:$0xff]
        %v2276 = vld [vmem:[#allocation2 + $0x39] sm:$0xff]
        %v2277 = vld [vmem:[#allocation2 + $0x41] sm:$0xff]
        %v2278 = vld [vmem:[#allocation2 + $0x49] sm:$0xff]
        %v2279 = vld [vmem:[#allocation2 + $0x51] sm:$0xff]
        %v2280 = vld [vmem:[#allocation2 + $0x59] sm:$0xff]
        %v2281 = vld [vmem:[#allocation2 + $0x61] sm:$0xff]
        %v2282 = vld [vmem:[#allocation2 + $0x69] sm:$0xff]
        %v2283 = vld [vmem:[#allocation2 + $0x71] sm:$0xff]
        %v2284 = vld [vmem:[#allocation2 + $0x79] sm:$0xff]
        %v2285 = vld [vmem:[#allocation2 + $0x81] sm:$0xff]
        %v2286 = vld [vmem:[#allocation2 + $0x89] sm:$0xff]
        %v2287 = vld [vmem:[#allocation2 + $0x91] sm:$0xff]
        %v2288 = vld [vmem:[#allocation2 + $0x99] sm:$0xff]
        %v2289 = vld [vmem:[#allocation2 + $0xa1] sm:$0xff]
        %v2290 = vld [vmem:[#allocation2 + $0xa9] sm:$0xff]
        %v2291 = vld [vmem:[#allocation2 + $0xb1] sm:$0xff]
        %v2292 = vld [vmem:[#allocation2 + $0xb9] sm:$0xff]
        %v2293 = vld [vmem:[#allocation2 + $0xc1] sm:$0xff]
        %v2294 = vld [vmem:[#allocation2 + $0xc9] sm:$0xff]
        %v2295 = vld [vmem:[#allocation2 + $0xd1] sm:$0xff]
        %v2296 = vld [vmem:[#allocation2 + $0xd9] sm:$0xff]
        %v2297 = vld [vmem:[#allocation2 + $0xe1] sm:$0xff]
        %v2298 = vld [vmem:[#allocation2 + $0xe9] sm:$0xff]
        %v2299 = vld [vmem:[#allocation2 + $0xf1] sm:$0xff]
        %v2300 = vld [vmem:[#allocation2 + $0xf9] sm:$0xff]
        %v2301 = vld [vmem:[#allocation2 + $0x101] sm:$0xff]
        %v2302 = vld [vmem:[#allocation2 + $0x109] sm:$0xff]
        %v2303 = vld [vmem:[#allocation2 + $0x111] sm:$0xff]
        %v2304 = vld [vmem:[#allocation2 + $0x119] sm:$0xff]
        %v2305 = vld [vmem:[#allocation2 + $0x121] sm:$0xff]
        %2338 = vrot.lane.b32.xlu0 %v2272, 32
        %v2339 = vpop.permute.xlu0 %2338
        %2340 = vrot.lane.b32.xlu0 %v2273, 32
        %v2341 = vpop.permute.xlu0 %2340
        %2342 = vrot.lane.b32.xlu0 %v2274, 32
        %v2343 = vpop.permute.xlu0 %2342
        %2344 = vrot.lane.b32.xlu0 %v2275, 32
        %v2345 = vpop.permute.xlu0 %2344
        %2346 = vrot.lane.b32.xlu0 %v2276, 32
        %v2347 = vpop.permute.xlu0 %2346
        %2348 = vrot.lane.b32.xlu0 %v2277, 32
        %v2349 = vpop.permute.xlu0 %2348
        %2350 = vrot.lane.b32.xlu0 %v2278, 32
        %v2351 = vpop.permute.xlu0 %2350
        %2352 = vrot.lane.b32.xlu0 %v2279, 32
        %v2353 = vpop.permute.xlu0 %2352
        %2354 = vrot.lane.b32.xlu0 %v2280, 32
        %v2355 = vpop.permute.xlu0 %2354
        %2356 = vrot.lane.b32.xlu0 %v2281, 32
        %v2357 = vpop.permute.xlu0 %2356
        %2358 = vrot.lane.b32.xlu0 %v2282, 32
        %v2359 = vpop.permute.xlu0 %2358
        %2360 = vrot.lane.b32.xlu0 %v2283, 32
        %v2361 = vpop.permute.xlu0 %2360
        %2362 = vrot.lane.b32.xlu0 %v2284, 32
        %v2363 = vpop.permute.xlu0 %2362
        %2364 = vrot.lane.b32.xlu0 %v2285, 32
        %v2365 = vpop.permute.xlu0 %2364
        %2366 = vrot.lane.b32.xlu0 %v2286, 32
        %v2367 = vpop.permute.xlu0 %2366
        %2368 = vrot.lane.b32.xlu0 %v2287, 32
        %v2369 = vpop.permute.xlu0 %2368
        %2370 = vrot.lane.b32.xlu0 %v2288, 32
        %v2371 = vpop.permute.xlu0 %2370
        %2372 = vrot.lane.b32.xlu0 %v2289, 32
        %v2373 = vpop.permute.xlu0 %2372
        %2374 = vrot.lane.b32.xlu0 %v2290, 32
        %v2375 = vpop.permute.xlu0 %2374
        %2376 = vrot.lane.b32.xlu0 %v2291, 32
        %v2377 = vpop.permute.xlu0 %2376
        %2378 = vrot.lane.b32.xlu0 %v2292, 32
        %v2379 = vpop.permute.xlu0 %2378
        %2380 = vrot.lane.b32.xlu0 %v2293, 32
        %v2381 = vpop.permute.xlu0 %2380
        %2382 = vrot.lane.b32.xlu0 %v2294, 32
        %v2383 = vpop.permute.xlu0 %2382
        %2384 = vrot.lane.b32.xlu0 %v2295, 32
        %v2385 = vpop.permute.xlu0 %2384
        %2386 = vrot.lane.b32.xlu0 %v2296, 32
        %v2387 = vpop.permute.xlu0 %2386
        %2388 = vrot.lane.b32.xlu0 %v2297, 32
        %v2389 = vpop.permute.xlu0 %2388
        %2390 = vrot.lane.b32.xlu0 %v2298, 32
        %v2391 = vpop.permute.xlu0 %2390
        %2392 = vrot.lane.b32.xlu0 %v2299, 32
        %v2393 = vpop.permute.xlu0 %2392
        %2394 = vrot.lane.b32.xlu0 %v2300, 32
        %v2395 = vpop.permute.xlu0 %2394
        %2396 = vrot.lane.b32.xlu0 %v2301, 32
        %v2397 = vpop.permute.xlu0 %2396
        %2398 = vrot.lane.b32.xlu0 %v2302, 32
        %v2399 = vpop.permute.xlu0 %2398
        %2400 = vrot.lane.b32.xlu0 %v2303, 32
        %v2401 = vpop.permute.xlu0 %2400
        %2436 = vrot.lane.b32.xlu0 %v2274, 64
        %v2437 = vpop.permute.xlu0 %2436
        %2438 = vrot.lane.b32.xlu0 %v2275, 64
        %v2439 = vpop.permute.xlu0 %2438
        %2440 = vrot.lane.b32.xlu0 %v2276, 64
        %v2441 = vpop.permute.xlu0 %2440
        %2442 = vrot.lane.b32.xlu0 %v2277, 64
        %v2443 = vpop.permute.xlu0 %2442
        %2444 = vrot.lane.b32.xlu0 %v2278, 64
        %v2445 = vpop.permute.xlu0 %2444
        %2446 = vrot.lane.b32.xlu0 %v2279, 64
        %v2447 = vpop.permute.xlu0 %2446
        %2448 = vrot.lane.b32.xlu0 %v2280, 64
        %v2449 = vpop.permute.xlu0 %2448
        %2450 = vrot.lane.b32.xlu0 %v2281, 64
        %v2451 = vpop.permute.xlu0 %2450
        %2452 = vrot.lane.b32.xlu0 %v2282, 64
        %v2453 = vpop.permute.xlu0 %2452
        %2454 = vrot.lane.b32.xlu0 %v2283, 64
        %v2455 = vpop.permute.xlu0 %2454
        %2456 = vrot.lane.b32.xlu0 %v2284, 64
        %v2457 = vpop.permute.xlu0 %2456
        %2458 = vrot.lane.b32.xlu0 %v2285, 64
        %v2459 = vpop.permute.xlu0 %2458
        %2460 = vrot.lane.b32.xlu0 %v2286, 64
        %v2461 = vpop.permute.xlu0 %2460
        %2462 = vrot.lane.b32.xlu0 %v2287, 64
        %v2463 = vpop.permute.xlu0 %2462
        %2464 = vrot.lane.b32.xlu0 %v2288, 64
        %v2465 = vpop.permute.xlu0 %2464
        %2466 = vrot.lane.b32.xlu0 %v2289, 64
        %v2467 = vpop.permute.xlu0 %2466
        %2468 = vrot.lane.b32.xlu0 %v2290, 64
        %v2469 = vpop.permute.xlu0 %2468
        %2470 = vrot.lane.b32.xlu0 %v2291, 64
        %v2471 = vpop.permute.xlu0 %2470
        %2472 = vrot.lane.b32.xlu0 %v2292, 64
        %v2473 = vpop.permute.xlu0 %2472
        %2474 = vrot.lane.b32.xlu0 %v2293, 64
        %v2475 = vpop.permute.xlu0 %2474
        %2476 = vrot.lane.b32.xlu0 %v2294, 64
        %v2477 = vpop.permute.xlu0 %2476
        %2478 = vrot.lane.b32.xlu0 %v2295, 64
        %v2479 = vpop.permute.xlu0 %2478
        %2480 = vrot.lane.b32.xlu0 %v2296, 64
        %v2481 = vpop.permute.xlu0 %2480
        %2482 = vrot.lane.b32.xlu0 %v2297, 64
        %v2483 = vpop.permute.xlu0 %2482
        %2484 = vrot.lane.b32.xlu0 %v2298, 64
        %v2485 = vpop.permute.xlu0 %2484
        %2486 = vrot.lane.b32.xlu0 %v2299, 64
        %v2487 = vpop.permute.xlu0 %2486
        %2488 = vrot.lane.b32.xlu0 %v2300, 64
        %v2489 = vpop.permute.xlu0 %2488
        %2490 = vrot.lane.b32.xlu0 %v2301, 64
        %v2491 = vpop.permute.xlu0 %2490
        %2492 = vrot.lane.b32.xlu0 %v2302, 64
        %v2493 = vpop.permute.xlu0 %2492
        %2494 = vrot.lane.b32.xlu0 %v2303, 64
        %v2495 = vpop.permute.xlu0 %2494
        %2496 = vrot.lane.b32.xlu0 %v2304, 64
        %v2497 = vpop.permute.xlu0 %2496
        %2498 = vrot.lane.b32.xlu0 %v2305, 64
        %v2499 = vpop.permute.xlu0 %2498
        %v2532 = vsel %vm534, %v2270, %v2339
        %v2533 = vsel %vm534, %v2271, %v2341
        %v2534 = vsel %vm534, %v2272, %v2343
        %v2535 = vsel %vm534, %v2273, %v2345
        %v2536 = vsel %vm534, %v2274, %v2347
        %v2537 = vsel %vm534, %v2275, %v2349
        %v2538 = vsel %vm534, %v2276, %v2351
        %v2539 = vsel %vm534, %v2277, %v2353
        %v2540 = vsel %vm534, %v2278, %v2355
        %v2541 = vsel %vm534, %v2279, %v2357
        %v2542 = vsel %vm534, %v2280, %v2359
        %v2543 = vsel %vm534, %v2281, %v2361
        %v2544 = vsel %vm534, %v2282, %v2363
        %v2545 = vsel %vm534, %v2283, %v2365
        %v2546 = vsel %vm534, %v2284, %v2367
        %v2547 = vsel %vm534, %v2285, %v2369
        %v2548 = vsel %vm534, %v2286, %v2371
        %v2549 = vsel %vm534, %v2287, %v2373
        %v2550 = vsel %vm534, %v2288, %v2375
        %v2551 = vsel %vm534, %v2289, %v2377
        %v2552 = vsel %vm534, %v2290, %v2379
        %v2553 = vsel %vm534, %v2291, %v2381
        %v2554 = vsel %vm534, %v2292, %v2383
        %v2555 = vsel %vm534, %v2293, %v2385
        %v2556 = vsel %vm534, %v2294, %v2387
        %v2557 = vsel %vm534, %v2295, %v2389
        %v2558 = vsel %vm534, %v2296, %v2391
        %v2559 = vsel %vm534, %v2297, %v2393
        %v2560 = vsel %vm534, %v2298, %v2395
        %v2561 = vsel %vm534, %v2299, %v2397
        %v2562 = vsel %vm534, %v2300, %v2399
        %v2563 = vsel %vm534, %v2301, %v2401
        %v2564 = vsel %vm332, %v2532, %v2437
        %v2565 = vsel %vm332, %v2533, %v2439
        %v2566 = vsel %vm332, %v2534, %v2441
        %v2567 = vsel %vm332, %v2535, %v2443
        %v2568 = vsel %vm332, %v2536, %v2445
        %v2569 = vsel %vm332, %v2537, %v2447
        %v2570 = vsel %vm332, %v2538, %v2449
        %v2571 = vsel %vm332, %v2539, %v2451
        %v2572 = vsel %vm332, %v2540, %v2453
        %v2573 = vsel %vm332, %v2541, %v2455
        %v2574 = vsel %vm332, %v2542, %v2457
        %v2575 = vsel %vm332, %v2543, %v2459
        %v2576 = vsel %vm332, %v2544, %v2461
        %v2577 = vsel %vm332, %v2545, %v2463
        %v2578 = vsel %vm332, %v2546, %v2465
        %v2579 = vsel %vm332, %v2547, %v2467
        %v2580 = vsel %vm332, %v2548, %v2469
        %v2581 = vsel %vm332, %v2549, %v2471
        %v2582 = vsel %vm332, %v2550, %v2473
        %v2583 = vsel %vm332, %v2551, %v2475
        %v2584 = vsel %vm332, %v2552, %v2477
        %v2585 = vsel %vm332, %v2553, %v2479
        %v2586 = vsel %vm332, %v2554, %v2481
        %v2587 = vsel %vm332, %v2555, %v2483
        %v2588 = vsel %vm332, %v2556, %v2485
        %v2589 = vsel %vm332, %v2557, %v2487
        %v2590 = vsel %vm332, %v2558, %v2489
        %v2591 = vsel %vm332, %v2559, %v2491
        %v2592 = vsel %vm332, %v2560, %v2493
        %v2593 = vsel %vm332, %v2561, %v2495
        %v2594 = vsel %vm332, %v2562, %v2497
        %v2595 = vsel %vm332, %v2563, %v2499
        %v2596 = vpack.c.bf16 %v2564, %v2564
        %v2597 = vpack.c.bf16 %v2565, %v2565
        %v2598 = vpack.c.bf16 %v2566, %v2566
        %v2599 = vpack.c.bf16 %v2567, %v2567
        %v2600 = vpack.c.bf16 %v2568, %v2568
        %v2601 = vpack.c.bf16 %v2569, %v2569
        %v2602 = vpack.c.bf16 %v2570, %v2570
        %v2603 = vpack.c.bf16 %v2571, %v2571
        %v2604 = vpack.c.bf16 %v2572, %v2572
        %v2605 = vpack.c.bf16 %v2573, %v2573
        %v2606 = vpack.c.bf16 %v2574, %v2574
        %v2607 = vpack.c.bf16 %v2575, %v2575
        %v2608 = vpack.c.bf16 %v2576, %v2576
        %v2609 = vpack.c.bf16 %v2577, %v2577
        %v2610 = vpack.c.bf16 %v2578, %v2578
        %v2611 = vpack.c.bf16 %v2579, %v2579
        %v2612 = vpack.c.bf16 %v2580, %v2580
        %v2613 = vpack.c.bf16 %v2581, %v2581
        %v2614 = vpack.c.bf16 %v2582, %v2582
        %v2615 = vpack.c.bf16 %v2583, %v2583
        %v2616 = vpack.c.bf16 %v2584, %v2584
        %v2617 = vpack.c.bf16 %v2585, %v2585
        %v2618 = vpack.c.bf16 %v2586, %v2586
        %v2619 = vpack.c.bf16 %v2587, %v2587
        %v2620 = vpack.c.bf16 %v2588, %v2588
        %v2621 = vpack.c.bf16 %v2589, %v2589
        %v2622 = vpack.c.bf16 %v2590, %v2590
        %v2623 = vpack.c.bf16 %v2591, %v2591
        %v2624 = vpack.c.bf16 %v2592, %v2592
        %v2625 = vpack.c.bf16 %v2593, %v2593
        %v2626 = vpack.c.bf16 %v2594, %v2594
        %v2627 = vpack.c.bf16 %v2595, %v2595
        %vm2628 = vcmp.le.s32.totalorder %v990, 14
        %vm2629 = vcmp.le.s32.totalorder %v991, 14
        %vm2630 = vcmp.le.s32.totalorder %v992, 14
        %vm2631 = vcmp.le.s32.totalorder %v993, 14
        %vm2632 = vcmp.le.s32.totalorder %v994, 14
        %vm2633 = vcmp.le.s32.totalorder %v995, 14
        %vm2634 = vcmp.le.s32.totalorder %v996, 14
        %vm2635 = vcmp.le.s32.totalorder %v997, 14
        %vm2636 = vcmp.le.s32.totalorder %v998, 14
        %vm2637 = vcmp.le.s32.totalorder %v999, 14
        %vm2638 = vcmp.le.s32.totalorder %v1000, 14
        %vm2639 = vcmp.le.s32.totalorder %v1001, 14
        %vm2640 = vcmp.le.s32.totalorder %v1002, 14
        %vm2641 = vcmp.le.s32.totalorder %v1003, 14
        %vm2642 = vcmp.le.s32.totalorder %v1004, 14
        %vm2643 = vcmp.le.s32.totalorder %v1005, 14
        %vm2644 = vcmp.le.s32.totalorder %v1006, 14
        %vm2645 = vcmp.le.s32.totalorder %v1007, 14
        %vm2646 = vcmp.le.s32.totalorder %v1008, 14
        %vm2647 = vcmp.le.s32.totalorder %v1009, 14
        %vm2648 = vcmp.le.s32.totalorder %v1010, 14
        %vm2649 = vcmp.le.s32.totalorder %v1011, 14
        %vm2650 = vcmp.le.s32.totalorder %v1012, 14
        %vm2651 = vcmp.le.s32.totalorder %v1013, 14
        %vm2652 = vcmp.le.s32.totalorder %v1014, 14
        %vm2653 = vcmp.le.s32.totalorder %v1015, 14
        %vm2654 = vcmp.le.s32.totalorder %v1016, 14
        %vm2655 = vcmp.le.s32.totalorder %v1017, 14
        %vm2656 = vcmp.le.s32.totalorder %v1018, 14
        %vm2657 = vcmp.le.s32.totalorder %v1019, 14
        %vm2658 = vcmp.le.s32.totalorder %v1020, 14
        %vm2659 = vcmp.le.s32.totalorder %v1021, 14
        %vm2660 = vmpackc.low %vm2628, %vm2628
        %vm2661 = vmpackc.low %vm2629, %vm2629
        %vm2662 = vmpackc.low %vm2630, %vm2630
        %vm2663 = vmpackc.low %vm2631, %vm2631
        %vm2664 = vmpackc.low %vm2632, %vm2632
        %vm2665 = vmpackc.low %vm2633, %vm2633
        %vm2666 = vmpackc.low %vm2634, %vm2634
        %vm2667 = vmpackc.low %vm2635, %vm2635
        %vm2668 = vmpackc.low %vm2636, %vm2636
        %vm2669 = vmpackc.low %vm2637, %vm2637
        %vm2670 = vmpackc.low %vm2638, %vm2638
        %vm2671 = vmpackc.low %vm2639, %vm2639
        %vm2672 = vmpackc.low %vm2640, %vm2640
        %vm2673 = vmpackc.low %vm2641, %vm2641
        %vm2674 = vmpackc.low %vm2642, %vm2642
        %vm2675 = vmpackc.low %vm2643, %vm2643
        %vm2676 = vmpackc.low %vm2644, %vm2644
        %vm2677 = vmpackc.low %vm2645, %vm2645
        %vm2678 = vmpackc.low %vm2646, %vm2646
        %vm2679 = vmpackc.low %vm2647, %vm2647
        %vm2680 = vmpackc.low %vm2648, %vm2648
        %vm2681 = vmpackc.low %vm2649, %vm2649
        %vm2682 = vmpackc.low %vm2650, %vm2650
        %vm2683 = vmpackc.low %vm2651, %vm2651
        %vm2684 = vmpackc.low %vm2652, %vm2652
        %vm2685 = vmpackc.low %vm2653, %vm2653
        %vm2686 = vmpackc.low %vm2654, %vm2654
        %vm2687 = vmpackc.low %vm2655, %vm2655
        %vm2688 = vmpackc.low %vm2656, %vm2656
        %vm2689 = vmpackc.low %vm2657, %vm2657
        %vm2690 = vmpackc.low %vm2658, %vm2658
        %vm2691 = vmpackc.low %vm2659, %vm2659
        %v2692 = vsel %vm2660, %v2596, 0
        %v2693 = vsel %vm2661, %v2597, 0
        %v2694 = vsel %vm2662, %v2598, 0
        %v2695 = vsel %vm2663, %v2599, 0
        %v2696 = vsel %vm2664, %v2600, 0
        %v2697 = vsel %vm2665, %v2601, 0
        %v2698 = vsel %vm2666, %v2602, 0
        %v2699 = vsel %vm2667, %v2603, 0
        %v2700 = vsel %vm2668, %v2604, 0
        %v2701 = vsel %vm2669, %v2605, 0
        %v2702 = vsel %vm2670, %v2606, 0
        %v2703 = vsel %vm2671, %v2607, 0
        %v2704 = vsel %vm2672, %v2608, 0
        %v2705 = vsel %vm2673, %v2609, 0
        %v2706 = vsel %vm2674, %v2610, 0
        %v2707 = vsel %vm2675, %v2611, 0
        %v2708 = vsel %vm2676, %v2612, 0
        %v2709 = vsel %vm2677, %v2613, 0
        %v2710 = vsel %vm2678, %v2614, 0
        %v2711 = vsel %vm2679, %v2615, 0
        %v2712 = vsel %vm2680, %v2616, 0
        %v2713 = vsel %vm2681, %v2617, 0
        %v2714 = vsel %vm2682, %v2618, 0
        %v2715 = vsel %vm2683, %v2619, 0
        %v2716 = vsel %vm2684, %v2620, 0
        %v2717 = vsel %vm2685, %v2621, 0
        %v2718 = vsel %vm2686, %v2622, 0
        %v2719 = vsel %vm2687, %v2623, 0
        %v2720 = vsel %vm2688, %v2624, 0
        %v2721 = vsel %vm2689, %v2625, 0
        %v2722 = vsel %vm2690, %v2626, 0
        %v2723 = vsel %vm2691, %v2627, 0
        %s2724 = scalar_lea.vmem %s3, 96
        %v2725 = vld [vmem:[%s2724] sm:$0xf]
        %v2726 = vld [vmem:[%s2724 + $0x4] sm:$0xf]
        %v2727 = vld [vmem:[%s2724 + $0x8] sm:$0xf]
        %v2728 = vld [vmem:[%s2724 + $0xc] sm:$0xf]
        %v2729 = vld [vmem:[%s2724 + $0x10] sm:$0xf]
        %v2730 = vld [vmem:[%s2724 + $0x14] sm:$0xf]
        %v2731 = vld [vmem:[%s2724 + $0x18] sm:$0xf]
        %v2732 = vld [vmem:[%s2724 + $0x1c] sm:$0xf]
        %v2733 = vld [vmem:[%s2724 + $0x20] sm:$0xf]
        %v2734 = vld [vmem:[%s2724 + $0x24] sm:$0xf]
        %v2735 = vld [vmem:[%s2724 + $0x28] sm:$0xf]
        %v2736 = vld [vmem:[%s2724 + $0x2c] sm:$0xf]
        %v2769 = vunpack.c.l.b16 %v2692
        %v2770 = vunpack.c.l.b16 %v2693
        %v2771 = vunpack.c.l.b16 %v2694
        %v2772 = vunpack.c.l.b16 %v2695
        %v2773 = vunpack.c.l.b16 %v2696
        %v2774 = vunpack.c.l.b16 %v2697
        %v2775 = vunpack.c.l.b16 %v2698
        %v2776 = vunpack.c.l.b16 %v2699
        %v2777 = vunpack.c.l.b16 %v2700
        %v2778 = vunpack.c.l.b16 %v2701
        %v2779 = vunpack.c.l.b16 %v2702
        %v2780 = vunpack.c.l.b16 %v2703
        %v2781 = vunpack.c.l.b16 %v2704
        %v2782 = vunpack.c.l.b16 %v2705
        %v2783 = vunpack.c.l.b16 %v2706
        %v2784 = vunpack.c.l.b16 %v2707
        %v2785 = vunpack.c.l.b16 %v2708
        %v2786 = vunpack.c.l.b16 %v2709
        %v2787 = vunpack.c.l.b16 %v2710
        %v2788 = vunpack.c.l.b16 %v2711
        %v2789 = vunpack.c.l.b16 %v2712
        %v2790 = vunpack.c.l.b16 %v2713
        %v2791 = vunpack.c.l.b16 %v2714
        %v2792 = vunpack.c.l.b16 %v2715
        %v2793 = vunpack.c.l.b16 %v2716
        %v2794 = vunpack.c.l.b16 %v2717
        %v2795 = vunpack.c.l.b16 %v2718
        %v2796 = vunpack.c.l.b16 %v2719
        %v2797 = vunpack.c.l.b16 %v2720
        %v2798 = vunpack.c.l.b16 %v2721
        %v2799 = vunpack.c.l.b16 %v2722
        %v2800 = vunpack.c.l.b16 %v2723
        %v2801 = vpack.c.b16 %v2770, %v2769
        %v2802 = vpack.c.b16 %v2772, %v2771
        %v2803 = vpack.c.b16 %v2774, %v2773
        %v2804 = vpack.c.b16 %v2776, %v2775
        %v2805 = vpack.c.b16 %v2778, %v2777
        %v2806 = vpack.c.b16 %v2780, %v2779
        %v2807 = vpack.c.b16 %v2782, %v2781
        %v2808 = vpack.c.b16 %v2784, %v2783
        %v2809 = vpack.c.b16 %v2786, %v2785
        %v2810 = vpack.c.b16 %v2788, %v2787
        %v2811 = vpack.c.b16 %v2790, %v2789
        %v2812 = vpack.c.b16 %v2792, %v2791
        %v2813 = vpack.c.b16 %v2794, %v2793
        %v2814 = vpack.c.b16 %v2796, %v2795
        %v2815 = vpack.c.b16 %v2798, %v2797
        %v2816 = vpack.c.b16 %v2800, %v2799
        %v2829 = vunpack.c.l.b16 %v2725
        %v2830 = vunpack.c.l.b16 %v2726
        %v2831 = vunpack.c.l.b16 %v2727
        %v2832 = vunpack.c.l.b16 %v2728
        %v2833 = vunpack.c.l.b16 %v2729
        %v2834 = vunpack.c.l.b16 %v2730
        %v2835 = vunpack.c.l.b16 %v2731
        %v2836 = vunpack.c.l.b16 %v2732
        %v2837 = vunpack.c.l.b16 %v2733
        %v2838 = vunpack.c.l.b16 %v2734
        %v2839 = vunpack.c.l.b16 %v2735
        %v2840 = vunpack.c.l.b16 %v2736
        %v2841 = vpack.c.b16 %v2830, %v2829
        %v2842 = vpack.c.b16 %v2832, %v2831
        %v2843 = vpack.c.b16 %v2834, %v2833
        %v2844 = vpack.c.b16 %v2836, %v2835
        %v2845 = vpack.c.b16 %v2838, %v2837
        %v2846 = vpack.c.b16 %v2840, %v2839
        %v2854 = vsel %vm1879, %v2801, 0
        %v2857 = vsel %vm1879, %v2802, 0
        %v2860 = vsel %vm1879, %v2803, 0
        %v2863 = vsel %vm1879, %v2804, 0
        %v2866 = vsel %vm1879, %v2805, 0
        %v2869 = vsel %vm1879, %v2806, 0
        %v2872 = vsel %vm1879, %v2807, 0
        %v2875 = vsel %vm1879, %v2808, 0
        %v2878 = vsel %vm1879, %v2809, 0
        %v2881 = vsel %vm1879, %v2810, 0
        %v2884 = vsel %vm1879, %v2811, 0
        %v2887 = vsel %vm1879, %v2812, 0
        %v2890 = vsel %vm1879, %v2813, 0
        %v2893 = vsel %vm1879, %v2814, 0
        %v2896 = vsel %vm1879, %v2815, 0
        %v2899 = vsel %vm1879, %v2816, 0
        %2901 = vmatpush.bf16.msra.mxu0 0
        %2902 = vmatpush.bf16.msra.mxu0 0
        %2903 = vmatpush.bf16.msra.mxu0 %v2846
        %2904 = vmatpush.bf16.msra.mxu0 %v2845
        %2905 = vmatpush.bf16.msra.mxu0 %v2844
        %2906 = vmatpush.bf16.msra.mxu0 %v2843
        %2907 = vmatpush.bf16.msra.mxu0 %v2842
        %2908 = vmatpush.bf16.msra.mxu0 %v2841
        %2909 = vmatmul.bf16.gmra.mxu0 %v2854
        %v2910 = vpop.f32.mrf.mxu0
        %v2911 = vadd.f32 0.0, %v2910
        %v2912 = vpop.f32.mrf.mxu0
        %v2913 = vadd.f32 0.0, %v2912
        %2914 = vmatmul.bf16.gmra.mxu0 %v2857
        %v2915 = vpop.f32.mrf.mxu0
        %v2916 = vadd.f32 0.0, %v2915
        %v2917 = vpop.f32.mrf.mxu0
        %v2918 = vadd.f32 0.0, %v2917
        %2919 = vmatmul.bf16.gmra.mxu0 %v2860
        %v2920 = vpop.f32.mrf.mxu0
        %v2921 = vadd.f32 0.0, %v2920
        %v2922 = vpop.f32.mrf.mxu0
        %v2923 = vadd.f32 0.0, %v2922
        %2924 = vmatmul.bf16.gmra.mxu0 %v2863
        %v2925 = vpop.f32.mrf.mxu0
        %v2926 = vadd.f32 0.0, %v2925
        %v2927 = vpop.f32.mrf.mxu0
        %v2928 = vadd.f32 0.0, %v2927
        %2929 = vmatmul.bf16.gmra.mxu0 %v2866
        %v2930 = vpop.f32.mrf.mxu0
        %v2931 = vadd.f32 0.0, %v2930
        %v2932 = vpop.f32.mrf.mxu0
        %v2933 = vadd.f32 0.0, %v2932
        %2934 = vmatmul.bf16.gmra.mxu0 %v2869
        %v2935 = vpop.f32.mrf.mxu0
        %v2936 = vadd.f32 0.0, %v2935
        %v2937 = vpop.f32.mrf.mxu0
        %v2938 = vadd.f32 0.0, %v2937
        %2939 = vmatmul.bf16.gmra.mxu0 %v2872
        %v2940 = vpop.f32.mrf.mxu0
        %v2941 = vadd.f32 0.0, %v2940
        %v2942 = vpop.f32.mrf.mxu0
        %v2943 = vadd.f32 0.0, %v2942
        %2944 = vmatmul.bf16.gmra.mxu0 %v2875
        %v2945 = vpop.f32.mrf.mxu0
        %v2946 = vadd.f32 0.0, %v2945
        %v2947 = vpop.f32.mrf.mxu0
        %v2948 = vadd.f32 0.0, %v2947
        %2949 = vmatmul.bf16.gmra.mxu0 %v2878
        %v2950 = vpop.f32.mrf.mxu0
        %v2951 = vadd.f32 0.0, %v2950
        %v2952 = vpop.f32.mrf.mxu0
        %v2953 = vadd.f32 0.0, %v2952
        %2954 = vmatmul.bf16.gmra.mxu0 %v2881
        %v2955 = vpop.f32.mrf.mxu0
        %v2956 = vadd.f32 0.0, %v2955
        %v2957 = vpop.f32.mrf.mxu0
        %v2958 = vadd.f32 0.0, %v2957
        %2959 = vmatmul.bf16.gmra.mxu0 %v2884
        %v2960 = vpop.f32.mrf.mxu0
        %v2961 = vadd.f32 0.0, %v2960
        %v2962 = vpop.f32.mrf.mxu0
        %v2963 = vadd.f32 0.0, %v2962
        %2964 = vmatmul.bf16.gmra.mxu0 %v2887
        %v2965 = vpop.f32.mrf.mxu0
        %v2966 = vadd.f32 0.0, %v2965
        %v2967 = vpop.f32.mrf.mxu0
        %v2968 = vadd.f32 0.0, %v2967
        %2969 = vmatmul.bf16.gmra.mxu0 %v2890
        %v2970 = vpop.f32.mrf.mxu0
        %v2971 = vadd.f32 0.0, %v2970
        %v2972 = vpop.f32.mrf.mxu0
        %v2973 = vadd.f32 0.0, %v2972
        %2974 = vmatmul.bf16.gmra.mxu0 %v2893
        %v2975 = vpop.f32.mrf.mxu0
        %v2976 = vadd.f32 0.0, %v2975
        %v2977 = vpop.f32.mrf.mxu0
        %v2978 = vadd.f32 0.0, %v2977
        %2979 = vmatmul.bf16.gmra.mxu0 %v2896
        %v2980 = vpop.f32.mrf.mxu0
        %v2981 = vadd.f32 0.0, %v2980
        %v2982 = vpop.f32.mrf.mxu0
        %v2983 = vadd.f32 0.0, %v2982
        %2984 = vmatmul.bf16.gmra.mxu0 %v2899
        %v2985 = vpop.f32.mrf.mxu0
        %v2986 = vadd.f32 0.0, %v2985
        %v2987 = vpop.f32.mrf.mxu0
        %v2988 = vadd.f32 0.0, %v2987
        %2989 = vdwg.mxu0
        %v2990 = vadd.f32 %v2191, %v2911
        %v2991 = vadd.f32 %v2193, %v2913
        %v2992 = vadd.f32 %v2196, %v2916
        %v2993 = vadd.f32 %v2198, %v2918
        %v2994 = vadd.f32 %v2201, %v2921
        %v2995 = vadd.f32 %v2203, %v2923
        %v2996 = vadd.f32 %v2206, %v2926
        %v2997 = vadd.f32 %v2208, %v2928
        %v2998 = vadd.f32 %v2211, %v2931
        %v2999 = vadd.f32 %v2213, %v2933
        %v3000 = vadd.f32 %v2216, %v2936
        %v3001 = vadd.f32 %v2218, %v2938
        %v3002 = vadd.f32 %v2221, %v2941
        %v3003 = vadd.f32 %v2223, %v2943
        %v3004 = vadd.f32 %v2226, %v2946
        %v3005 = vadd.f32 %v2228, %v2948
        %v3006 = vadd.f32 %v2231, %v2951
        %v3007 = vadd.f32 %v2233, %v2953
        %v3008 = vadd.f32 %v2236, %v2956
        %v3009 = vadd.f32 %v2238, %v2958
        %v3010 = vadd.f32 %v2241, %v2961
        %v3011 = vadd.f32 %v2243, %v2963
        %v3012 = vadd.f32 %v2246, %v2966
        %v3013 = vadd.f32 %v2248, %v2968
        %v3014 = vadd.f32 %v2251, %v2971
        %v3015 = vadd.f32 %v2253, %v2973
        %v3016 = vadd.f32 %v2256, %v2976
        %v3017 = vadd.f32 %v2258, %v2978
        %v3018 = vadd.f32 %v2261, %v2981
        %v3019 = vadd.f32 %v2263, %v2983
        %v3020 = vadd.f32 %v2266, %v2986
        %v3021 = vadd.f32 %v2268, %v2988
        %v3022 = vld [vmem:[%s4] sm:$0x1]
        %v3024 = vperm.slane %v3022, 0
        %v3026 = vadd.f32 %v2990, %v3024
        %v3027 = vadd.f32 %v2991, %v3024
        %v3028 = vadd.f32 %v2992, %v3024
        %v3029 = vadd.f32 %v2993, %v3024
        %v3030 = vadd.f32 %v2994, %v3024
        %v3031 = vadd.f32 %v2995, %v3024
        %v3032 = vadd.f32 %v2996, %v3024
        %v3033 = vadd.f32 %v2997, %v3024
        %v3034 = vadd.f32 %v2998, %v3024
        %v3035 = vadd.f32 %v2999, %v3024
        %v3036 = vadd.f32 %v3000, %v3024
        %v3037 = vadd.f32 %v3001, %v3024
        %v3038 = vadd.f32 %v3002, %v3024
        %v3039 = vadd.f32 %v3003, %v3024
        %v3040 = vadd.f32 %v3004, %v3024
        %v3041 = vadd.f32 %v3005, %v3024
        %v3042 = vadd.f32 %v3006, %v3024
        %v3043 = vadd.f32 %v3007, %v3024
        %v3044 = vadd.f32 %v3008, %v3024
        %v3045 = vadd.f32 %v3009, %v3024
        %v3046 = vadd.f32 %v3010, %v3024
        %v3047 = vadd.f32 %v3011, %v3024
        %v3048 = vadd.f32 %v3012, %v3024
        %v3049 = vadd.f32 %v3013, %v3024
        %v3050 = vadd.f32 %v3014, %v3024
        %v3051 = vadd.f32 %v3015, %v3024
        %v3052 = vadd.f32 %v3016, %v3024
        %v3053 = vadd.f32 %v3017, %v3024
        %v3054 = vadd.f32 %v3018, %v3024
        %v3055 = vadd.f32 %v3019, %v3024
        %v3056 = vadd.f32 %v3020, %v3024
        %v3057 = vadd.f32 %v3021, %v3024
        %v3058 = vmul.f32 %v3026, 0.1
        %v3059 = vmul.f32 %v3027, 0.1
        %v3060 = vmul.f32 %v3028, 0.1
        %v3061 = vmul.f32 %v3029, 0.1
        %v3062 = vmul.f32 %v3030, 0.1
        %v3063 = vmul.f32 %v3031, 0.1
        %v3064 = vmul.f32 %v3032, 0.1
        %v3065 = vmul.f32 %v3033, 0.1
        %v3066 = vmul.f32 %v3034, 0.1
        %v3067 = vmul.f32 %v3035, 0.1
        %v3068 = vmul.f32 %v3036, 0.1
        %v3069 = vmul.f32 %v3037, 0.1
        %v3070 = vmul.f32 %v3038, 0.1
        %v3071 = vmul.f32 %v3039, 0.1
        %v3072 = vmul.f32 %v3040, 0.1
        %v3073 = vmul.f32 %v3041, 0.1
        %v3074 = vmul.f32 %v3042, 0.1
        %v3075 = vmul.f32 %v3043, 0.1
        %v3076 = vmul.f32 %v3044, 0.1
        %v3077 = vmul.f32 %v3045, 0.1
        %v3078 = vmul.f32 %v3046, 0.1
        %v3079 = vmul.f32 %v3047, 0.1
        %v3080 = vmul.f32 %v3048, 0.1
        %v3081 = vmul.f32 %v3049, 0.1
        %v3082 = vmul.f32 %v3050, 0.1
        %v3083 = vmul.f32 %v3051, 0.1
        %v3084 = vmul.f32 %v3052, 0.1
        %v3085 = vmul.f32 %v3053, 0.1
        %v3086 = vmul.f32 %v3054, 0.1
        %v3087 = vmul.f32 %v3055, 0.1
        %v3088 = vmul.f32 %v3056, 0.1
        %v3089 = vmul.f32 %v3057, 0.1
        %v3090 = vmax.f32 %v3026, %v3058
        %v3091 = vmax.f32 %v3027, %v3059
        %v3092 = vmax.f32 %v3028, %v3060
        %v3093 = vmax.f32 %v3029, %v3061
        %v3094 = vmax.f32 %v3030, %v3062
        %v3095 = vmax.f32 %v3031, %v3063
        %v3096 = vmax.f32 %v3032, %v3064
        %v3097 = vmax.f32 %v3033, %v3065
        %v3098 = vmax.f32 %v3034, %v3066
        %v3099 = vmax.f32 %v3035, %v3067
        %v3100 = vmax.f32 %v3036, %v3068
        %v3101 = vmax.f32 %v3037, %v3069
        %v3102 = vmax.f32 %v3038, %v3070
        %v3103 = vmax.f32 %v3039, %v3071
        %v3104 = vmax.f32 %v3040, %v3072
        %v3105 = vmax.f32 %v3041, %v3073
        %v3106 = vmax.f32 %v3042, %v3074
        %v3107 = vmax.f32 %v3043, %v3075
        %v3108 = vmax.f32 %v3044, %v3076
        %v3109 = vmax.f32 %v3045, %v3077
        %v3110 = vmax.f32 %v3046, %v3078
        %v3111 = vmax.f32 %v3047, %v3079
        %v3112 = vmax.f32 %v3048, %v3080
        %v3113 = vmax.f32 %v3049, %v3081
        %v3114 = vmax.f32 %v3050, %v3082
        %v3115 = vmax.f32 %v3051, %v3083
        %v3116 = vmax.f32 %v3052, %v3084
        %v3117 = vmax.f32 %v3053, %v3085
        %v3118 = vmax.f32 %v3054, %v3086
        %v3119 = vmax.f32 %v3055, %v3087
        %v3120 = vmax.f32 %v3056, %v3088
        %v3121 = vmax.f32 %v3057, %v3089
        %v3122 = vld [vmem:[%s214] sm:$0xff]
        %v3123 = vld [vmem:[%s214 + $0x8] sm:$0xff]
        %v3124 = vld [vmem:[%s214 + $0x10] sm:$0xff]
        %v3125 = vld [vmem:[%s214 + $0x18] sm:$0xff]
        %v3126 = vld [vmem:[%s214 + $0x20] sm:$0xff]
        %v3127 = vld [vmem:[%s214 + $0x28] sm:$0xff]
        %v3128 = vld [vmem:[%s214 + $0x30] sm:$0xff]
        %v3129 = vld [vmem:[%s214 + $0x38] sm:$0xff]
        %v3130 = vld [vmem:[%s214 + $0x40] sm:$0xff]
        %v3131 = vld [vmem:[%s214 + $0x48] sm:$0xff]
        %v3132 = vld [vmem:[%s214 + $0x50] sm:$0xff]
        %v3133 = vld [vmem:[%s214 + $0x58] sm:$0xff]
        %v3134 = vld [vmem:[%s214 + $0x60] sm:$0xff]
        %v3135 = vld [vmem:[%s214 + $0x68] sm:$0xff]
        %v3136 = vld [vmem:[%s214 + $0x70] sm:$0xff]
        %v3137 = vld [vmem:[%s214 + $0x78] sm:$0xff]
        %v3138 = vld [vmem:[%s214 + $0x80] sm:$0xff]
        %v3139 = vld [vmem:[%s214 + $0x88] sm:$0xff]
        %v3140 = vld [vmem:[%s214 + $0x90] sm:$0xff]
        %v3141 = vld [vmem:[%s214 + $0x98] sm:$0xff]
        %v3142 = vld [vmem:[%s214 + $0xa0] sm:$0xff]
        %v3143 = vld [vmem:[%s214 + $0xa8] sm:$0xff]
        %v3144 = vld [vmem:[%s214 + $0xb0] sm:$0xff]
        %v3145 = vld [vmem:[%s214 + $0xb8] sm:$0xff]
        %v3146 = vld [vmem:[%s214 + $0xc0] sm:$0xff]
        %v3147 = vld [vmem:[%s214 + $0xc8] sm:$0xff]
        %v3148 = vld [vmem:[%s214 + $0xd0] sm:$0xff]
        %v3149 = vld [vmem:[%s214 + $0xd8] sm:$0xff]
        %v3150 = vld [vmem:[%s214 + $0xe0] sm:$0xff]
        %v3151 = vld [vmem:[%s214 + $0xe8] sm:$0xff]
        %v3152 = vld [vmem:[%s214 + $0xf0] sm:$0xff]
        %v3153 = vld [vmem:[%s214 + $0xf8] sm:$0xff]
        %v3154 = vadd.f32 %v3090, %v3122
        %v3155 = vadd.f32 %v3091, %v3123
        %v3156 = vadd.f32 %v3092, %v3124
        %v3157 = vadd.f32 %v3093, %v3125
        %v3158 = vadd.f32 %v3094, %v3126
        %v3159 = vadd.f32 %v3095, %v3127
        %v3160 = vadd.f32 %v3096, %v3128
        %v3161 = vadd.f32 %v3097, %v3129
        %v3162 = vadd.f32 %v3098, %v3130
        %v3163 = vadd.f32 %v3099, %v3131
        %v3164 = vadd.f32 %v3100, %v3132
        %v3165 = vadd.f32 %v3101, %v3133
        %v3166 = vadd.f32 %v3102, %v3134
        %v3167 = vadd.f32 %v3103, %v3135
        %v3168 = vadd.f32 %v3104, %v3136
        %v3169 = vadd.f32 %v3105, %v3137
        %v3170 = vadd.f32 %v3106, %v3138
        %v3171 = vadd.f32 %v3107, %v3139
        %v3172 = vadd.f32 %v3108, %v3140
        %v3173 = vadd.f32 %v3109, %v3141
        %v3174 = vadd.f32 %v3110, %v3142
        %v3175 = vadd.f32 %v3111, %v3143
        %v3176 = vadd.f32 %v3112, %v3144
        %v3177 = vadd.f32 %v3113, %v3145
        %v3178 = vadd.f32 %v3114, %v3146
        %v3179 = vadd.f32 %v3115, %v3147
        %v3180 = vadd.f32 %v3116, %v3148
        %v3181 = vadd.f32 %v3117, %v3149
        %v3182 = vadd.f32 %v3118, %v3150
        %v3183 = vadd.f32 %v3119, %v3151
        %v3184 = vadd.f32 %v3120, %v3152
        %v3185 = vadd.f32 %v3121, %v3153
        %3186 = vst.msk [vmem:[%s246] sm:$0xff] %vm332, %v3154
        %3187 = vst.msk [vmem:[%s246 + $0x8] sm:$0xff] %vm332, %v3155
        %3188 = vst.msk [vmem:[%s246 + $0x10] sm:$0xff] %vm332, %v3156
        %3189 = vst.msk [vmem:[%s246 + $0x18] sm:$0xff] %vm332, %v3157
        %3190 = vst.msk [vmem:[%s246 + $0x20] sm:$0xff] %vm332, %v3158
        %3191 = vst.msk [vmem:[%s246 + $0x28] sm:$0xff] %vm332, %v3159
        %3192 = vst.msk [vmem:[%s246 + $0x30] sm:$0xff] %vm332, %v3160
        %3193 = vst.msk [vmem:[%s246 + $0x38] sm:$0xff] %vm332, %v3161
        %3194 = vst.msk [vmem:[%s246 + $0x40] sm:$0xff] %vm332, %v3162
        %3195 = vst.msk [vmem:[%s246 + $0x48] sm:$0xff] %vm332, %v3163
        %3196 = vst.msk [vmem:[%s246 + $0x50] sm:$0xff] %vm332, %v3164
        %3197 = vst.msk [vmem:[%s246 + $0x58] sm:$0xff] %vm332, %v3165
        %3198 = vst.msk [vmem:[%s246 + $0x60] sm:$0xff] %vm332, %v3166
        %3199 = vst.msk [vmem:[%s246 + $0x68] sm:$0xff] %vm332, %v3167
        %3200 = vst.msk [vmem:[%s246 + $0x70] sm:$0xff] %vm332, %v3168
        %3201 = vst.msk [vmem:[%s246 + $0x78] sm:$0xff] %vm332, %v3169
        %3202 = vst.msk [vmem:[%s246 + $0x80] sm:$0xff] %vm332, %v3170
        %3203 = vst.msk [vmem:[%s246 + $0x88] sm:$0xff] %vm332, %v3171
        %3204 = vst.msk [vmem:[%s246 + $0x90] sm:$0xff] %vm332, %v3172
        %3205 = vst.msk [vmem:[%s246 + $0x98] sm:$0xff] %vm332, %v3173
        %3206 = vst.msk [vmem:[%s246 + $0xa0] sm:$0xff] %vm332, %v3174
        %3207 = vst.msk [vmem:[%s246 + $0xa8] sm:$0xff] %vm332, %v3175
        %3208 = vst.msk [vmem:[%s246 + $0xb0] sm:$0xff] %vm332, %v3176
        %3209 = vst.msk [vmem:[%s246 + $0xb8] sm:$0xff] %vm332, %v3177
        %3210 = vst.msk [vmem:[%s246 + $0xc0] sm:$0xff] %vm332, %v3178
        %3211 = vst.msk [vmem:[%s246 + $0xc8] sm:$0xff] %vm332, %v3179
        %3212 = vst.msk [vmem:[%s246 + $0xd0] sm:$0xff] %vm332, %v3180
        %3213 = vst.msk [vmem:[%s246 + $0xd8] sm:$0xff] %vm332, %v3181
        %3214 = vst.msk [vmem:[%s246 + $0xe0] sm:$0xff] %vm332, %v3182
        %3215 = vst.msk [vmem:[%s246 + $0xe8] sm:$0xff] %vm332, %v3183
        %3216 = vst.msk [vmem:[%s246 + $0xf0] sm:$0xff] %vm332, %v3184
        %3217 = vst.msk [vmem:[%s246 + $0xf8] sm:$0xff] %vm332, %v3185
        %p3218 = scmp.lt.s32.totalorder %s19, 1
        %s3219 = scalar_select %p3218, %s19, 1
        %s3220 = smul.addr %s3219, 32
        %s3221 = smul.addr %s3220, 8
        %s3222 = scalar_lea.vmem %s5, %s3221
        // Predicated region
        $region45: #{resblock_forward.2} parent=39 // pred_check
          %p3223 = pneg %p147
        $region46: #{resblock_forward.2} parent=39 // pred_check_branch
          %3225 = sbr.rel (%p3223) target = $region48
        $region47: #{resblock_forward.2} parent=39 // pred_region
          _
        $region48: #{resblock_forward.2} parent=39 // pred_fallthru
          _
      $region40: #{resblock_forward.2} parent=5 // pred_fallthru
        _
      %p3226 = scmp.le.s32.totalorder 2, %s14
      // Predicated region
      $region49: #{resblock_forward.2} parent=5 // pred_check
        %p3227 = pneg %p3226
      $region50: #{resblock_forward.2} parent=5 // pred_check_branch
        %3229 = sbr.rel (%p3227) target = $region52
      $region51: #{resblock_forward.2} parent=5 // pred_region
        %s3230 = ssub.s32 %s14, 2
        // Predicated region
        $region53: #{resblock_forward.2} parent=51 // pred_check
          %p3231 = pneg %p153
        $region54: #{resblock_forward.2} parent=51 // pred_check_branch
          %3233 = sbr.rel (%p3231) target = $region56
        $region55: #{resblock_forward.2} parent=51 // pred_region
          %p3234 = scmp.lt.s32.totalorder %s20, 1
          %s3235 = scalar_select %p3234, %s20, 1
          %s3236 = smul.addr %s3235, 32
          %s3237 = smul.addr %s3236, 8
          %s3238 = scalar_lea.vmem %s5, %s3237
        $region56: #{resblock_forward.2} parent=51 // pred_fallthru
          _
      $region52: #{resblock_forward.2} parent=5 // pred_fallthru
        _
    $region6: #{resblock_forward.2} parent=1 // loop_footer
      %s18 = sadd.s32 1, %s14
    $region7: #{resblock_forward.2} parent=1 // loop_footer_branch
      %13 = sbr.rel target = $region3
    $region8: #{resblock_forward.2} parent=1 // loop_exit
      _
    %3239 = vsyncpa [#allocation4], 1
    %s3240 = scalar_lea.sflag [#allocation4], 1
    %3241 = vsyncpa %s3240, 1

</llo_original>
